<compile_context>
chip_gen: v7x
topology: tpu7x:2x2x1
jax: 0.10.0
libtpu: 0.0.40
codegen_flags: <defaults>
</compile_context>

<pallas_src>
import math

import jax
import jax.numpy as jnp
import numpy as np
from jax.experimental import pallas as pl
from jax.experimental.pallas import tpu as pltpu

# Full-f32 matmuls on both the Pallas and the reference path (keeps the 1e-5 check meaningful).
jax.config.update("jax_default_matmul_precision", "highest")

IN_SIZE = 48
N_POS = 4
N_NEG = 14
IN_W = IN_SIZE + 2      # packed input: [x(48) | sum_logs1(1) | sum_logs2(1)]
OUT_W = 32              # packed output: [distr_neg(14) | distr_pos(4) | neg_sum(1) | pos_sum(1) | pad(12)]


def _round_up(n, m):
    return ((n + m - 1) // m) * m


# ----------------------------------------------------------------------------- kernel
def _combined_kernel(in_ref, w0_ref, b0_ref, w1_ref, b1_ref, w3_ref, b3_ref,
                     w3a_ref, scal_ref, out_ref):
    f32 = jnp.float32
    xin = in_ref[...]                       # (TB, 50)
    sl1 = xin[:, 48:49]                     # neg sum_logs
    sl2 = xin[:, 49:50]                     # pos sum_logs

    # trunk 48(->50 zero-padded K) -> 256, relu
    out1 = jnp.maximum(
        jnp.dot(xin, w0_ref[...], preferred_element_type=f32) + b0_ref[...], 0.0)

    # fused dense1 of all three heads: 256 -> 256 = [d1(128) | r1_sums(64) | r1_gates(64)]
    h = jnp.maximum(
        jnp.dot(out1, w1_ref[...], preferred_element_type=f32) + b1_ref[...], 0.0)

    # fused (block-diagonal) second layers: 256 -> 78
    # cols: [distr_neg 0:14 | distr_pos 14:18 | o2p_sums 18:33 | o2n_sums 33:48 | o2p_gates 48:63 | o2n_gates 63:78]
    out3 = jnp.dot(h, w3_ref[...], preferred_element_type=f32) + b3_ref[...]

    distr = out3[:, 0:18]                        # logits, no relu
    o2 = jnp.maximum(out3[:, 18:78], 0.0)        # (TB, 60) relu'd regr features

    # final 16->1 layers: (feature part) elementwise mul + lane reduce on one (TB,60) tensor
    prod = o2 * w3a_ref[...]                     # (TB, 60)
    dot_sp = jnp.sum(prod[:, 0:15], axis=-1, keepdims=True)
    dot_sn = jnp.sum(prod[:, 15:30], axis=-1, keepdims=True)
    dot_gp = jnp.sum(prod[:, 30:45], axis=-1, keepdims=True)
    dot_gn = jnp.sum(prod[:, 45:60], axis=-1, keepdims=True)

    # scalars: [sWp3b, sWn3b, gWp3b, gWn3b, sbp3, sbn3, gbp3, gbn3]
    s = scal_ref[...]                            # (1, 8)
    sums_pos = dot_sp + sl2 * s[:, 0:1] + s[:, 4:5]
    sums_neg = dot_sn + sl1 * s[:, 1:2] + s[:, 5:6]
    gate_pos = jax.nn.sigmoid(dot_gp + sl2 * s[:, 2:3] + s[:, 6:7])
    gate_neg = jax.nn.sigmoid(dot_gn + sl1 * s[:, 3:4] + s[:, 7:8])

    neg_sum = sl1 * gate_neg + sums_neg * (1.0 - gate_neg)
    pos_sum = sl2 * gate_pos + sums_pos * (1.0 - gate_pos)

    pad = jnp.zeros((distr.shape[0], OUT_W - 20), f32)
    out_ref[...] = jnp.concatenate([distr, neg_sum, pos_sum, pad], axis=1)


# ----------------------------------------------------------------------------- wrapper
def combined_target_head(x, sum_logs1, sum_logs2, packed_params, *, tb_max=512):
    """x: (B, 48) f32; sum_logs1/2: (B,) f32; packed_params from pack_params()."""
    B = x.shape[0]
    packed_in = jnp.concatenate(
        [x.astype(jnp.float32),
         sum_logs1.astype(jnp.float32)[:, None],
         sum_logs2.astype(jnp.float32)[:, None]], axis=1)        # (B, 50)

    TB = min(tb_max, _round_up(B, 8))
    Bp = _round_up(B, TB)
    if Bp != B:
        packed_in = jnp.pad(packed_in, ((0, Bp - B), (0, 0)))

    W0e, b0, W1c, b1c, W3, b3, w3a, scal = packed_params

    out = pl.pallas_call(
        _combined_kernel,
        out_shape=jax.ShapeDtypeStruct((Bp, OUT_W), jnp.float32),
        grid=(Bp // TB,),
        in_specs=[
            pl.BlockSpec((TB, IN_W), lambda i: (i, 0)),          # packed activations
            pl.BlockSpec((IN_W, 256), lambda i: (0, 0)),         # W0 (48->256, padded K)
            pl.BlockSpec((1, 256), lambda i: (0, 0)),            # b0
            pl.BlockSpec((256, 256), lambda i: (0, 0)),          # fused dense1 weights
            pl.BlockSpec((1, 256), lambda i: (0, 0)),            # fused dense1 biases
            pl.BlockSpec((256, 78), lambda i: (0, 0)),           # fused block-diag layer-3 weights
            pl.BlockSpec((1, 78), lambda i: (0, 0)),             # fused layer-3 biases
            pl.BlockSpec((1, 60), lambda i: (0, 0)),             # stacked dense3 feature rows
            pl.BlockSpec((1, 8), lambda i: (0, 0)),              # dense3 sum_logs weights + biases
        ],
        out_specs=pl.BlockSpec((TB, OUT_W), lambda i: (i, 0)),
        compiler_params=pltpu.CompilerParams(
            dimension_semantics=("parallel",)),                  # 2 TCs on v7x
    )(packed_in, W0e, b0, W1c, b1c, W3, b3, w3a, scal)

    out = out[:B]
    return {
        "neg_distribution": out[:, 0:14],
        "pos_distribution": out[:, 14:18],
        "neg_sum": out[:, 18:19],
        "pos_sum": out[:, 19:20],
    }


# ----------------------------------------------------------------------------- params
def _linear_init(key, fan_in, fan_out):
    """PyTorch-style uniform init; weight returned as (in, out), bias as (1, out)."""
    k1, k2 = jax.random.split(key)
    bound = 1.0 / math.sqrt(fan_in)
    W = jax.random.uniform(k1, (fan_in, fan_out), jnp.float32, -bound, bound)
    b = jax.random.uniform(k2, (1, fan_out), jnp.float32, -bound, bound)
    return W, b


def init_params(key):
    """Raw per-layer params, mirroring the PyTorch module (weights transposed to (in, out))."""
    keys = jax.random.split(key, 6)
    W0, b0 = _linear_init(keys[0], IN_SIZE, 256)
    dW1, db1 = _linear_init(keys[1], 256, 128)
    dWn, dbn = _linear_init(keys[2], 128, N_NEG)
    dWp, dbp = _linear_init(keys[3], 128, N_POS)

    def regr_params(k):
        ka, kb, kc, kd, ke = jax.random.split(k, 5)
        W1, b1 = _linear_init(ka, 256, 64)
        Wp2, bp2 = _linear_init(kb, 64, 15)
        Wn2, bn2 = _linear_init(kc, 64, 15)
        Wp3, bp3 = _linear_init(kd, 16, 1)
        Wn3, bn3 = _linear_init(ke, 16, 1)
        return [W1, b1, Wp2, bp2, Wn2, bn2, Wp3, bp3, Wn3, bn3]

    return [W0, b0, dW1, db1, dWn, dbn, dWp, dbp] \
        + regr_params(keys[4]) + regr_params(keys[5])


def pack_params(raw):
    """Host-side fusion of the per-layer params into MXU-dense arrays for the kernel."""
    (W0, b0, dW1, db1, dWn, dbn, dWp, dbp,
     sW1, sb1, sWp2, sbp2, sWn2, sbn2, sWp3, sbp3, sWn3, sbn3,
     gW1, gb1, gWp2, gbp2, gWn2, gbn2, gWp3, gbp3, gWn3, gbn3) = raw
    z = lambda r, c: jnp.zeros((r, c), jnp.float32)

    # trunk: extend K from 48 to 50 with zero rows for the two packed sum_logs lanes
    W0e = jnp.concatenate([W0, z(2, 256)], axis=0)                       # (50, 256)

    # fused dense1: [d1(128) | r1_sums(64) | r1_gates(64)]
    W1c = jnp.concatenate([dW1, sW1, gW1], axis=1)                       # (256, 256)
    b1c = jnp.concatenate([db1, sb1, gb1], axis=1)                       # (1, 256)

    # fused block-diagonal layer 3 (256 -> 78)
    row_d = jnp.concatenate([dWn, dWp, z(128, 60)], axis=1)              # (128, 78)
    row_s = jnp.concatenate([z(64, 18), sWp2, sWn2, z(64, 30)], axis=1)  # (64, 78)
    row_g = jnp.concatenate([z(64, 48), gWp2, gWn2], axis=1)             # (64, 78)
    W3 = jnp.concatenate([row_d, row_s, row_g], axis=0)                  # (256, 78)
    b3 = jnp.concatenate([dbn, dbp, sbp2, sbn2, gbp2, gbn2], axis=1)     # (1, 78)

    # dense3 (16->1) split: feature rows (15 each, stacked) + sum_logs scalars + biases
    w3a = jnp.concatenate([sWp3[:15, :].T, sWn3[:15, :].T,
                           gWp3[:15, :].T, gWn3[:15, :].T], axis=1)      # (1, 60)
    scal = jnp.concatenate([
        sWp3[15:16, 0], sWn3[15:16, 0], gWp3[15:16, 0], gWn3[15:16, 0],
        sbp3[0], sbn3[0], gbp3[0], gbn3[0]], axis=0).reshape(1, 8)       # (1, 8)

    return (W0e, b0, W1c, b1c, W3, b3, w3a, scal)


# ----------------------------------------------------------------------------- reference
def reference_forward(x, sum_logs1, sum_logs2, raw):
    """Plain-JAX mirror of the PyTorch forward (layer by layer, unfused)."""
    (W0, b0, dW1, db1, dWn, dbn, dWp, dbp,
     sW1, sb1, sWp2, sbp2, sWn2, sbn2, sWp3, sbp3, sWn3, sbn3,
     gW1, gb1, gWp2, gbp2, gWn2, gbn2, gWp3, gbp3, gWn3, gbn3) = raw
    relu = lambda a: jnp.maximum(a, 0.0)
    sl1 = sum_logs1[:, None]
    sl2 = sum_logs2[:, None]

    out1 = relu(x @ W0 + b0)
    d1 = relu(out1 @ dW1 + db1)
    distr_neg = d1 @ dWn + dbn
    distr_pos = d1 @ dWp + dbp

    def regr(W1, b1, Wp2, bp2, Wn2, bn2, Wp3, bp3, Wn3, bn3, gates):
        r1 = relu(out1 @ W1 + b1)
        o2p = jnp.concatenate([relu(r1 @ Wp2 + bp2), sl2], axis=1)
        o3p = o2p @ Wp3 + bp3
        o2n = jnp.concatenate([relu(r1 @ Wn2 + bn2), sl1], axis=1)
        o3n = o2n @ Wn3 + bn3
        if gates:
            o3p, o3n = jax.nn.sigmoid(o3p), jax.nn.sigmoid(o3n)
        return o3n, o3p

    sums_neg, sums_pos = regr(sW1, sb1, sWp2, sbp2, sWn2, sbn2,
                              sWp3, sbp3, sWn3, sbn3, False)
    gate_neg, gate_pos = regr(gW1, gb1, gWp2, gbp2, gWn2, gbn2,
                              gWp3, gbp3, gWn3, gbn3, True)
    return {
        "neg_sum": sl1 * gate_neg + sums_neg * (1 - gate_neg),
        "neg_distribution": distr_neg,
        "pos_sum": sl2 * gate_pos + sums_pos * (1 - gate_pos),
        "pos_distribution": distr_pos,
    }


# ----------------------------------------------------------------------------- main
if __name__ == "__main__":
    key = jax.random.PRNGKey(0)
    kx, k1, k2, kp = jax.random.split(key, 4)
    B = 20
    x = jax.random.normal(kx, (B, IN_SIZE), jnp.float32)
    sum_logs1 = jax.random.normal(k1, (B,), jnp.float32)   # neg sum logs (x[1])
    sum_logs2 = jax.random.normal(k2, (B,), jnp.float32)   # pos sum logs (x[2])

    raw = init_params(kp)
    packed = pack_params(raw)

    # small tile (tb_max=8) so the test exercises the batch grid + padding path
    out = combined_target_head(x, sum_logs1, sum_logs2, packed, tb_max=8)
    out = jax.block_until_ready(out)

    ref = reference_forward(x, sum_logs1, sum_logs2, raw)
    for name in ("neg_sum", "neg_distribution", "pos_sum", "pos_distribution"):
        np.testing.assert_allclose(np.asarray(out[name]), np.asarray(ref[name]),
                                   rtol=1e-5, atol=1e-5)
    print("KERNEL_OK")
</pallas_src>

<mosaic_0001>
module attributes {stable_mosaic.version = 11 : i64} {
  func.func @_combined_kernel(%arg0: i32, %arg1: memref<8x50xf32, #tpu.memory_space<vmem>>, %arg2: memref<50x256xf32, #tpu.memory_space<vmem>>, %arg3: memref<1x256xf32, #tpu.memory_space<vmem>>, %arg4: memref<256x256xf32, #tpu.memory_space<vmem>>, %arg5: memref<1x256xf32, #tpu.memory_space<vmem>>, %arg6: memref<256x78xf32, #tpu.memory_space<vmem>>, %arg7: memref<1x78xf32, #tpu.memory_space<vmem>>, %arg8: memref<1x60xf32, #tpu.memory_space<vmem>>, %arg9: memref<1x8xf32, #tpu.memory_space<vmem>>, %arg10: memref<8x32xf32, #tpu.memory_space<vmem>>) attributes {dimension_semantics = [#tpu.dimension_semantics<parallel>], iteration_bounds = array<i64: 3>, scalar_prefetch = 0 : i64, scratch_operands = 0 : i64, tpu.core_type = #tpu.core_type<tc>, window_params = [{transform_indices = @transform_0, window_bounds = array<i64: 8, 50>}, {pipeline_mode = #tpu.pipeline_mode<synchronous>, transform_indices = @transform_1, window_bounds = array<i64: 50, 256>}, {pipeline_mode = #tpu.pipeline_mode<synchronous>, transform_indices = @transform_2, window_bounds = array<i64: 1, 256>}, {pipeline_mode = #tpu.pipeline_mode<synchronous>, transform_indices = @transform_3, window_bounds = array<i64: 256, 256>}, {pipeline_mode = #tpu.pipeline_mode<synchronous>, transform_indices = @transform_4, window_bounds = array<i64: 1, 256>}, {pipeline_mode = #tpu.pipeline_mode<synchronous>, transform_indices = @transform_5, window_bounds = array<i64: 256, 78>}, {pipeline_mode = #tpu.pipeline_mode<synchronous>, transform_indices = @transform_6, window_bounds = array<i64: 1, 78>}, {pipeline_mode = #tpu.pipeline_mode<synchronous>, transform_indices = @transform_7, window_bounds = array<i64: 1, 60>}, {pipeline_mode = #tpu.pipeline_mode<synchronous>, transform_indices = @transform_8, window_bounds = array<i64: 1, 8>}, {transform_indices = @transform_9, window_bounds = array<i64: 8, 32>}]} {
    %c0 = arith.constant 0 : index
    %c0_0 = arith.constant 0 : index
    %0 = vector.load %arg1[%c0, %c0_0] : memref<8x50xf32, #tpu.memory_space<vmem>>, vector<8x50xf32>
    %1 = vector.extract_strided_slice %0 {offsets = [0, 48], sizes = [8, 1], strides = [1, 1]} : vector<8x50xf32> to vector<8x1xf32>
    %2 = vector.extract_strided_slice %0 {offsets = [0, 49], sizes = [8, 1], strides = [1, 1]} : vector<8x50xf32> to vector<8x1xf32>
    %c0_1 = arith.constant 0 : index
    %c0_2 = arith.constant 0 : index
    %3 = vector.load %arg2[%c0_1, %c0_2] : memref<50x256xf32, #tpu.memory_space<vmem>>, vector<50x256xf32>
    %cst = arith.constant dense<0.000000e+00> : vector<8x256xf32>
    %4 = tpu.matmul %0, %3, %cst {dimension_numbers = #tpu.dot_dimension_numbers<[1], [0], [0], [1], [0, 0, 1, 1], [], []>, precision = #tpu.contract_precision<fp32>} : vector<8x50xf32>, vector<50x256xf32>, vector<8x256xf32> -> vector<8x256xf32>
    %c0_3 = arith.constant 0 : index
    %c0_4 = arith.constant 0 : index
    %5 = vector.load %arg3[%c0_3, %c0_4] : memref<1x256xf32, #tpu.memory_space<vmem>>, vector<1x256xf32>
    %6 = vector.broadcast %5 : vector<1x256xf32> to vector<8x256xf32>
    %7 = arith.addf %4, %6 : vector<8x256xf32>
    %cst_5 = arith.constant 0.000000e+00 : f32
    %8 = vector.broadcast %cst_5 : f32 to vector<8x256xf32>
    %9 = arith.maximumf %7, %8 : vector<8x256xf32>
    %c0_6 = arith.constant 0 : index
    %c0_7 = arith.constant 0 : index
    %10 = vector.load %arg4[%c0_6, %c0_7] : memref<256x256xf32, #tpu.memory_space<vmem>>, vector<256x256xf32>
    %cst_8 = arith.constant dense<0.000000e+00> : vector<8x256xf32>
    %11 = tpu.matmul %9, %10, %cst_8 {dimension_numbers = #tpu.dot_dimension_numbers<[1], [0], [0], [1], [0, 0, 1, 1], [], []>, precision = #tpu.contract_precision<fp32>} : vector<8x256xf32>, vector<256x256xf32>, vector<8x256xf32> -> vector<8x256xf32>
    %c0_9 = arith.constant 0 : index
    %c0_10 = arith.constant 0 : index
    %12 = vector.load %arg5[%c0_9, %c0_10] : memref<1x256xf32, #tpu.memory_space<vmem>>, vector<1x256xf32>
    %13 = vector.broadcast %12 : vector<1x256xf32> to vector<8x256xf32>
    %14 = arith.addf %11, %13 : vector<8x256xf32>
    %cst_11 = arith.constant 0.000000e+00 : f32
    %15 = vector.broadcast %cst_11 : f32 to vector<8x256xf32>
    %16 = arith.maximumf %14, %15 : vector<8x256xf32>
    %c0_12 = arith.constant 0 : index
    %c0_13 = arith.constant 0 : index
    %17 = vector.load %arg6[%c0_12, %c0_13] : memref<256x78xf32, #tpu.memory_space<vmem>>, vector<256x78xf32>
    %cst_14 = arith.constant dense<0.000000e+00> : vector<8x78xf32>
    %18 = tpu.matmul %16, %17, %cst_14 {dimension_numbers = #tpu.dot_dimension_numbers<[1], [0], [0], [1], [0, 0, 1, 1], [], []>, precision = #tpu.contract_precision<fp32>} : vector<8x256xf32>, vector<256x78xf32>, vector<8x78xf32> -> vector<8x78xf32>
    %c0_15 = arith.constant 0 : index
    %c0_16 = arith.constant 0 : index
    %19 = vector.load %arg7[%c0_15, %c0_16] : memref<1x78xf32, #tpu.memory_space<vmem>>, vector<1x78xf32>
    %20 = vector.broadcast %19 : vector<1x78xf32> to vector<8x78xf32>
    %21 = arith.addf %18, %20 : vector<8x78xf32>
    %22 = vector.extract_strided_slice %21 {offsets = [0, 0], sizes = [8, 18], strides = [1, 1]} : vector<8x78xf32> to vector<8x18xf32>
    %23 = vector.extract_strided_slice %21 {offsets = [0, 18], sizes = [8, 60], strides = [1, 1]} : vector<8x78xf32> to vector<8x60xf32>
    %cst_17 = arith.constant 0.000000e+00 : f32
    %24 = vector.broadcast %cst_17 : f32 to vector<8x60xf32>
    %25 = arith.maximumf %23, %24 : vector<8x60xf32>
    %c0_18 = arith.constant 0 : index
    %c0_19 = arith.constant 0 : index
    %26 = vector.load %arg8[%c0_18, %c0_19] : memref<1x60xf32, #tpu.memory_space<vmem>>, vector<1x60xf32>
    %27 = vector.broadcast %26 : vector<1x60xf32> to vector<8x60xf32>
    %28 = arith.mulf %25, %27 : vector<8x60xf32>
    %29 = vector.extract_strided_slice %28 {offsets = [0, 0], sizes = [8, 15], strides = [1, 1]} : vector<8x60xf32> to vector<8x15xf32>
    %cst_20 = arith.constant dense<0.000000e+00> : vector<8xf32>
    %30 = vector.multi_reduction <add>, %29, %cst_20 [1] : vector<8x15xf32> to vector<8xf32>
    %31 = vector.shape_cast %30 : vector<8xf32> to vector<8x1xf32>
    %32 = vector.extract_strided_slice %28 {offsets = [0, 15], sizes = [8, 15], strides = [1, 1]} : vector<8x60xf32> to vector<8x15xf32>
    %cst_21 = arith.constant dense<0.000000e+00> : vector<8xf32>
    %33 = vector.multi_reduction <add>, %32, %cst_21 [1] : vector<8x15xf32> to vector<8xf32>
    %34 = vector.shape_cast %33 : vector<8xf32> to vector<8x1xf32>
    %35 = vector.extract_strided_slice %28 {offsets = [0, 30], sizes = [8, 15], strides = [1, 1]} : vector<8x60xf32> to vector<8x15xf32>
    %cst_22 = arith.constant dense<0.000000e+00> : vector<8xf32>
    %36 = vector.multi_reduction <add>, %35, %cst_22 [1] : vector<8x15xf32> to vector<8xf32>
    %37 = vector.shape_cast %36 : vector<8xf32> to vector<8x1xf32>
    %38 = vector.extract_strided_slice %28 {offsets = [0, 45], sizes = [8, 15], strides = [1, 1]} : vector<8x60xf32> to vector<8x15xf32>
    %cst_23 = arith.constant dense<0.000000e+00> : vector<8xf32>
    %39 = vector.multi_reduction <add>, %38, %cst_23 [1] : vector<8x15xf32> to vector<8xf32>
    %40 = vector.shape_cast %39 : vector<8xf32> to vector<8x1xf32>
    %c0_24 = arith.constant 0 : index
    %c0_25 = arith.constant 0 : index
    %41 = vector.load %arg9[%c0_24, %c0_25] : memref<1x8xf32, #tpu.memory_space<vmem>>, vector<1x8xf32>
    %42 = vector.extract_strided_slice %41 {offsets = [0, 0], sizes = [1, 1], strides = [1, 1]} : vector<1x8xf32> to vector<1x1xf32>
    %43 = vector.broadcast %42 : vector<1x1xf32> to vector<8x1xf32>
    %44 = arith.mulf %2, %43 : vector<8x1xf32>
    %45 = arith.addf %31, %44 : vector<8x1xf32>
    %46 = vector.extract_strided_slice %41 {offsets = [0, 4], sizes = [1, 1], strides = [1, 1]} : vector<1x8xf32> to vector<1x1xf32>
    %47 = vector.broadcast %46 : vector<1x1xf32> to vector<8x1xf32>
    %48 = arith.addf %45, %47 : vector<8x1xf32>
    %49 = vector.extract_strided_slice %41 {offsets = [0, 1], sizes = [1, 1], strides = [1, 1]} : vector<1x8xf32> to vector<1x1xf32>
    %50 = vector.broadcast %49 : vector<1x1xf32> to vector<8x1xf32>
    %51 = arith.mulf %1, %50 : vector<8x1xf32>
    %52 = arith.addf %34, %51 : vector<8x1xf32>
    %53 = vector.extract_strided_slice %41 {offsets = [0, 5], sizes = [1, 1], strides = [1, 1]} : vector<1x8xf32> to vector<1x1xf32>
    %54 = vector.broadcast %53 : vector<1x1xf32> to vector<8x1xf32>
    %55 = arith.addf %52, %54 : vector<8x1xf32>
    %56 = vector.extract_strided_slice %41 {offsets = [0, 2], sizes = [1, 1], strides = [1, 1]} : vector<1x8xf32> to vector<1x1xf32>
    %57 = vector.broadcast %56 : vector<1x1xf32> to vector<8x1xf32>
    %58 = arith.mulf %2, %57 : vector<8x1xf32>
    %59 = arith.addf %37, %58 : vector<8x1xf32>
    %60 = vector.extract_strided_slice %41 {offsets = [0, 6], sizes = [1, 1], strides = [1, 1]} : vector<1x8xf32> to vector<1x1xf32>
    %61 = vector.broadcast %60 : vector<1x1xf32> to vector<8x1xf32>
    %62 = arith.addf %59, %61 : vector<8x1xf32>
    %63 = arith.negf %62 : vector<8x1xf32>
    %64 = math.exp %63 : vector<8x1xf32>
    %cst_26 = arith.constant 1.000000e+00 : f32
    %65 = vector.broadcast %cst_26 : f32 to vector<8x1xf32>
    %66 = arith.addf %65, %64 : vector<8x1xf32>
    %67 = arith.divf %65, %66 : vector<8x1xf32>
    %68 = vector.extract_strided_slice %41 {offsets = [0, 3], sizes = [1, 1], strides = [1, 1]} : vector<1x8xf32> to vector<1x1xf32>
    %69 = vector.broadcast %68 : vector<1x1xf32> to vector<8x1xf32>
    %70 = arith.mulf %1, %69 : vector<8x1xf32>
    %71 = arith.addf %40, %70 : vector<8x1xf32>
    %72 = vector.extract_strided_slice %41 {offsets = [0, 7], sizes = [1, 1], strides = [1, 1]} : vector<1x8xf32> to vector<1x1xf32>
    %73 = vector.broadcast %72 : vector<1x1xf32> to vector<8x1xf32>
    %74 = arith.addf %71, %73 : vector<8x1xf32>
    %75 = arith.negf %74 : vector<8x1xf32>
    %76 = math.exp %75 : vector<8x1xf32>
    %cst_27 = arith.constant 1.000000e+00 : f32
    %77 = vector.broadcast %cst_27 : f32 to vector<8x1xf32>
    %78 = arith.addf %77, %76 : vector<8x1xf32>
    %79 = arith.divf %77, %78 : vector<8x1xf32>
    %80 = arith.mulf %1, %79 : vector<8x1xf32>
    %cst_28 = arith.constant 1.000000e+00 : f32
    %81 = vector.broadcast %cst_28 : f32 to vector<8x1xf32>
    %82 = arith.subf %81, %79 : vector<8x1xf32>
    %83 = arith.mulf %55, %82 : vector<8x1xf32>
    %84 = arith.addf %80, %83 : vector<8x1xf32>
    %85 = arith.mulf %2, %67 : vector<8x1xf32>
    %cst_29 = arith.constant 1.000000e+00 : f32
    %86 = vector.broadcast %cst_29 : f32 to vector<8x1xf32>
    %87 = arith.subf %86, %67 : vector<8x1xf32>
    %88 = arith.mulf %48, %87 : vector<8x1xf32>
    %89 = arith.addf %85, %88 : vector<8x1xf32>
    %cst_30 = arith.constant 0.000000e+00 : f32
    %90 = vector.broadcast %cst_30 : f32 to vector<8x12xf32>
    %91 = tpu.concatenate %22, %84, %89, %90 in 1 : vector<8x18xf32>, vector<8x1xf32>, vector<8x1xf32>, vector<8x12xf32> -> vector<8x32xf32>
    %c0_31 = arith.constant 0 : index
    %c0_32 = arith.constant 0 : index
    %92 = vector.load %arg10[%c0_31, %c0_32] : memref<8x32xf32, #tpu.memory_space<vmem>>, vector<8x32xf32>
    tpu.vector_store %arg10[%c0_31, %c0_32], %91 {strides = array<i32>} : memref<8x32xf32, #tpu.memory_space<vmem>>, vector<8x32xf32>,
    return
  }
  func.func @transform_0(%arg0: i32) -> (i32, i32) {
    %c0_i32 = arith.constant 0 : i32
    %c0_i32_0 = arith.constant 0 : i32
    return %arg0, %c0_i32 : i32, i32
  }
  func.func @transform_1(%arg0: i32) -> (i32, i32) {
    %c0_i32 = arith.constant 0 : i32
    %c0_i32_0 = arith.constant 0 : i32
    %c0_i32_1 = arith.constant 0 : i32
    return %c0_i32, %c0_i32_0 : i32, i32
  }
  func.func @transform_2(%arg0: i32) -> (i32, i32) {
    %c0_i32 = arith.constant 0 : i32
    %c0_i32_0 = arith.constant 0 : i32
    %c0_i32_1 = arith.constant 0 : i32
    return %c0_i32, %c0_i32_0 : i32, i32
  }
  func.func @transform_3(%arg0: i32) -> (i32, i32) {
    %c0_i32 = arith.constant 0 : i32
    %c0_i32_0 = arith.constant 0 : i32
    %c0_i32_1 = arith.constant 0 : i32
    return %c0_i32, %c0_i32_0 : i32, i32
  }
  func.func @transform_4(%arg0: i32) -> (i32, i32) {
    %c0_i32 = arith.constant 0 : i32
    %c0_i32_0 = arith.constant 0 : i32
    %c0_i32_1 = arith.constant 0 : i32
    return %c0_i32, %c0_i32_0 : i32, i32
  }
  func.func @transform_5(%arg0: i32) -> (i32, i32) {
    %c0_i32 = arith.constant 0 : i32
    %c0_i32_0 = arith.constant 0 : i32
    %c0_i32_1 = arith.constant 0 : i32
    return %c0_i32, %c0_i32_0 : i32, i32
  }
  func.func @transform_6(%arg0: i32) -> (i32, i32) {
    %c0_i32 = arith.constant 0 : i32
    %c0_i32_0 = arith.constant 0 : i32
    %c0_i32_1 = arith.constant 0 : i32
    return %c0_i32, %c0_i32_0 : i32, i32
  }
  func.func @transform_7(%arg0: i32) -> (i32, i32) {
    %c0_i32 = arith.constant 0 : i32
    %c0_i32_0 = arith.constant 0 : i32
    %c0_i32_1 = arith.constant 0 : i32
    return %c0_i32, %c0_i32_0 : i32, i32
  }
  func.func @transform_8(%arg0: i32) -> (i32, i32) {
    %c0_i32 = arith.constant 0 : i32
    %c0_i32_0 = arith.constant 0 : i32
    %c0_i32_1 = arith.constant 0 : i32
    return %c0_i32, %c0_i32_0 : i32, i32
  }
  func.func @transform_9(%arg0: i32) -> (i32, i32) {
    %c0_i32 = arith.constant 0 : i32
    %c0_i32_0 = arith.constant 0 : i32
    return %arg0, %c0_i32 : i32, i32
  }
}

</mosaic_0001>

<llo_original>
// kernel: tpu_custom_call.1
$region0: #{tpu_custom_call.1}
  #allocation0 [shape = 'u32[]', space=smem, size = 0x4, offset = 0x4, fixed_abs, tag = 'smem constant byte address 0x4 - core index']
  #allocation1 [shape = 'u32[144,128]{1,0:T(1,128)}', space=vmem, size = 0x12000, scoped, tag = 'internal scratch']
  %s0 = inlined_call_operand.vmem [shape: f32[24,50], index: 0, kind: input, shape index: {}]
  %s1 = inlined_call_operand.vmem [shape: f32[50,256], index: 1, kind: input, shape index: {}]
  %s2 = inlined_call_operand.vmem [shape: f32[1,256], index: 2, kind: input, shape index: {}]
  %s3 = inlined_call_operand.hbm [shape: f32[256,256], index: 3, kind: input, shape index: {}]
  %s4 = inlined_call_operand.vmem [shape: f32[1,256], index: 4, kind: input, shape index: {}]
  %s5 = inlined_call_operand.vmem [shape: f32[256,78], index: 5, kind: input, shape index: {}]
  %s6 = inlined_call_operand.vmem [shape: f32[1,78], index: 6, kind: input, shape index: {}]
  %s7 = inlined_call_operand.vmem [shape: f32[1,60], index: 7, kind: input, shape index: {}]
  %s8 = inlined_call_operand.vmem [shape: f32[1,8], index: 8, kind: input, shape index: {}]
  %s9 = inlined_call_operand.hbm [shape: f32[24,32], index: 9, kind: output, shape index: {}]
  %s10 = sld [smem:[#allocation0]]
  $region73: #{tpu_custom_call.1} parent=0
    _
  %s12 = ssub.s32 1, %s10
  %s13 = scalar_select 0, %s12, %s10
  $region1: #{tpu_custom_call.1} parent=0
    #allocation2 [shape = 'u8[262144]{0}', space=vmem, size = 0x40000, scoped, tag = 'input window, operand 3, single buffered']
    #allocation3 [shape = 's32[2]{0}', space=sflag, size = 0x8, scoped, tag = 'scoped memory for tpu_custom_call.1']
    #allocation4 [shape = 's32[2]{0}', space=sflag, size = 0x8, scoped, tag = 'scoped memory for tpu_custom_call.1']
    #allocation5 [shape = 'u8[8192]{0}', space=vmem, size = 0x2000, scoped, tag = 'output window, operand 0']
    %14 = vsyncpa [#allocation3], 0
    %15 = vsyncpa [#allocation4], 0
    %s16 = scalar_lea.sflag [#allocation4], 1
    %17 = vsyncpa %s16, 0
    loop: start=0, step=1, limit=5
    $region2: #{tpu_custom_call.1} parent=1 // loop_pre_header
      _
    $region3: #{tpu_custom_call.1} parent=1 // loop_header
      %s19 = sphi 0, %s23
      %p20 = scmp.ge.s32.totalorder %s19, 5
      %s29 = sphi 0, %s31
      %s32 = sphi 0, %s29
      %s33 = sphi 0, %s32
      %s49 = sphi 0, %s33
      %s53 = sphi 0, %s53
      %s55 = sphi 0, %s53
      %s56 = sphi 0, %s55
      %s70 = sphi 0, %s56
      %s74 = sphi 0, %s74
      %s76 = sphi 0, %s74
      %s77 = sphi 0, %s76
      %s91 = sphi 0, %s77
      %s95 = sphi 0, %s95
      %s97 = sphi 0, %s95
      %s98 = sphi 0, %s97
      %s112 = sphi 0, %s98
      %s116 = sphi 0, %s116
      %s118 = sphi 0, %s116
      %s119 = sphi 0, %s118
      %s133 = sphi 0, %s119
      %s137 = sphi 0, %s137
      %s139 = sphi 0, %s137
      %s140 = sphi 0, %s139
      %s154 = sphi 0, %s140
      %s158 = sphi 0, %s158
      %s160 = sphi 0, %s158
      %s161 = sphi 0, %s160
      %s175 = sphi 0, %s161
      %s179 = sphi 0, %s179
      %s181 = sphi 0, %s179
      %s182 = sphi 0, %s181
      %s196 = sphi 0, %s182
      %s200 = sphi 0, %s200
      %s202 = sphi 0, %s200
      %s203 = sphi 0, %s202
      %s217 = sphi 0, %s203
      %s223 = sphi 0, %s225
      %s226 = sphi 0, %s223
      %s227 = sphi 0, %s226
      %s243 = sphi 0, %s227
    $region4: #{tpu_custom_call.1} parent=1 // loop_header_branch
      %22 = sbr.rel (%p20) target = $region8
    $region5: #{tpu_custom_call.1} parent=1 // loop_body
      %s24 = ssub.s32 %s19, 1
      %s25 = ssub.s32 %s19, 2
      %s26 = sadd.s32 %s19, 1
      %s27 = ssub.s32 %s19, %s26
      %p28 = scmp.eq.s32.totalorder %s27, 0
      %s30 = sadd.s32 %s29, 1
      %s31 = scalar_select %p28, %s29, %s30
      %p34 = pneg %p28
      %p35 = scmp.eq.s32.totalorder %s19, 2
      %p36 = por %p34, %p35
      %p37 = scmp.ne.s32.totalorder %s29, %s32
      %p38 = scmp.eq.s32.totalorder %s19, 0
      %p39 = por %p37, %p38
      %p40 = scmp.ne.s32.totalorder %s29, %s32
      %p41 = scmp.eq.s32.totalorder %s24, 2
      %p42 = por %p40, %p41
      %p43 = scmp.ne.s32.totalorder %s32, %s33
      %p44 = scmp.eq.s32.totalorder %s24, 0
      %p45 = por %p43, %p44
      %p46 = scmp.ne.s32.totalorder %s32, %s33
      %p47 = scmp.eq.s32.totalorder %s25, 2
      %p48 = por %p46, %p47
      %p50 = scmp.ne.s32.totalorder %s33, %s49
      %p51 = scmp.eq.s32.totalorder %s25, 0
      %p52 = por %p50, %p51
      %s54 = sadd.s32 %s53, 1
      %p57 = scmp.eq.s32.totalorder %s19, 2
      %p58 = scmp.ne.s32.totalorder %s53, %s55
      %p59 = scmp.eq.s32.totalorder %s19, 0
      %p60 = por %p58, %p59
      %p61 = scmp.ne.s32.totalorder %s53, %s55
      %p62 = scmp.eq.s32.totalorder %s24, 2
      %p63 = por %p61, %p62
      %p64 = scmp.ne.s32.totalorder %s55, %s56
      %p65 = scmp.eq.s32.totalorder %s24, 0
      %p66 = por %p64, %p65
      %p67 = scmp.ne.s32.totalorder %s55, %s56
      %p68 = scmp.eq.s32.totalorder %s25, 2
      %p69 = por %p67, %p68
      %p71 = scmp.ne.s32.totalorder %s56, %s70
      %p72 = scmp.eq.s32.totalorder %s25, 0
      %p73 = por %p71, %p72
      %s75 = sadd.s32 %s74, 1
      %p78 = scmp.eq.s32.totalorder %s19, 2
      %p79 = scmp.ne.s32.totalorder %s74, %s76
      %p80 = scmp.eq.s32.totalorder %s19, 0
      %p81 = por %p79, %p80
      %p82 = scmp.ne.s32.totalorder %s74, %s76
      %p83 = scmp.eq.s32.totalorder %s24, 2
      %p84 = por %p82, %p83
      %p85 = scmp.ne.s32.totalorder %s76, %s77
      %p86 = scmp.eq.s32.totalorder %s24, 0
      %p87 = por %p85, %p86
      %p88 = scmp.ne.s32.totalorder %s76, %s77
      %p89 = scmp.eq.s32.totalorder %s25, 2
      %p90 = por %p88, %p89
      %p92 = scmp.ne.s32.totalorder %s77, %s91
      %p93 = scmp.eq.s32.totalorder %s25, 0
      %p94 = por %p92, %p93
      %s96 = sadd.s32 %s95, 1
      %p99 = scmp.eq.s32.totalorder %s19, 2
      %p100 = scmp.ne.s32.totalorder %s95, %s97
      %p101 = scmp.eq.s32.totalorder %s19, 0
      %p102 = por %p100, %p101
      %p103 = scmp.ne.s32.totalorder %s95, %s97
      %p104 = scmp.eq.s32.totalorder %s24, 2
      %p105 = por %p103, %p104
      %p106 = scmp.ne.s32.totalorder %s97, %s98
      %p107 = scmp.eq.s32.totalorder %s24, 0
      %p108 = por %p106, %p107
      %p109 = scmp.ne.s32.totalorder %s97, %s98
      %p110 = scmp.eq.s32.totalorder %s25, 2
      %p111 = por %p109, %p110
      %p113 = scmp.ne.s32.totalorder %s98, %s112
      %p114 = scmp.eq.s32.totalorder %s25, 0
      %p115 = por %p113, %p114
      %s117 = sadd.s32 %s116, 1
      %p120 = scmp.eq.s32.totalorder %s19, 2
      %p121 = scmp.ne.s32.totalorder %s116, %s118
      %p122 = scmp.eq.s32.totalorder %s19, 0
      %p123 = por %p121, %p122
      %p124 = scmp.ne.s32.totalorder %s116, %s118
      %p125 = scmp.eq.s32.totalorder %s24, 2
      %p126 = por %p124, %p125
      %p127 = scmp.ne.s32.totalorder %s118, %s119
      %p128 = scmp.eq.s32.totalorder %s24, 0
      %p129 = por %p127, %p128
      %p130 = scmp.ne.s32.totalorder %s118, %s119
      %p131 = scmp.eq.s32.totalorder %s25, 2
      %p132 = por %p130, %p131
      %p134 = scmp.ne.s32.totalorder %s119, %s133
      %p135 = scmp.eq.s32.totalorder %s25, 0
      %p136 = por %p134, %p135
      %s138 = sadd.s32 %s137, 1
      %p141 = scmp.eq.s32.totalorder %s19, 2
      %p142 = scmp.ne.s32.totalorder %s137, %s139
      %p143 = scmp.eq.s32.totalorder %s19, 0
      %p144 = por %p142, %p143
      %p145 = scmp.ne.s32.totalorder %s137, %s139
      %p146 = scmp.eq.s32.totalorder %s24, 2
      %p147 = por %p145, %p146
      %p148 = scmp.ne.s32.totalorder %s139, %s140
      %p149 = scmp.eq.s32.totalorder %s24, 0
      %p150 = por %p148, %p149
      %p151 = scmp.ne.s32.totalorder %s139, %s140
      %p152 = scmp.eq.s32.totalorder %s25, 2
      %p153 = por %p151, %p152
      %p155 = scmp.ne.s32.totalorder %s140, %s154
      %p156 = scmp.eq.s32.totalorder %s25, 0
      %p157 = por %p155, %p156
      %s159 = sadd.s32 %s158, 1
      %p162 = scmp.eq.s32.totalorder %s19, 2
      %p163 = scmp.ne.s32.totalorder %s158, %s160
      %p164 = scmp.eq.s32.totalorder %s19, 0
      %p165 = por %p163, %p164
      %p166 = scmp.ne.s32.totalorder %s158, %s160
      %p167 = scmp.eq.s32.totalorder %s24, 2
      %p168 = por %p166, %p167
      %p169 = scmp.ne.s32.totalorder %s160, %s161
      %p170 = scmp.eq.s32.totalorder %s24, 0
      %p171 = por %p169, %p170
      %p172 = scmp.ne.s32.totalorder %s160, %s161
      %p173 = scmp.eq.s32.totalorder %s25, 2
      %p174 = por %p172, %p173
      %p176 = scmp.ne.s32.totalorder %s161, %s175
      %p177 = scmp.eq.s32.totalorder %s25, 0
      %p178 = por %p176, %p177
      %s180 = sadd.s32 %s179, 1
      %p183 = scmp.eq.s32.totalorder %s19, 2
      %p184 = scmp.ne.s32.totalorder %s179, %s181
      %p185 = scmp.eq.s32.totalorder %s19, 0
      %p186 = por %p184, %p185
      %p187 = scmp.ne.s32.totalorder %s179, %s181
      %p188 = scmp.eq.s32.totalorder %s24, 2
      %p189 = por %p187, %p188
      %p190 = scmp.ne.s32.totalorder %s181, %s182
      %p191 = scmp.eq.s32.totalorder %s24, 0
      %p192 = por %p190, %p191
      %p193 = scmp.ne.s32.totalorder %s181, %s182
      %p194 = scmp.eq.s32.totalorder %s25, 2
      %p195 = por %p193, %p194
      %p197 = scmp.ne.s32.totalorder %s182, %s196
      %p198 = scmp.eq.s32.totalorder %s25, 0
      %p199 = por %p197, %p198
      %s201 = sadd.s32 %s200, 1
      %p204 = scmp.eq.s32.totalorder %s19, 2
      %p205 = scmp.ne.s32.totalorder %s200, %s202
      %p206 = scmp.eq.s32.totalorder %s19, 0
      %p207 = por %p205, %p206
      %p208 = scmp.ne.s32.totalorder %s200, %s202
      %p209 = scmp.eq.s32.totalorder %s24, 2
      %p210 = por %p208, %p209
      %p211 = scmp.ne.s32.totalorder %s202, %s203
      %p212 = scmp.eq.s32.totalorder %s24, 0
      %p213 = por %p211, %p212
      %p214 = scmp.ne.s32.totalorder %s202, %s203
      %p215 = scmp.eq.s32.totalorder %s25, 2
      %p216 = por %p214, %p215
      %p218 = scmp.ne.s32.totalorder %s203, %s217
      %p219 = scmp.eq.s32.totalorder %s25, 0
      %p220 = por %p218, %p219
      %s221 = ssub.s32 %s19, %s26
      %p222 = scmp.eq.s32.totalorder %s221, 0
      %s224 = sadd.s32 %s223, 1
      %s225 = scalar_select %p222, %s223, %s224
      %p228 = pneg %p222
      %p229 = scmp.eq.s32.totalorder %s19, 2
      %p230 = por %p228, %p229
      %p231 = scmp.ne.s32.totalorder %s223, %s226
      %p232 = scmp.eq.s32.totalorder %s19, 0
      %p233 = por %p231, %p232
      %p234 = scmp.ne.s32.totalorder %s223, %s226
      %p235 = scmp.eq.s32.totalorder %s24, 2
      %p236 = por %p234, %p235
      %p237 = scmp.ne.s32.totalorder %s226, %s227
      %p238 = scmp.eq.s32.totalorder %s24, 0
      %p239 = por %p237, %p238
      %p240 = scmp.ne.s32.totalorder %s226, %s227
      %p241 = scmp.eq.s32.totalorder %s25, 2
      %p242 = por %p240, %p241
      %p244 = scmp.ne.s32.totalorder %s227, %s243
      %p245 = scmp.eq.s32.totalorder %s25, 0
      %p246 = por %p244, %p245
      %p247 = scmp.le.s32.totalorder 1, %s19
      %p248 = scmp.lt.s32.totalorder %s19, 4
      %p249 = pnand %p247, %p248
      %p250 = pneg %p249
      // Predicated region
      $region9: #{tpu_custom_call.1} parent=5 // pred_check
        _
      $region10: #{tpu_custom_call.1} parent=5 // pred_check_branch
        %252 = sbr.rel (%p249) target = $region12
      $region11: #{tpu_custom_call.1} parent=5 // pred_region
        %s253 = ssub.s32 %s19, 1
        // Predicated region
        $region13: #{tpu_custom_call.1} parent=11 // pred_check
          %p254 = pneg %p66
        $region14: #{tpu_custom_call.1} parent=11 // pred_check_branch
          %256 = sbr.rel (%p254) target = $region16
        $region15: #{tpu_custom_call.1} parent=11 // pred_region
          _
        $region16: #{tpu_custom_call.1} parent=11 // pred_fallthru
          _
        // Predicated region
        $region17: #{tpu_custom_call.1} parent=11 // pred_check
          %p257 = pneg %p87
        $region18: #{tpu_custom_call.1} parent=11 // pred_check_branch
          %259 = sbr.rel (%p257) target = $region20
        $region19: #{tpu_custom_call.1} parent=11 // pred_region
          _
        $region20: #{tpu_custom_call.1} parent=11 // pred_fallthru
          _
        // Predicated region
        $region21: #{tpu_custom_call.1} parent=11 // pred_check
          %p260 = pneg %p108
        $region22: #{tpu_custom_call.1} parent=11 // pred_check_branch
          %262 = sbr.rel (%p260) target = $region24
        $region23: #{tpu_custom_call.1} parent=11 // pred_region
          %s264 = ssub.s32 8192, 8192
          %265 = vsyncadd [#allocation3], %s264
          %s266 = sshll.u32 [#allocation2], 4
          %s267 = int_to_ptr.vmem [resolvable:$true] %s266
          %272 = dma.hbm_to_vmem [thread:$0]  %s3, 8192, %s267, [#allocation3], 256, 256, 16
        $region24: #{tpu_custom_call.1} parent=11 // pred_fallthru
          _
        // Predicated region
        $region25: #{tpu_custom_call.1} parent=11 // pred_check
          %p273 = pneg %p129
        $region26: #{tpu_custom_call.1} parent=11 // pred_check_branch
          %275 = sbr.rel (%p273) target = $region28
        $region27: #{tpu_custom_call.1} parent=11 // pred_region
          _
        $region28: #{tpu_custom_call.1} parent=11 // pred_fallthru
          _
        // Predicated region
        $region29: #{tpu_custom_call.1} parent=11 // pred_check
          %p276 = pneg %p150
        $region30: #{tpu_custom_call.1} parent=11 // pred_check_branch
          %278 = sbr.rel (%p276) target = $region32
        $region31: #{tpu_custom_call.1} parent=11 // pred_region
          _
        $region32: #{tpu_custom_call.1} parent=11 // pred_fallthru
          _
        // Predicated region
        $region33: #{tpu_custom_call.1} parent=11 // pred_check
          %p279 = pneg %p171
        $region34: #{tpu_custom_call.1} parent=11 // pred_check_branch
          %281 = sbr.rel (%p279) target = $region36
        $region35: #{tpu_custom_call.1} parent=11 // pred_region
          _
        $region36: #{tpu_custom_call.1} parent=11 // pred_fallthru
          _
        // Predicated region
        $region37: #{tpu_custom_call.1} parent=11 // pred_check
          %p282 = pneg %p192
        $region38: #{tpu_custom_call.1} parent=11 // pred_check_branch
          %284 = sbr.rel (%p282) target = $region40
        $region39: #{tpu_custom_call.1} parent=11 // pred_region
          _
        $region40: #{tpu_custom_call.1} parent=11 // pred_fallthru
          _
        // Predicated region
        $region41: #{tpu_custom_call.1} parent=11 // pred_check
          %p285 = pneg %p213
        $region42: #{tpu_custom_call.1} parent=11 // pred_check_branch
          %287 = sbr.rel (%p285) target = $region44
        $region43: #{tpu_custom_call.1} parent=11 // pred_region
          _
        $region44: #{tpu_custom_call.1} parent=11 // pred_fallthru
          _
      $region12: #{tpu_custom_call.1} parent=5 // pred_fallthru
        _
      %p288 = scmp.lt.s32.totalorder %s19, 3
      // Predicated region
      $region45: #{tpu_custom_call.1} parent=5 // pred_check
        %p289 = pneg %p288
      $region46: #{tpu_custom_call.1} parent=5 // pred_check_branch
        %291 = sbr.rel (%p289) target = $region48
      $region47: #{tpu_custom_call.1} parent=5 // pred_region
        // Predicated region
        $region49: #{tpu_custom_call.1} parent=47 // pred_check
          %p292 = pneg %p39
        $region50: #{tpu_custom_call.1} parent=47 // pred_check_branch
          %294 = sbr.rel (%p292) target = $region52
        $region51: #{tpu_custom_call.1} parent=47 // pred_region
          %p295 = scmp.lt.s32.totalorder %s19, 2
          %s296 = scalar_select %p295, %s19, 2
          %s297 = smul.addr %s296, 8
          %s298 = scalar_lea.vmem %s0, %s297
        $region52: #{tpu_custom_call.1} parent=47 // pred_fallthru
          _
      $region48: #{tpu_custom_call.1} parent=5 // pred_fallthru
        _
      %p299 = scmp.le.s32.totalorder 1, %s19
      %p300 = scmp.lt.s32.totalorder %s19, 4
      %p301 = pnand %p299, %p300
      %p302 = pneg %p301
      // Predicated region
      $region53: #{tpu_custom_call.1} parent=5 // pred_check
        _
      $region54: #{tpu_custom_call.1} parent=5 // pred_check_branch
        %304 = sbr.rel (%p301) target = $region56
      $region55: #{tpu_custom_call.1} parent=5 // pred_region
        %s305 = ssub.s32 %s19, 1
        // Predicated region
        $region57: #{tpu_custom_call.1} parent=55 // pred_check
          %p306 = pneg %p108
        $region58: #{tpu_custom_call.1} parent=55 // pred_check_branch
          %308 = sbr.rel (%p306) target = $region60
        $region59: #{tpu_custom_call.1} parent=55 // pred_region
          %309 = dma.done [#allocation3], 8192
        $region60: #{tpu_custom_call.1} parent=55 // pred_fallthru
          _
        %p310 = scmp.lt.s32.totalorder %s24, 2
        %s311 = scalar_select %p310, %s24, 2
        %s312 = smul.addr %s311, 8
        %s313 = scalar_lea.vmem %s0, %s312
        %p314 = pneg %p45
        %p315 = pneg %p42
        %p316 = pneg %p66
        %p317 = pneg %p63
        %p318 = pneg %p87
        %p319 = pneg %p84
        %p320 = pneg %p108
        %p321 = pneg %p105
        %p322 = pneg %p129
        %p323 = pneg %p126
        %p324 = pneg %p150
        %p325 = pneg %p147
        %p326 = pneg %p171
        %p327 = pneg %p168
        %p328 = pneg %p192
        %p329 = pneg %p189
        %p330 = pneg %p213
        %p331 = pneg %p210
        %p332 = pneg %p239
        %p333 = pneg %p236
        %s334 = sand.u32 %s226, 1
        %s335 = scalar_lea.sflag [#allocation4], %s334
        %s336 = sand.u32 %s226, 1
        %s337 = smul.addr %s336, 8
        %s338 = scalar_lea.vmem [#allocation5], %s337
        %p339 = scmp.lt.s32.totalorder %s24, 2
        %s340 = scalar_select %p339, %s24, 2
        %s341 = smul.addr %s340, 8
        %s342 = scalar_lea.vmem %s0, %s341
        %v343 = vld [vmem:[%s342] sm:$0xff]
        %v344 = vld [vmem:[%s1] sm:$0xff]
        %v345 = vld [vmem:[%s1 + $0x8] sm:$0xff]
        %v346 = vld [vmem:[%s1 + $0x10] sm:$0xff]
        %v347 = vld [vmem:[%s1 + $0x18] sm:$0xff]
        %v348 = vld [vmem:[%s1 + $0x20] sm:$0xff]
        %v349 = vld [vmem:[%s1 + $0x28] sm:$0xff]
        %v350 = vld [vmem:[%s1 + $0x30] sm:$0xff]
        %v351 = vld [vmem:[%s1 + $0x38] sm:$0xff]
        %v352 = vld [vmem:[%s1 + $0x40] sm:$0xff]
        %v353 = vld [vmem:[%s1 + $0x48] sm:$0xff]
        %v354 = vld [vmem:[%s1 + $0x50] sm:$0xff]
        %v355 = vld [vmem:[%s1 + $0x58] sm:$0xff]
        %v356 = vld [vmem:[%s1 + $0x60] sm:$0x3]
        %v357 = vld [vmem:[%s1 + $0x68] sm:$0x3]
        %v358 = vld [vmem:[%s2] sm:$0x3]
        %v360 = vlaneseq
        %v361 = vshrl.u32 %v360, 7
        %v362 = vsub.s32 0, %v361
        %v363 = vrot.slane %v358, %v362
        %v364 = vlaneseq
        %v365 = vshrl.u32 %v364, 7
        %v366 = vsub.s32 1, %v365
        %v367 = vrot.slane %v358, %v366
        %vm370 = vcmask 408576
        %v372 = vsel %vm370, %v343, 0
        %vm374 = vcmask 1041408
        %v376 = vsel %vm374, %v356, 0
        %v379 = vsel %vm374, %v357, 0
        %v381 = vand.u32 %v345, 4294901760
        %382 = vmatprep.subr.mxu0 %v381
        %v383 = vand.u32 %v344, 4294901760
        %384 = vmatpush1.msra.mxu0 %v383
        %v385 = vand.u32 %v347, 4294901760
        %386 = vmatprep.subr.mxu0 %v385
        %v387 = vand.u32 %v346, 4294901760
        %388 = vmatpush1.msra.mxu0 %v387
        %v389 = vand.u32 %v349, 4294901760
        %390 = vmatprep.subr.mxu0 %v389
        %v391 = vand.u32 %v348, 4294901760
        %392 = vmatpush1.msra.mxu0 %v391
        %v393 = vand.u32 %v351, 4294901760
        %394 = vmatprep.subr.mxu0 %v393
        %v395 = vand.u32 %v350, 4294901760
        %396 = vmatpush1.msra.mxu0 %v395
        %v397 = vand.u32 %v353, 4294901760
        %398 = vmatprep.subr.mxu0 %v397
        %v399 = vand.u32 %v352, 4294901760
        %400 = vmatpush1.msra.mxu0 %v399
        %v401 = vand.u32 %v355, 4294901760
        %402 = vmatprep.subr.mxu0 %v401
        %v403 = vand.u32 %v354, 4294901760
        %404 = vmatpush1.msra.mxu0 %v403
        %v405 = vand.u32 %v379, 4294901760
        %406 = vmatprep.subr.mxu0 %v405
        %v407 = vand.u32 %v376, 4294901760
        %408 = vmatpush1.msra.mxu0 %v407
        %409 = vmatprep.subr.mxu0 0.0
        %410 = vmatpush1.msra.mxu0 0.0
        %411 = vmatprep.subr.mxu0 0.0
        %412 = vmatpush1.msra.mxu0 0.0
        %413 = vmatprep.subr.mxu0 0.0
        %414 = vmatpush1.msra.mxu0 0.0
        %415 = vmatprep.subr.mxu0 0.0
        %416 = vmatpush1.msra.mxu0 0.0
        %417 = vmatprep.subr.mxu0 0.0
        %418 = vmatpush1.msra.mxu0 0.0
        %419 = vmatprep.subr.mxu0 0.0
        %420 = vmatpush1.msra.mxu0 0.0
        %421 = vmatprep.subr.mxu0 0.0
        %422 = vmatpush1.msra.mxu0 0.0
        %423 = vmatprep.subr.mxu0 0.0
        %424 = vmatpush1.msra.mxu0 0.0
        %425 = vmatprep.subr.mxu0 0.0
        %426 = vmatpush1.msra.mxu0 0.0
        %427 = vmatprep.subr.mxu0 0.0
        %428 = vmatpush1.msra.mxu0 0.0
        %429 = vmatprep.subr.mxu0 0.0
        %430 = vmatpush1.msra.mxu0 0.0
        %431 = vmatprep.subr.mxu0 0.0
        %432 = vmatpush1.msra.mxu0 0.0
        %433 = vmatprep.subr.mxu0 0.0
        %434 = vmatpush1.msra.mxu0 0.0
        %435 = vmatprep.subr.mxu0 0.0
        %436 = vmatpush1.msra.mxu0 0.0
        %437 = vmatprep.subr.mxu0 0.0
        %438 = vmatpush1.msra.mxu0 0.0
        %439 = vmatprep.subr.mxu0 0.0
        %440 = vmatpush1.msra.mxu0 0.0
        %441 = vmatprep.subr.mxu0 0.0
        %442 = vmatpush1.msra.mxu0 0.0
        %443 = vmatprep.subr.mxu0 0.0
        %444 = vmatpush1.msra.mxu0 0.0
        %445 = vmatprep.subr.mxu0 0.0
        %446 = vmatpush1.msra.mxu0 0.0
        %447 = vmatprep.subr.mxu0 0.0
        %448 = vmatpush1.msra.mxu0 0.0
        %449 = vmatprep.subr.mxu0 0.0
        %450 = vmatpush1.msra.mxu0 0.0
        %451 = vmatprep.subr.mxu0 0.0
        %452 = vmatpush1.msra.mxu0 0.0
        %453 = vmatprep.subr.mxu0 0.0
        %454 = vmatpush1.msra.mxu0 0.0
        %455 = vmatprep.subr.mxu0 0.0
        %456 = vmatpush1.msra.mxu0 0.0
        %457 = vmatprep.subr.mxu0 0.0
        %458 = vmatpush1.msra.mxu0 0.0
        %459 = vmatprep.mubr.f32.mxu0 0.0
        %v460 = vand.u32 %v372, 4294901760
        %v461 = vsub.f32 %v372, %v460
        %v462 = vand.u32 %v461, 4294901760
        %v463 = vsub.f32 %v461, %v462
        %v464 = vand.u32 %v463, 4294901760
        %465 = vmatmul.mubr.f32.gmra.mrb[0].mxu0 %v464
        %v466 = vpop.f32.mrb[0].mxu0
        %v467 = vadd.f32 %v363, %v466
        %v468 = vpop.f32.mrb[0].mxu0
        %v469 = vadd.f32 %v367, %v468
        %470 = vdwg.mxu0
        %v471 = vand.u32 %v345, 4294901760
        %v472 = vsub.f32 %v345, %v471
        %v473 = vand.u32 %v472, 4294901760
        %v474 = vsub.f32 %v472, %v473
        %v475 = vand.u32 %v474, 4294901760
        %476 = vmatprep.subr.mxu0 %v475
        %v477 = vand.u32 %v344, 4294901760
        %v478 = vsub.f32 %v344, %v477
        %v479 = vand.u32 %v478, 4294901760
        %v480 = vsub.f32 %v478, %v479
        %v481 = vand.u32 %v480, 4294901760
        %482 = vmatpush1.msra.mxu0 %v481
        %v483 = vand.u32 %v347, 4294901760
        %v484 = vsub.f32 %v347, %v483
        %v485 = vand.u32 %v484, 4294901760
        %v486 = vsub.f32 %v484, %v485
        %v487 = vand.u32 %v486, 4294901760
        %488 = vmatprep.subr.mxu0 %v487
        %v489 = vand.u32 %v346, 4294901760
        %v490 = vsub.f32 %v346, %v489
        %v491 = vand.u32 %v490, 4294901760
        %v492 = vsub.f32 %v490, %v491
        %v493 = vand.u32 %v492, 4294901760
        %494 = vmatpush1.msra.mxu0 %v493
        %v495 = vand.u32 %v349, 4294901760
        %v496 = vsub.f32 %v349, %v495
        %v497 = vand.u32 %v496, 4294901760
        %v498 = vsub.f32 %v496, %v497
        %v499 = vand.u32 %v498, 4294901760
        %500 = vmatprep.subr.mxu0 %v499
        %v501 = vand.u32 %v348, 4294901760
        %v502 = vsub.f32 %v348, %v501
        %v503 = vand.u32 %v502, 4294901760
        %v504 = vsub.f32 %v502, %v503
        %v505 = vand.u32 %v504, 4294901760
        %506 = vmatpush1.msra.mxu0 %v505
        %v507 = vand.u32 %v351, 4294901760
        %v508 = vsub.f32 %v351, %v507
        %v509 = vand.u32 %v508, 4294901760
        %v510 = vsub.f32 %v508, %v509
        %v511 = vand.u32 %v510, 4294901760
        %512 = vmatprep.subr.mxu0 %v511
        %v513 = vand.u32 %v350, 4294901760
        %v514 = vsub.f32 %v350, %v513
        %v515 = vand.u32 %v514, 4294901760
        %v516 = vsub.f32 %v514, %v515
        %v517 = vand.u32 %v516, 4294901760
        %518 = vmatpush1.msra.mxu0 %v517
        %v519 = vand.u32 %v353, 4294901760
        %v520 = vsub.f32 %v353, %v519
        %v521 = vand.u32 %v520, 4294901760
        %v522 = vsub.f32 %v520, %v521
        %v523 = vand.u32 %v522, 4294901760
        %524 = vmatprep.subr.mxu0 %v523
        %v525 = vand.u32 %v352, 4294901760
        %v526 = vsub.f32 %v352, %v525
        %v527 = vand.u32 %v526, 4294901760
        %v528 = vsub.f32 %v526, %v527
        %v529 = vand.u32 %v528, 4294901760
        %530 = vmatpush1.msra.mxu0 %v529
        %v531 = vand.u32 %v355, 4294901760
        %v532 = vsub.f32 %v355, %v531
        %v533 = vand.u32 %v532, 4294901760
        %v534 = vsub.f32 %v532, %v533
        %v535 = vand.u32 %v534, 4294901760
        %536 = vmatprep.subr.mxu0 %v535
        %v537 = vand.u32 %v354, 4294901760
        %v538 = vsub.f32 %v354, %v537
        %v539 = vand.u32 %v538, 4294901760
        %v540 = vsub.f32 %v538, %v539
        %v541 = vand.u32 %v540, 4294901760
        %542 = vmatpush1.msra.mxu0 %v541
        %v543 = vand.u32 %v379, 4294901760
        %v544 = vsub.f32 %v379, %v543
        %v545 = vand.u32 %v544, 4294901760
        %v546 = vsub.f32 %v544, %v545
        %v547 = vand.u32 %v546, 4294901760
        %548 = vmatprep.subr.mxu0 %v547
        %v549 = vand.u32 %v376, 4294901760
        %v550 = vsub.f32 %v376, %v549
        %v551 = vand.u32 %v550, 4294901760
        %v552 = vsub.f32 %v550, %v551
        %v553 = vand.u32 %v552, 4294901760
        %554 = vmatpush1.msra.mxu0 %v553
        %555 = vmatprep.subr.mxu0 0.0
        %556 = vmatpush1.msra.mxu0 0.0
        %557 = vmatprep.subr.mxu0 0.0
        %558 = vmatpush1.msra.mxu0 0.0
        %559 = vmatprep.subr.mxu0 0.0
        %560 = vmatpush1.msra.mxu0 0.0
        %561 = vmatprep.subr.mxu0 0.0
        %562 = vmatpush1.msra.mxu0 0.0
        %563 = vmatprep.subr.mxu0 0.0
        %564 = vmatpush1.msra.mxu0 0.0
        %565 = vmatprep.subr.mxu0 0.0
        %566 = vmatpush1.msra.mxu0 0.0
        %567 = vmatprep.subr.mxu0 0.0
        %568 = vmatpush1.msra.mxu0 0.0
        %569 = vmatprep.subr.mxu0 0.0
        %570 = vmatpush1.msra.mxu0 0.0
        %571 = vmatprep.subr.mxu0 0.0
        %572 = vmatpush1.msra.mxu0 0.0
        %573 = vmatprep.subr.mxu0 0.0
        %574 = vmatpush1.msra.mxu0 0.0
        %575 = vmatprep.subr.mxu0 0.0
        %576 = vmatpush1.msra.mxu0 0.0
        %577 = vmatprep.subr.mxu0 0.0
        %578 = vmatpush1.msra.mxu0 0.0
        %579 = vmatprep.subr.mxu0 0.0
        %580 = vmatpush1.msra.mxu0 0.0
        %581 = vmatprep.subr.mxu0 0.0
        %582 = vmatpush1.msra.mxu0 0.0
        %583 = vmatprep.subr.mxu0 0.0
        %584 = vmatpush1.msra.mxu0 0.0
        %585 = vmatprep.subr.mxu0 0.0
        %586 = vmatpush1.msra.mxu0 0.0
        %587 = vmatprep.subr.mxu0 0.0
        %588 = vmatpush1.msra.mxu0 0.0
        %589 = vmatprep.subr.mxu0 0.0
        %590 = vmatpush1.msra.mxu0 0.0
        %591 = vmatprep.subr.mxu0 0.0
        %592 = vmatpush1.msra.mxu0 0.0
        %593 = vmatprep.subr.mxu0 0.0
        %594 = vmatpush1.msra.mxu0 0.0
        %595 = vmatprep.subr.mxu0 0.0
        %596 = vmatpush1.msra.mxu0 0.0
        %597 = vmatprep.subr.mxu0 0.0
        %598 = vmatpush1.msra.mxu0 0.0
        %599 = vmatprep.subr.mxu0 0.0
        %600 = vmatpush1.msra.mxu0 0.0
        %601 = vmatprep.subr.mxu0 0.0
        %602 = vmatpush1.msra.mxu0 0.0
        %603 = vmatprep.subr.mxu0 0.0
        %604 = vmatpush1.msra.mxu0 0.0
        %605 = vmatprep.mubr.f32.mxu0 0.0
        %v606 = vand.u32 %v372, 4294901760
        %607 = vmatmul.mubr.f32.gmra.mrb[0].mxu0 %v606
        %v608 = vpop.f32.mrb[0].mxu0
        %v609 = vadd.f32 %v467, %v608
        %v610 = vpop.f32.mrb[0].mxu0
        %v611 = vadd.f32 %v469, %v610
        %612 = vdwg.mxu0
        %v613 = vand.u32 %v345, 4294901760
        %v614 = vsub.f32 %v345, %v613
        %615 = vmatprep.subr.mxu0 %v614
        %v616 = vand.u32 %v344, 4294901760
        %v617 = vsub.f32 %v344, %v616
        %618 = vmatpush1.msra.mxu0 %v617
        %v619 = vand.u32 %v347, 4294901760
        %v620 = vsub.f32 %v347, %v619
        %621 = vmatprep.subr.mxu0 %v620
        %v622 = vand.u32 %v346, 4294901760
        %v623 = vsub.f32 %v346, %v622
        %624 = vmatpush1.msra.mxu0 %v623
        %v625 = vand.u32 %v349, 4294901760
        %v626 = vsub.f32 %v349, %v625
        %627 = vmatprep.subr.mxu0 %v626
        %v628 = vand.u32 %v348, 4294901760
        %v629 = vsub.f32 %v348, %v628
        %630 = vmatpush1.msra.mxu0 %v629
        %v631 = vand.u32 %v351, 4294901760
        %v632 = vsub.f32 %v351, %v631
        %633 = vmatprep.subr.mxu0 %v632
        %v634 = vand.u32 %v350, 4294901760
        %v635 = vsub.f32 %v350, %v634
        %636 = vmatpush1.msra.mxu0 %v635
        %v637 = vand.u32 %v353, 4294901760
        %v638 = vsub.f32 %v353, %v637
        %639 = vmatprep.subr.mxu0 %v638
        %v640 = vand.u32 %v352, 4294901760
        %v641 = vsub.f32 %v352, %v640
        %642 = vmatpush1.msra.mxu0 %v641
        %v643 = vand.u32 %v355, 4294901760
        %v644 = vsub.f32 %v355, %v643
        %645 = vmatprep.subr.mxu0 %v644
        %v646 = vand.u32 %v354, 4294901760
        %v647 = vsub.f32 %v354, %v646
        %648 = vmatpush1.msra.mxu0 %v647
        %v649 = vand.u32 %v379, 4294901760
        %v650 = vsub.f32 %v379, %v649
        %651 = vmatprep.subr.mxu0 %v650
        %v652 = vand.u32 %v376, 4294901760
        %v653 = vsub.f32 %v376, %v652
        %654 = vmatpush1.msra.mxu0 %v653
        %655 = vmatprep.subr.mxu0 0.0
        %656 = vmatpush1.msra.mxu0 0.0
        %657 = vmatprep.subr.mxu0 0.0
        %658 = vmatpush1.msra.mxu0 0.0
        %659 = vmatprep.subr.mxu0 0.0
        %660 = vmatpush1.msra.mxu0 0.0
        %661 = vmatprep.subr.mxu0 0.0
        %662 = vmatpush1.msra.mxu0 0.0
        %663 = vmatprep.subr.mxu0 0.0
        %664 = vmatpush1.msra.mxu0 0.0
        %665 = vmatprep.subr.mxu0 0.0
        %666 = vmatpush1.msra.mxu0 0.0
        %667 = vmatprep.subr.mxu0 0.0
        %668 = vmatpush1.msra.mxu0 0.0
        %669 = vmatprep.subr.mxu0 0.0
        %670 = vmatpush1.msra.mxu0 0.0
        %671 = vmatprep.subr.mxu0 0.0
        %672 = vmatpush1.msra.mxu0 0.0
        %673 = vmatprep.subr.mxu0 0.0
        %674 = vmatpush1.msra.mxu0 0.0
        %675 = vmatprep.subr.mxu0 0.0
        %676 = vmatpush1.msra.mxu0 0.0
        %677 = vmatprep.subr.mxu0 0.0
        %678 = vmatpush1.msra.mxu0 0.0
        %679 = vmatprep.subr.mxu0 0.0
        %680 = vmatpush1.msra.mxu0 0.0
        %681 = vmatprep.subr.mxu0 0.0
        %682 = vmatpush1.msra.mxu0 0.0
        %683 = vmatprep.subr.mxu0 0.0
        %684 = vmatpush1.msra.mxu0 0.0
        %685 = vmatprep.subr.mxu0 0.0
        %686 = vmatpush1.msra.mxu0 0.0
        %687 = vmatprep.subr.mxu0 0.0
        %688 = vmatpush1.msra.mxu0 0.0
        %689 = vmatprep.subr.mxu0 0.0
        %690 = vmatpush1.msra.mxu0 0.0
        %691 = vmatprep.subr.mxu0 0.0
        %692 = vmatpush1.msra.mxu0 0.0
        %693 = vmatprep.subr.mxu0 0.0
        %694 = vmatpush1.msra.mxu0 0.0
        %695 = vmatprep.subr.mxu0 0.0
        %696 = vmatpush1.msra.mxu0 0.0
        %697 = vmatprep.subr.mxu0 0.0
        %698 = vmatpush1.msra.mxu0 0.0
        %699 = vmatprep.subr.mxu0 0.0
        %700 = vmatpush1.msra.mxu0 0.0
        %701 = vmatprep.subr.mxu0 0.0
        %702 = vmatpush1.msra.mxu0 0.0
        %703 = vmatprep.subr.mxu0 0.0
        %704 = vmatpush1.msra.mxu0 0.0
        %705 = vmatprep.mubr.f32.mxu0 0.0
        %v706 = vand.u32 %v372, 4294901760
        %v707 = vsub.f32 %v372, %v706
        %708 = vmatmul.mubr.f32.gmra.mrb[0].mxu0 %v707
        %v709 = vpop.f32.mrb[0].mxu0
        %v710 = vadd.f32 %v609, %v709
        %v711 = vpop.f32.mrb[0].mxu0
        %v712 = vadd.f32 %v611, %v711
        %713 = vdwg.mxu0
        %v714 = vand.u32 %v345, 4294901760
        %715 = vmatprep.subr.mxu0 %v714
        %v716 = vand.u32 %v344, 4294901760
        %717 = vmatpush1.msra.mxu0 %v716
        %v718 = vand.u32 %v347, 4294901760
        %719 = vmatprep.subr.mxu0 %v718
        %v720 = vand.u32 %v346, 4294901760
        %721 = vmatpush1.msra.mxu0 %v720
        %v722 = vand.u32 %v349, 4294901760
        %723 = vmatprep.subr.mxu0 %v722
        %v724 = vand.u32 %v348, 4294901760
        %725 = vmatpush1.msra.mxu0 %v724
        %v726 = vand.u32 %v351, 4294901760
        %727 = vmatprep.subr.mxu0 %v726
        %v728 = vand.u32 %v350, 4294901760
        %729 = vmatpush1.msra.mxu0 %v728
        %v730 = vand.u32 %v353, 4294901760
        %731 = vmatprep.subr.mxu0 %v730
        %v732 = vand.u32 %v352, 4294901760
        %733 = vmatpush1.msra.mxu0 %v732
        %v734 = vand.u32 %v355, 4294901760
        %735 = vmatprep.subr.mxu0 %v734
        %v736 = vand.u32 %v354, 4294901760
        %737 = vmatpush1.msra.mxu0 %v736
        %v738 = vand.u32 %v379, 4294901760
        %739 = vmatprep.subr.mxu0 %v738
        %v740 = vand.u32 %v376, 4294901760
        %741 = vmatpush1.msra.mxu0 %v740
        %742 = vmatprep.subr.mxu0 0.0
        %743 = vmatpush1.msra.mxu0 0.0
        %744 = vmatprep.subr.mxu0 0.0
        %745 = vmatpush1.msra.mxu0 0.0
        %746 = vmatprep.subr.mxu0 0.0
        %747 = vmatpush1.msra.mxu0 0.0
        %748 = vmatprep.subr.mxu0 0.0
        %749 = vmatpush1.msra.mxu0 0.0
        %750 = vmatprep.subr.mxu0 0.0
        %751 = vmatpush1.msra.mxu0 0.0
        %752 = vmatprep.subr.mxu0 0.0
        %753 = vmatpush1.msra.mxu0 0.0
        %754 = vmatprep.subr.mxu0 0.0
        %755 = vmatpush1.msra.mxu0 0.0
        %756 = vmatprep.subr.mxu0 0.0
        %757 = vmatpush1.msra.mxu0 0.0
        %758 = vmatprep.subr.mxu0 0.0
        %759 = vmatpush1.msra.mxu0 0.0
        %760 = vmatprep.subr.mxu0 0.0
        %761 = vmatpush1.msra.mxu0 0.0
        %762 = vmatprep.subr.mxu0 0.0
        %763 = vmatpush1.msra.mxu0 0.0
        %764 = vmatprep.subr.mxu0 0.0
        %765 = vmatpush1.msra.mxu0 0.0
        %766 = vmatprep.subr.mxu0 0.0
        %767 = vmatpush1.msra.mxu0 0.0
        %768 = vmatprep.subr.mxu0 0.0
        %769 = vmatpush1.msra.mxu0 0.0
        %770 = vmatprep.subr.mxu0 0.0
        %771 = vmatpush1.msra.mxu0 0.0
        %772 = vmatprep.subr.mxu0 0.0
        %773 = vmatpush1.msra.mxu0 0.0
        %774 = vmatprep.subr.mxu0 0.0
        %775 = vmatpush1.msra.mxu0 0.0
        %776 = vmatprep.subr.mxu0 0.0
        %777 = vmatpush1.msra.mxu0 0.0
        %778 = vmatprep.subr.mxu0 0.0
        %779 = vmatpush1.msra.mxu0 0.0
        %780 = vmatprep.subr.mxu0 0.0
        %781 = vmatpush1.msra.mxu0 0.0
        %782 = vmatprep.subr.mxu0 0.0
        %783 = vmatpush1.msra.mxu0 0.0
        %784 = vmatprep.subr.mxu0 0.0
        %785 = vmatpush1.msra.mxu0 0.0
        %786 = vmatprep.subr.mxu0 0.0
        %787 = vmatpush1.msra.mxu0 0.0
        %788 = vmatprep.subr.mxu0 0.0
        %789 = vmatpush1.msra.mxu0 0.0
        %790 = vmatprep.subr.mxu0 0.0
        %791 = vmatpush1.msra.mxu0 0.0
        %792 = vmatprep.mubr.f32.mxu0 0.0
        %v793 = vand.u32 %v372, 4294901760
        %v794 = vsub.f32 %v372, %v793
        %v795 = vand.u32 %v794, 4294901760
        %796 = vmatmul.mubr.f32.gmra.mrb[0].mxu0 %v795
        %v797 = vpop.f32.mrb[0].mxu0
        %v798 = vadd.f32 %v710, %v797
        %v799 = vpop.f32.mrb[0].mxu0
        %v800 = vadd.f32 %v712, %v799
        %801 = vdwg.mxu0
        %v802 = vand.u32 %v345, 4294901760
        %v803 = vsub.f32 %v345, %v802
        %v804 = vand.u32 %v803, 4294901760
        %805 = vmatprep.subr.mxu0 %v804
        %v806 = vand.u32 %v344, 4294901760
        %v807 = vsub.f32 %v344, %v806
        %v808 = vand.u32 %v807, 4294901760
        %809 = vmatpush1.msra.mxu0 %v808
        %v810 = vand.u32 %v347, 4294901760
        %v811 = vsub.f32 %v347, %v810
        %v812 = vand.u32 %v811, 4294901760
        %813 = vmatprep.subr.mxu0 %v812
        %v814 = vand.u32 %v346, 4294901760
        %v815 = vsub.f32 %v346, %v814
        %v816 = vand.u32 %v815, 4294901760
        %817 = vmatpush1.msra.mxu0 %v816
        %v818 = vand.u32 %v349, 4294901760
        %v819 = vsub.f32 %v349, %v818
        %v820 = vand.u32 %v819, 4294901760
        %821 = vmatprep.subr.mxu0 %v820
        %v822 = vand.u32 %v348, 4294901760
        %v823 = vsub.f32 %v348, %v822
        %v824 = vand.u32 %v823, 4294901760
        %825 = vmatpush1.msra.mxu0 %v824
        %v826 = vand.u32 %v351, 4294901760
        %v827 = vsub.f32 %v351, %v826
        %v828 = vand.u32 %v827, 4294901760
        %829 = vmatprep.subr.mxu0 %v828
        %v830 = vand.u32 %v350, 4294901760
        %v831 = vsub.f32 %v350, %v830
        %v832 = vand.u32 %v831, 4294901760
        %833 = vmatpush1.msra.mxu0 %v832
        %v834 = vand.u32 %v353, 4294901760
        %v835 = vsub.f32 %v353, %v834
        %v836 = vand.u32 %v835, 4294901760
        %837 = vmatprep.subr.mxu0 %v836
        %v838 = vand.u32 %v352, 4294901760
        %v839 = vsub.f32 %v352, %v838
        %v840 = vand.u32 %v839, 4294901760
        %841 = vmatpush1.msra.mxu0 %v840
        %v842 = vand.u32 %v355, 4294901760
        %v843 = vsub.f32 %v355, %v842
        %v844 = vand.u32 %v843, 4294901760
        %845 = vmatprep.subr.mxu0 %v844
        %v846 = vand.u32 %v354, 4294901760
        %v847 = vsub.f32 %v354, %v846
        %v848 = vand.u32 %v847, 4294901760
        %849 = vmatpush1.msra.mxu0 %v848
        %v850 = vand.u32 %v379, 4294901760
        %v851 = vsub.f32 %v379, %v850
        %v852 = vand.u32 %v851, 4294901760
        %853 = vmatprep.subr.mxu0 %v852
        %v854 = vand.u32 %v376, 4294901760
        %v855 = vsub.f32 %v376, %v854
        %v856 = vand.u32 %v855, 4294901760
        %857 = vmatpush1.msra.mxu0 %v856
        %858 = vmatprep.subr.mxu0 0.0
        %859 = vmatpush1.msra.mxu0 0.0
        %860 = vmatprep.subr.mxu0 0.0
        %861 = vmatpush1.msra.mxu0 0.0
        %862 = vmatprep.subr.mxu0 0.0
        %863 = vmatpush1.msra.mxu0 0.0
        %864 = vmatprep.subr.mxu0 0.0
        %865 = vmatpush1.msra.mxu0 0.0
        %866 = vmatprep.subr.mxu0 0.0
        %867 = vmatpush1.msra.mxu0 0.0
        %868 = vmatprep.subr.mxu0 0.0
        %869 = vmatpush1.msra.mxu0 0.0
        %870 = vmatprep.subr.mxu0 0.0
        %871 = vmatpush1.msra.mxu0 0.0
        %872 = vmatprep.subr.mxu0 0.0
        %873 = vmatpush1.msra.mxu0 0.0
        %874 = vmatprep.subr.mxu0 0.0
        %875 = vmatpush1.msra.mxu0 0.0
        %876 = vmatprep.subr.mxu0 0.0
        %877 = vmatpush1.msra.mxu0 0.0
        %878 = vmatprep.subr.mxu0 0.0
        %879 = vmatpush1.msra.mxu0 0.0
        %880 = vmatprep.subr.mxu0 0.0
        %881 = vmatpush1.msra.mxu0 0.0
        %882 = vmatprep.subr.mxu0 0.0
        %883 = vmatpush1.msra.mxu0 0.0
        %884 = vmatprep.subr.mxu0 0.0
        %885 = vmatpush1.msra.mxu0 0.0
        %886 = vmatprep.subr.mxu0 0.0
        %887 = vmatpush1.msra.mxu0 0.0
        %888 = vmatprep.subr.mxu0 0.0
        %889 = vmatpush1.msra.mxu0 0.0
        %890 = vmatprep.subr.mxu0 0.0
        %891 = vmatpush1.msra.mxu0 0.0
        %892 = vmatprep.subr.mxu0 0.0
        %893 = vmatpush1.msra.mxu0 0.0
        %894 = vmatprep.subr.mxu0 0.0
        %895 = vmatpush1.msra.mxu0 0.0
        %896 = vmatprep.subr.mxu0 0.0
        %897 = vmatpush1.msra.mxu0 0.0
        %898 = vmatprep.subr.mxu0 0.0
        %899 = vmatpush1.msra.mxu0 0.0
        %900 = vmatprep.subr.mxu0 0.0
        %901 = vmatpush1.msra.mxu0 0.0
        %902 = vmatprep.subr.mxu0 0.0
        %903 = vmatpush1.msra.mxu0 0.0
        %904 = vmatprep.subr.mxu0 0.0
        %905 = vmatpush1.msra.mxu0 0.0
        %906 = vmatprep.subr.mxu0 0.0
        %907 = vmatpush1.msra.mxu0 0.0
        %908 = vmatprep.mubr.f32.mxu0 0.0
        %v909 = vand.u32 %v372, 4294901760
        %910 = vmatmul.mubr.f32.gmra.mrb[0].mxu0 %v909
        %v911 = vpop.f32.mrb[0].mxu0
        %v912 = vadd.f32 %v798, %v911
        %v913 = vpop.f32.mrb[0].mxu0
        %v914 = vadd.f32 %v800, %v913
        %915 = vdwg.mxu0
        %v916 = vand.u32 %v345, 4294901760
        %917 = vmatprep.subr.mxu0 %v916
        %v918 = vand.u32 %v344, 4294901760
        %919 = vmatpush1.msra.mxu0 %v918
        %v920 = vand.u32 %v347, 4294901760
        %921 = vmatprep.subr.mxu0 %v920
        %v922 = vand.u32 %v346, 4294901760
        %923 = vmatpush1.msra.mxu0 %v922
        %v924 = vand.u32 %v349, 4294901760
        %925 = vmatprep.subr.mxu0 %v924
        %v926 = vand.u32 %v348, 4294901760
        %927 = vmatpush1.msra.mxu0 %v926
        %v928 = vand.u32 %v351, 4294901760
        %929 = vmatprep.subr.mxu0 %v928
        %v930 = vand.u32 %v350, 4294901760
        %931 = vmatpush1.msra.mxu0 %v930
        %v932 = vand.u32 %v353, 4294901760
        %933 = vmatprep.subr.mxu0 %v932
        %v934 = vand.u32 %v352, 4294901760
        %935 = vmatpush1.msra.mxu0 %v934
        %v936 = vand.u32 %v355, 4294901760
        %937 = vmatprep.subr.mxu0 %v936
        %v938 = vand.u32 %v354, 4294901760
        %939 = vmatpush1.msra.mxu0 %v938
        %v940 = vand.u32 %v379, 4294901760
        %941 = vmatprep.subr.mxu0 %v940
        %v942 = vand.u32 %v376, 4294901760
        %943 = vmatpush1.msra.mxu0 %v942
        %944 = vmatprep.subr.mxu0 0.0
        %945 = vmatpush1.msra.mxu0 0.0
        %946 = vmatprep.subr.mxu0 0.0
        %947 = vmatpush1.msra.mxu0 0.0
        %948 = vmatprep.subr.mxu0 0.0
        %949 = vmatpush1.msra.mxu0 0.0
        %950 = vmatprep.subr.mxu0 0.0
        %951 = vmatpush1.msra.mxu0 0.0
        %952 = vmatprep.subr.mxu0 0.0
        %953 = vmatpush1.msra.mxu0 0.0
        %954 = vmatprep.subr.mxu0 0.0
        %955 = vmatpush1.msra.mxu0 0.0
        %956 = vmatprep.subr.mxu0 0.0
        %957 = vmatpush1.msra.mxu0 0.0
        %958 = vmatprep.subr.mxu0 0.0
        %959 = vmatpush1.msra.mxu0 0.0
        %960 = vmatprep.subr.mxu0 0.0
        %961 = vmatpush1.msra.mxu0 0.0
        %962 = vmatprep.subr.mxu0 0.0
        %963 = vmatpush1.msra.mxu0 0.0
        %964 = vmatprep.subr.mxu0 0.0
        %965 = vmatpush1.msra.mxu0 0.0
        %966 = vmatprep.subr.mxu0 0.0
        %967 = vmatpush1.msra.mxu0 0.0
        %968 = vmatprep.subr.mxu0 0.0
        %969 = vmatpush1.msra.mxu0 0.0
        %970 = vmatprep.subr.mxu0 0.0
        %971 = vmatpush1.msra.mxu0 0.0
        %972 = vmatprep.subr.mxu0 0.0
        %973 = vmatpush1.msra.mxu0 0.0
        %974 = vmatprep.subr.mxu0 0.0
        %975 = vmatpush1.msra.mxu0 0.0
        %976 = vmatprep.subr.mxu0 0.0
        %977 = vmatpush1.msra.mxu0 0.0
        %978 = vmatprep.subr.mxu0 0.0
        %979 = vmatpush1.msra.mxu0 0.0
        %980 = vmatprep.subr.mxu0 0.0
        %981 = vmatpush1.msra.mxu0 0.0
        %982 = vmatprep.subr.mxu0 0.0
        %983 = vmatpush1.msra.mxu0 0.0
        %984 = vmatprep.subr.mxu0 0.0
        %985 = vmatpush1.msra.mxu0 0.0
        %986 = vmatprep.subr.mxu0 0.0
        %987 = vmatpush1.msra.mxu0 0.0
        %988 = vmatprep.subr.mxu0 0.0
        %989 = vmatpush1.msra.mxu0 0.0
        %990 = vmatprep.subr.mxu0 0.0
        %991 = vmatpush1.msra.mxu0 0.0
        %992 = vmatprep.subr.mxu0 0.0
        %993 = vmatpush1.msra.mxu0 0.0
        %994 = vmatprep.mubr.f32.mxu0 0.0
        %v995 = vand.u32 %v372, 4294901760
        %996 = vmatmul.mubr.f32.gmra.mrb[0].mxu0 %v995
        %v997 = vpop.f32.mrb[0].mxu0
        %v998 = vadd.f32 %v912, %v997
        %v999 = vpop.f32.mrb[0].mxu0
        %v1000 = vadd.f32 %v914, %v999
        %1001 = vdwg.mxu0
        %v1002 = vmax.f32 %v998, 0.0
        %v1003 = vmax.f32 %v1000, 0.0
        %v1004 = vld [vmem:[#allocation2] sm:$0xff]
        %v1005 = vld [vmem:[#allocation2 + $0x8] sm:$0xff]
        %v1006 = vld [vmem:[#allocation2 + $0x10] sm:$0xff]
        %v1007 = vld [vmem:[#allocation2 + $0x18] sm:$0xff]
        %v1008 = vld [vmem:[#allocation2 + $0x20] sm:$0xff]
        %v1009 = vld [vmem:[#allocation2 + $0x28] sm:$0xff]
        %v1010 = vld [vmem:[#allocation2 + $0x30] sm:$0xff]
        %v1011 = vld [vmem:[#allocation2 + $0x38] sm:$0xff]
        %v1012 = vld [vmem:[#allocation2 + $0x40] sm:$0xff]
        %v1013 = vld [vmem:[#allocation2 + $0x48] sm:$0xff]
        %v1014 = vld [vmem:[#allocation2 + $0x50] sm:$0xff]
        %v1015 = vld [vmem:[#allocation2 + $0x58] sm:$0xff]
        %v1016 = vld [vmem:[#allocation2 + $0x60] sm:$0xff]
        %v1017 = vld [vmem:[#allocation2 + $0x68] sm:$0xff]
        %v1018 = vld [vmem:[#allocation2 + $0x70] sm:$0xff]
        %v1019 = vld [vmem:[#allocation2 + $0x78] sm:$0xff]
        %v1020 = vld [vmem:[#allocation2 + $0x80] sm:$0xff]
        %v1021 = vld [vmem:[#allocation2 + $0x88] sm:$0xff]
        %v1022 = vld [vmem:[#allocation2 + $0x90] sm:$0xff]
        %v1023 = vld [vmem:[#allocation2 + $0x98] sm:$0xff]
        %v1024 = vld [vmem:[#allocation2 + $0xa0] sm:$0xff]
        %v1025 = vld [vmem:[#allocation2 + $0xa8] sm:$0xff]
        %v1026 = vld [vmem:[#allocation2 + $0xb0] sm:$0xff]
        %v1027 = vld [vmem:[#allocation2 + $0xb8] sm:$0xff]
        %v1028 = vld [vmem:[#allocation2 + $0xc0] sm:$0xff]
        %v1029 = vld [vmem:[#allocation2 + $0xc8] sm:$0xff]
        %v1030 = vld [vmem:[#allocation2 + $0xd0] sm:$0xff]
        %v1031 = vld [vmem:[#allocation2 + $0xd8] sm:$0xff]
        %v1032 = vld [vmem:[#allocation2 + $0xe0] sm:$0xff]
        %v1033 = vld [vmem:[#allocation2 + $0xe8] sm:$0xff]
        %v1034 = vld [vmem:[#allocation2 + $0xf0] sm:$0xff]
        %v1035 = vld [vmem:[#allocation2 + $0xf8] sm:$0xff]
        %v1036 = vld [vmem:[#allocation2 + $0x100] sm:$0xff]
        %v1037 = vld [vmem:[#allocation2 + $0x108] sm:$0xff]
        %v1038 = vld [vmem:[#allocation2 + $0x110] sm:$0xff]
        %v1039 = vld [vmem:[#allocation2 + $0x118] sm:$0xff]
        %v1040 = vld [vmem:[#allocation2 + $0x120] sm:$0xff]
        %v1041 = vld [vmem:[#allocation2 + $0x128] sm:$0xff]
        %v1042 = vld [vmem:[#allocation2 + $0x130] sm:$0xff]
        %v1043 = vld [vmem:[#allocation2 + $0x138] sm:$0xff]
        %v1044 = vld [vmem:[#allocation2 + $0x140] sm:$0xff]
        %v1045 = vld [vmem:[#allocation2 + $0x148] sm:$0xff]
        %v1046 = vld [vmem:[#allocation2 + $0x150] sm:$0xff]
        %v1047 = vld [vmem:[#allocation2 + $0x158] sm:$0xff]
        %v1048 = vld [vmem:[#allocation2 + $0x160] sm:$0xff]
        %v1049 = vld [vmem:[#allocation2 + $0x168] sm:$0xff]
        %v1050 = vld [vmem:[#allocation2 + $0x170] sm:$0xff]
        %v1051 = vld [vmem:[#allocation2 + $0x178] sm:$0xff]
        %v1052 = vld [vmem:[#allocation2 + $0x180] sm:$0xff]
        %v1053 = vld [vmem:[#allocation2 + $0x188] sm:$0xff]
        %v1054 = vld [vmem:[#allocation2 + $0x190] sm:$0xff]
        %v1055 = vld [vmem:[#allocation2 + $0x198] sm:$0xff]
        %v1056 = vld [vmem:[#allocation2 + $0x1a0] sm:$0xff]
        %v1057 = vld [vmem:[#allocation2 + $0x1a8] sm:$0xff]
        %v1058 = vld [vmem:[#allocation2 + $0x1b0] sm:$0xff]
        %v1059 = vld [vmem:[#allocation2 + $0x1b8] sm:$0xff]
        %v1060 = vld [vmem:[#allocation2 + $0x1c0] sm:$0xff]
        %v1061 = vld [vmem:[#allocation2 + $0x1c8] sm:$0xff]
        %v1062 = vld [vmem:[#allocation2 + $0x1d0] sm:$0xff]
        %v1063 = vld [vmem:[#allocation2 + $0x1d8] sm:$0xff]
        %v1064 = vld [vmem:[#allocation2 + $0x1e0] sm:$0xff]
        %v1065 = vld [vmem:[#allocation2 + $0x1e8] sm:$0xff]
        %v1066 = vld [vmem:[#allocation2 + $0x1f0] sm:$0xff]
        %v1067 = vld [vmem:[#allocation2 + $0x1f8] sm:$0xff]
        %v1068 = vld [vmem:[%s4] sm:$0x3]
        %v1070 = vlaneseq
        %v1071 = vshrl.u32 %v1070, 7
        %v1072 = vsub.s32 0, %v1071
        %v1073 = vrot.slane %v1068, %v1072
        %v1074 = vlaneseq
        %v1075 = vshrl.u32 %v1074, 7
        %v1076 = vsub.s32 1, %v1075
        %v1077 = vrot.slane %v1068, %v1076
        %v1080 = vand.u32 %v1005, 4294901760
        %1081 = vmatprep.subr.mxu0 %v1080
        %v1082 = vand.u32 %v1004, 4294901760
        %1083 = vmatpush1.msra.mxu0 %v1082
        %v1084 = vand.u32 %v1007, 4294901760
        %1085 = vmatprep.subr.mxu0 %v1084
        %v1086 = vand.u32 %v1006, 4294901760
        %1087 = vmatpush1.msra.mxu0 %v1086
        %v1088 = vand.u32 %v1009, 4294901760
        %1089 = vmatprep.subr.mxu0 %v1088
        %v1090 = vand.u32 %v1008, 4294901760
        %1091 = vmatpush1.msra.mxu0 %v1090
        %v1092 = vand.u32 %v1011, 4294901760
        %1093 = vmatprep.subr.mxu0 %v1092
        %v1094 = vand.u32 %v1010, 4294901760
        %1095 = vmatpush1.msra.mxu0 %v1094
        %v1096 = vand.u32 %v1013, 4294901760
        %1097 = vmatprep.subr.mxu0 %v1096
        %v1098 = vand.u32 %v1012, 4294901760
        %1099 = vmatpush1.msra.mxu0 %v1098
        %v1100 = vand.u32 %v1015, 4294901760
        %1101 = vmatprep.subr.mxu0 %v1100
        %v1102 = vand.u32 %v1014, 4294901760
        %1103 = vmatpush1.msra.mxu0 %v1102
        %v1104 = vand.u32 %v1017, 4294901760
        %1105 = vmatprep.subr.mxu0 %v1104
        %v1106 = vand.u32 %v1016, 4294901760
        %1107 = vmatpush1.msra.mxu0 %v1106
        %v1108 = vand.u32 %v1019, 4294901760
        %1109 = vmatprep.subr.mxu0 %v1108
        %v1110 = vand.u32 %v1018, 4294901760
        %1111 = vmatpush1.msra.mxu0 %v1110
        %v1112 = vand.u32 %v1021, 4294901760
        %1113 = vmatprep.subr.mxu0 %v1112
        %v1114 = vand.u32 %v1020, 4294901760
        %1115 = vmatpush1.msra.mxu0 %v1114
        %v1116 = vand.u32 %v1023, 4294901760
        %1117 = vmatprep.subr.mxu0 %v1116
        %v1118 = vand.u32 %v1022, 4294901760
        %1119 = vmatpush1.msra.mxu0 %v1118
        %v1120 = vand.u32 %v1025, 4294901760
        %1121 = vmatprep.subr.mxu0 %v1120
        %v1122 = vand.u32 %v1024, 4294901760
        %1123 = vmatpush1.msra.mxu0 %v1122
        %v1124 = vand.u32 %v1027, 4294901760
        %1125 = vmatprep.subr.mxu0 %v1124
        %v1126 = vand.u32 %v1026, 4294901760
        %1127 = vmatpush1.msra.mxu0 %v1126
        %v1128 = vand.u32 %v1029, 4294901760
        %1129 = vmatprep.subr.mxu0 %v1128
        %v1130 = vand.u32 %v1028, 4294901760
        %1131 = vmatpush1.msra.mxu0 %v1130
        %v1132 = vand.u32 %v1031, 4294901760
        %1133 = vmatprep.subr.mxu0 %v1132
        %v1134 = vand.u32 %v1030, 4294901760
        %1135 = vmatpush1.msra.mxu0 %v1134
        %v1136 = vand.u32 %v1033, 4294901760
        %1137 = vmatprep.subr.mxu0 %v1136
        %v1138 = vand.u32 %v1032, 4294901760
        %1139 = vmatpush1.msra.mxu0 %v1138
        %v1140 = vand.u32 %v1035, 4294901760
        %1141 = vmatprep.subr.mxu0 %v1140
        %v1142 = vand.u32 %v1034, 4294901760
        %1143 = vmatpush1.msra.mxu0 %v1142
        %v1144 = vand.u32 %v1037, 4294901760
        %1145 = vmatprep.subr.mxu0 %v1144
        %v1146 = vand.u32 %v1036, 4294901760
        %1147 = vmatpush1.msra.mxu0 %v1146
        %v1148 = vand.u32 %v1039, 4294901760
        %1149 = vmatprep.subr.mxu0 %v1148
        %v1150 = vand.u32 %v1038, 4294901760
        %1151 = vmatpush1.msra.mxu0 %v1150
        %v1152 = vand.u32 %v1041, 4294901760
        %1153 = vmatprep.subr.mxu0 %v1152
        %v1154 = vand.u32 %v1040, 4294901760
        %1155 = vmatpush1.msra.mxu0 %v1154
        %v1156 = vand.u32 %v1043, 4294901760
        %1157 = vmatprep.subr.mxu0 %v1156
        %v1158 = vand.u32 %v1042, 4294901760
        %1159 = vmatpush1.msra.mxu0 %v1158
        %v1160 = vand.u32 %v1045, 4294901760
        %1161 = vmatprep.subr.mxu0 %v1160
        %v1162 = vand.u32 %v1044, 4294901760
        %1163 = vmatpush1.msra.mxu0 %v1162
        %v1164 = vand.u32 %v1047, 4294901760
        %1165 = vmatprep.subr.mxu0 %v1164
        %v1166 = vand.u32 %v1046, 4294901760
        %1167 = vmatpush1.msra.mxu0 %v1166
        %v1168 = vand.u32 %v1049, 4294901760
        %1169 = vmatprep.subr.mxu0 %v1168
        %v1170 = vand.u32 %v1048, 4294901760
        %1171 = vmatpush1.msra.mxu0 %v1170
        %v1172 = vand.u32 %v1051, 4294901760
        %1173 = vmatprep.subr.mxu0 %v1172
        %v1174 = vand.u32 %v1050, 4294901760
        %1175 = vmatpush1.msra.mxu0 %v1174
        %v1176 = vand.u32 %v1053, 4294901760
        %1177 = vmatprep.subr.mxu0 %v1176
        %v1178 = vand.u32 %v1052, 4294901760
        %1179 = vmatpush1.msra.mxu0 %v1178
        %v1180 = vand.u32 %v1055, 4294901760
        %1181 = vmatprep.subr.mxu0 %v1180
        %v1182 = vand.u32 %v1054, 4294901760
        %1183 = vmatpush1.msra.mxu0 %v1182
        %v1184 = vand.u32 %v1057, 4294901760
        %1185 = vmatprep.subr.mxu0 %v1184
        %v1186 = vand.u32 %v1056, 4294901760
        %1187 = vmatpush1.msra.mxu0 %v1186
        %v1188 = vand.u32 %v1059, 4294901760
        %1189 = vmatprep.subr.mxu0 %v1188
        %v1190 = vand.u32 %v1058, 4294901760
        %1191 = vmatpush1.msra.mxu0 %v1190
        %v1192 = vand.u32 %v1061, 4294901760
        %1193 = vmatprep.subr.mxu0 %v1192
        %v1194 = vand.u32 %v1060, 4294901760
        %1195 = vmatpush1.msra.mxu0 %v1194
        %v1196 = vand.u32 %v1063, 4294901760
        %1197 = vmatprep.subr.mxu0 %v1196
        %v1198 = vand.u32 %v1062, 4294901760
        %1199 = vmatpush1.msra.mxu0 %v1198
        %v1200 = vand.u32 %v1065, 4294901760
        %1201 = vmatprep.subr.mxu0 %v1200
        %v1202 = vand.u32 %v1064, 4294901760
        %1203 = vmatpush1.msra.mxu0 %v1202
        %v1204 = vand.u32 %v1067, 4294901760
        %1205 = vmatprep.subr.mxu0 %v1204
        %v1206 = vand.u32 %v1066, 4294901760
        %1207 = vmatpush1.msra.mxu0 %v1206
        %v1208 = vand.u32 %v1003, 4294901760
        %v1209 = vsub.f32 %v1003, %v1208
        %v1210 = vand.u32 %v1209, 4294901760
        %v1211 = vsub.f32 %v1209, %v1210
        %v1212 = vand.u32 %v1211, 4294901760
        %1213 = vmatprep.mubr.f32.mxu0 %v1212
        %v1214 = vand.u32 %v1002, 4294901760
        %v1215 = vsub.f32 %v1002, %v1214
        %v1216 = vand.u32 %v1215, 4294901760
        %v1217 = vsub.f32 %v1215, %v1216
        %v1218 = vand.u32 %v1217, 4294901760
        %1219 = vmatmul.mubr.f32.gmra.mrb[0].mxu0 %v1218
        %v1220 = vpop.f32.mrb[0].mxu0
        %v1221 = vadd.f32 %v1073, %v1220
        %v1222 = vpop.f32.mrb[0].mxu0
        %v1223 = vadd.f32 %v1077, %v1222
        %1224 = vdwg.mxu0
        %v1225 = vand.u32 %v1005, 4294901760
        %v1226 = vsub.f32 %v1005, %v1225
        %v1227 = vand.u32 %v1226, 4294901760
        %v1228 = vsub.f32 %v1226, %v1227
        %v1229 = vand.u32 %v1228, 4294901760
        %1230 = vmatprep.subr.mxu0 %v1229
        %v1231 = vand.u32 %v1004, 4294901760
        %v1232 = vsub.f32 %v1004, %v1231
        %v1233 = vand.u32 %v1232, 4294901760
        %v1234 = vsub.f32 %v1232, %v1233
        %v1235 = vand.u32 %v1234, 4294901760
        %1236 = vmatpush1.msra.mxu0 %v1235
        %v1237 = vand.u32 %v1007, 4294901760
        %v1238 = vsub.f32 %v1007, %v1237
        %v1239 = vand.u32 %v1238, 4294901760
        %v1240 = vsub.f32 %v1238, %v1239
        %v1241 = vand.u32 %v1240, 4294901760
        %1242 = vmatprep.subr.mxu0 %v1241
        %v1243 = vand.u32 %v1006, 4294901760
        %v1244 = vsub.f32 %v1006, %v1243
        %v1245 = vand.u32 %v1244, 4294901760
        %v1246 = vsub.f32 %v1244, %v1245
        %v1247 = vand.u32 %v1246, 4294901760
        %1248 = vmatpush1.msra.mxu0 %v1247
        %v1249 = vand.u32 %v1009, 4294901760
        %v1250 = vsub.f32 %v1009, %v1249
        %v1251 = vand.u32 %v1250, 4294901760
        %v1252 = vsub.f32 %v1250, %v1251
        %v1253 = vand.u32 %v1252, 4294901760
        %1254 = vmatprep.subr.mxu0 %v1253
        %v1255 = vand.u32 %v1008, 4294901760
        %v1256 = vsub.f32 %v1008, %v1255
        %v1257 = vand.u32 %v1256, 4294901760
        %v1258 = vsub.f32 %v1256, %v1257
        %v1259 = vand.u32 %v1258, 4294901760
        %1260 = vmatpush1.msra.mxu0 %v1259
        %v1261 = vand.u32 %v1011, 4294901760
        %v1262 = vsub.f32 %v1011, %v1261
        %v1263 = vand.u32 %v1262, 4294901760
        %v1264 = vsub.f32 %v1262, %v1263
        %v1265 = vand.u32 %v1264, 4294901760
        %1266 = vmatprep.subr.mxu0 %v1265
        %v1267 = vand.u32 %v1010, 4294901760
        %v1268 = vsub.f32 %v1010, %v1267
        %v1269 = vand.u32 %v1268, 4294901760
        %v1270 = vsub.f32 %v1268, %v1269
        %v1271 = vand.u32 %v1270, 4294901760
        %1272 = vmatpush1.msra.mxu0 %v1271
        %v1273 = vand.u32 %v1013, 4294901760
        %v1274 = vsub.f32 %v1013, %v1273
        %v1275 = vand.u32 %v1274, 4294901760
        %v1276 = vsub.f32 %v1274, %v1275
        %v1277 = vand.u32 %v1276, 4294901760
        %1278 = vmatprep.subr.mxu0 %v1277
        %v1279 = vand.u32 %v1012, 4294901760
        %v1280 = vsub.f32 %v1012, %v1279
        %v1281 = vand.u32 %v1280, 4294901760
        %v1282 = vsub.f32 %v1280, %v1281
        %v1283 = vand.u32 %v1282, 4294901760
        %1284 = vmatpush1.msra.mxu0 %v1283
        %v1285 = vand.u32 %v1015, 4294901760
        %v1286 = vsub.f32 %v1015, %v1285
        %v1287 = vand.u32 %v1286, 4294901760
        %v1288 = vsub.f32 %v1286, %v1287
        %v1289 = vand.u32 %v1288, 4294901760
        %1290 = vmatprep.subr.mxu0 %v1289
        %v1291 = vand.u32 %v1014, 4294901760
        %v1292 = vsub.f32 %v1014, %v1291
        %v1293 = vand.u32 %v1292, 4294901760
        %v1294 = vsub.f32 %v1292, %v1293
        %v1295 = vand.u32 %v1294, 4294901760
        %1296 = vmatpush1.msra.mxu0 %v1295
        %v1297 = vand.u32 %v1017, 4294901760
        %v1298 = vsub.f32 %v1017, %v1297
        %v1299 = vand.u32 %v1298, 4294901760
        %v1300 = vsub.f32 %v1298, %v1299
        %v1301 = vand.u32 %v1300, 4294901760
        %1302 = vmatprep.subr.mxu0 %v1301
        %v1303 = vand.u32 %v1016, 4294901760
        %v1304 = vsub.f32 %v1016, %v1303
        %v1305 = vand.u32 %v1304, 4294901760
        %v1306 = vsub.f32 %v1304, %v1305
        %v1307 = vand.u32 %v1306, 4294901760
        %1308 = vmatpush1.msra.mxu0 %v1307
        %v1309 = vand.u32 %v1019, 4294901760
        %v1310 = vsub.f32 %v1019, %v1309
        %v1311 = vand.u32 %v1310, 4294901760
        %v1312 = vsub.f32 %v1310, %v1311
        %v1313 = vand.u32 %v1312, 4294901760
        %1314 = vmatprep.subr.mxu0 %v1313
        %v1315 = vand.u32 %v1018, 4294901760
        %v1316 = vsub.f32 %v1018, %v1315
        %v1317 = vand.u32 %v1316, 4294901760
        %v1318 = vsub.f32 %v1316, %v1317
        %v1319 = vand.u32 %v1318, 4294901760
        %1320 = vmatpush1.msra.mxu0 %v1319
        %v1321 = vand.u32 %v1021, 4294901760
        %v1322 = vsub.f32 %v1021, %v1321
        %v1323 = vand.u32 %v1322, 4294901760
        %v1324 = vsub.f32 %v1322, %v1323
        %v1325 = vand.u32 %v1324, 4294901760
        %1326 = vmatprep.subr.mxu0 %v1325
        %v1327 = vand.u32 %v1020, 4294901760
        %v1328 = vsub.f32 %v1020, %v1327
        %v1329 = vand.u32 %v1328, 4294901760
        %v1330 = vsub.f32 %v1328, %v1329
        %v1331 = vand.u32 %v1330, 4294901760
        %1332 = vmatpush1.msra.mxu0 %v1331
        %v1333 = vand.u32 %v1023, 4294901760
        %v1334 = vsub.f32 %v1023, %v1333
        %v1335 = vand.u32 %v1334, 4294901760
        %v1336 = vsub.f32 %v1334, %v1335
        %v1337 = vand.u32 %v1336, 4294901760
        %1338 = vmatprep.subr.mxu0 %v1337
        %v1339 = vand.u32 %v1022, 4294901760
        %v1340 = vsub.f32 %v1022, %v1339
        %v1341 = vand.u32 %v1340, 4294901760
        %v1342 = vsub.f32 %v1340, %v1341
        %v1343 = vand.u32 %v1342, 4294901760
        %1344 = vmatpush1.msra.mxu0 %v1343
        %v1345 = vand.u32 %v1025, 4294901760
        %v1346 = vsub.f32 %v1025, %v1345
        %v1347 = vand.u32 %v1346, 4294901760
        %v1348 = vsub.f32 %v1346, %v1347
        %v1349 = vand.u32 %v1348, 4294901760
        %1350 = vmatprep.subr.mxu0 %v1349
        %v1351 = vand.u32 %v1024, 4294901760
        %v1352 = vsub.f32 %v1024, %v1351
        %v1353 = vand.u32 %v1352, 4294901760
        %v1354 = vsub.f32 %v1352, %v1353
        %v1355 = vand.u32 %v1354, 4294901760
        %1356 = vmatpush1.msra.mxu0 %v1355
        %v1357 = vand.u32 %v1027, 4294901760
        %v1358 = vsub.f32 %v1027, %v1357
        %v1359 = vand.u32 %v1358, 4294901760
        %v1360 = vsub.f32 %v1358, %v1359
        %v1361 = vand.u32 %v1360, 4294901760
        %1362 = vmatprep.subr.mxu0 %v1361
        %v1363 = vand.u32 %v1026, 4294901760
        %v1364 = vsub.f32 %v1026, %v1363
        %v1365 = vand.u32 %v1364, 4294901760
        %v1366 = vsub.f32 %v1364, %v1365
        %v1367 = vand.u32 %v1366, 4294901760
        %1368 = vmatpush1.msra.mxu0 %v1367
        %v1369 = vand.u32 %v1029, 4294901760
        %v1370 = vsub.f32 %v1029, %v1369
        %v1371 = vand.u32 %v1370, 4294901760
        %v1372 = vsub.f32 %v1370, %v1371
        %v1373 = vand.u32 %v1372, 4294901760
        %1374 = vmatprep.subr.mxu0 %v1373
        %v1375 = vand.u32 %v1028, 4294901760
        %v1376 = vsub.f32 %v1028, %v1375
        %v1377 = vand.u32 %v1376, 4294901760
        %v1378 = vsub.f32 %v1376, %v1377
        %v1379 = vand.u32 %v1378, 4294901760
        %1380 = vmatpush1.msra.mxu0 %v1379
        %v1381 = vand.u32 %v1031, 4294901760
        %v1382 = vsub.f32 %v1031, %v1381
        %v1383 = vand.u32 %v1382, 4294901760
        %v1384 = vsub.f32 %v1382, %v1383
        %v1385 = vand.u32 %v1384, 4294901760
        %1386 = vmatprep.subr.mxu0 %v1385
        %v1387 = vand.u32 %v1030, 4294901760
        %v1388 = vsub.f32 %v1030, %v1387
        %v1389 = vand.u32 %v1388, 4294901760
        %v1390 = vsub.f32 %v1388, %v1389
        %v1391 = vand.u32 %v1390, 4294901760
        %1392 = vmatpush1.msra.mxu0 %v1391
        %v1393 = vand.u32 %v1033, 4294901760
        %v1394 = vsub.f32 %v1033, %v1393
        %v1395 = vand.u32 %v1394, 4294901760
        %v1396 = vsub.f32 %v1394, %v1395
        %v1397 = vand.u32 %v1396, 4294901760
        %1398 = vmatprep.subr.mxu0 %v1397
        %v1399 = vand.u32 %v1032, 4294901760
        %v1400 = vsub.f32 %v1032, %v1399
        %v1401 = vand.u32 %v1400, 4294901760
        %v1402 = vsub.f32 %v1400, %v1401
        %v1403 = vand.u32 %v1402, 4294901760
        %1404 = vmatpush1.msra.mxu0 %v1403
        %v1405 = vand.u32 %v1035, 4294901760
        %v1406 = vsub.f32 %v1035, %v1405
        %v1407 = vand.u32 %v1406, 4294901760
        %v1408 = vsub.f32 %v1406, %v1407
        %v1409 = vand.u32 %v1408, 4294901760
        %1410 = vmatprep.subr.mxu0 %v1409
        %v1411 = vand.u32 %v1034, 4294901760
        %v1412 = vsub.f32 %v1034, %v1411
        %v1413 = vand.u32 %v1412, 4294901760
        %v1414 = vsub.f32 %v1412, %v1413
        %v1415 = vand.u32 %v1414, 4294901760
        %1416 = vmatpush1.msra.mxu0 %v1415
        %v1417 = vand.u32 %v1037, 4294901760
        %v1418 = vsub.f32 %v1037, %v1417
        %v1419 = vand.u32 %v1418, 4294901760
        %v1420 = vsub.f32 %v1418, %v1419
        %v1421 = vand.u32 %v1420, 4294901760
        %1422 = vmatprep.subr.mxu0 %v1421
        %v1423 = vand.u32 %v1036, 4294901760
        %v1424 = vsub.f32 %v1036, %v1423
        %v1425 = vand.u32 %v1424, 4294901760
        %v1426 = vsub.f32 %v1424, %v1425
        %v1427 = vand.u32 %v1426, 4294901760
        %1428 = vmatpush1.msra.mxu0 %v1427
        %v1429 = vand.u32 %v1039, 4294901760
        %v1430 = vsub.f32 %v1039, %v1429
        %v1431 = vand.u32 %v1430, 4294901760
        %v1432 = vsub.f32 %v1430, %v1431
        %v1433 = vand.u32 %v1432, 4294901760
        %1434 = vmatprep.subr.mxu0 %v1433
        %v1435 = vand.u32 %v1038, 4294901760
        %v1436 = vsub.f32 %v1038, %v1435
        %v1437 = vand.u32 %v1436, 4294901760
        %v1438 = vsub.f32 %v1436, %v1437
        %v1439 = vand.u32 %v1438, 4294901760
        %1440 = vmatpush1.msra.mxu0 %v1439
        %v1441 = vand.u32 %v1041, 4294901760
        %v1442 = vsub.f32 %v1041, %v1441
        %v1443 = vand.u32 %v1442, 4294901760
        %v1444 = vsub.f32 %v1442, %v1443
        %v1445 = vand.u32 %v1444, 4294901760
        %1446 = vmatprep.subr.mxu0 %v1445
        %v1447 = vand.u32 %v1040, 4294901760
        %v1448 = vsub.f32 %v1040, %v1447
        %v1449 = vand.u32 %v1448, 4294901760
        %v1450 = vsub.f32 %v1448, %v1449
        %v1451 = vand.u32 %v1450, 4294901760
        %1452 = vmatpush1.msra.mxu0 %v1451
        %v1453 = vand.u32 %v1043, 4294901760
        %v1454 = vsub.f32 %v1043, %v1453
        %v1455 = vand.u32 %v1454, 4294901760
        %v1456 = vsub.f32 %v1454, %v1455
        %v1457 = vand.u32 %v1456, 4294901760
        %1458 = vmatprep.subr.mxu0 %v1457
        %v1459 = vand.u32 %v1042, 4294901760
        %v1460 = vsub.f32 %v1042, %v1459
        %v1461 = vand.u32 %v1460, 4294901760
        %v1462 = vsub.f32 %v1460, %v1461
        %v1463 = vand.u32 %v1462, 4294901760
        %1464 = vmatpush1.msra.mxu0 %v1463
        %v1465 = vand.u32 %v1045, 4294901760
        %v1466 = vsub.f32 %v1045, %v1465
        %v1467 = vand.u32 %v1466, 4294901760
        %v1468 = vsub.f32 %v1466, %v1467
        %v1469 = vand.u32 %v1468, 4294901760
        %1470 = vmatprep.subr.mxu0 %v1469
        %v1471 = vand.u32 %v1044, 4294901760
        %v1472 = vsub.f32 %v1044, %v1471
        %v1473 = vand.u32 %v1472, 4294901760
        %v1474 = vsub.f32 %v1472, %v1473
        %v1475 = vand.u32 %v1474, 4294901760
        %1476 = vmatpush1.msra.mxu0 %v1475
        %v1477 = vand.u32 %v1047, 4294901760
        %v1478 = vsub.f32 %v1047, %v1477
        %v1479 = vand.u32 %v1478, 4294901760
        %v1480 = vsub.f32 %v1478, %v1479
        %v1481 = vand.u32 %v1480, 4294901760
        %1482 = vmatprep.subr.mxu0 %v1481
        %v1483 = vand.u32 %v1046, 4294901760
        %v1484 = vsub.f32 %v1046, %v1483
        %v1485 = vand.u32 %v1484, 4294901760
        %v1486 = vsub.f32 %v1484, %v1485
        %v1487 = vand.u32 %v1486, 4294901760
        %1488 = vmatpush1.msra.mxu0 %v1487
        %v1489 = vand.u32 %v1049, 4294901760
        %v1490 = vsub.f32 %v1049, %v1489
        %v1491 = vand.u32 %v1490, 4294901760
        %v1492 = vsub.f32 %v1490, %v1491
        %v1493 = vand.u32 %v1492, 4294901760
        %1494 = vmatprep.subr.mxu0 %v1493
        %v1495 = vand.u32 %v1048, 4294901760
        %v1496 = vsub.f32 %v1048, %v1495
        %v1497 = vand.u32 %v1496, 4294901760
        %v1498 = vsub.f32 %v1496, %v1497
        %v1499 = vand.u32 %v1498, 4294901760
        %1500 = vmatpush1.msra.mxu0 %v1499
        %v1501 = vand.u32 %v1051, 4294901760
        %v1502 = vsub.f32 %v1051, %v1501
        %v1503 = vand.u32 %v1502, 4294901760
        %v1504 = vsub.f32 %v1502, %v1503
        %v1505 = vand.u32 %v1504, 4294901760
        %1506 = vmatprep.subr.mxu0 %v1505
        %v1507 = vand.u32 %v1050, 4294901760
        %v1508 = vsub.f32 %v1050, %v1507
        %v1509 = vand.u32 %v1508, 4294901760
        %v1510 = vsub.f32 %v1508, %v1509
        %v1511 = vand.u32 %v1510, 4294901760
        %1512 = vmatpush1.msra.mxu0 %v1511
        %v1513 = vand.u32 %v1053, 4294901760
        %v1514 = vsub.f32 %v1053, %v1513
        %v1515 = vand.u32 %v1514, 4294901760
        %v1516 = vsub.f32 %v1514, %v1515
        %v1517 = vand.u32 %v1516, 4294901760
        %1518 = vmatprep.subr.mxu0 %v1517
        %v1519 = vand.u32 %v1052, 4294901760
        %v1520 = vsub.f32 %v1052, %v1519
        %v1521 = vand.u32 %v1520, 4294901760
        %v1522 = vsub.f32 %v1520, %v1521
        %v1523 = vand.u32 %v1522, 4294901760
        %1524 = vmatpush1.msra.mxu0 %v1523
        %v1525 = vand.u32 %v1055, 4294901760
        %v1526 = vsub.f32 %v1055, %v1525
        %v1527 = vand.u32 %v1526, 4294901760
        %v1528 = vsub.f32 %v1526, %v1527
        %v1529 = vand.u32 %v1528, 4294901760
        %1530 = vmatprep.subr.mxu0 %v1529
        %v1531 = vand.u32 %v1054, 4294901760
        %v1532 = vsub.f32 %v1054, %v1531
        %v1533 = vand.u32 %v1532, 4294901760
        %v1534 = vsub.f32 %v1532, %v1533
        %v1535 = vand.u32 %v1534, 4294901760
        %1536 = vmatpush1.msra.mxu0 %v1535
        %v1537 = vand.u32 %v1057, 4294901760
        %v1538 = vsub.f32 %v1057, %v1537
        %v1539 = vand.u32 %v1538, 4294901760
        %v1540 = vsub.f32 %v1538, %v1539
        %v1541 = vand.u32 %v1540, 4294901760
        %1542 = vmatprep.subr.mxu0 %v1541
        %v1543 = vand.u32 %v1056, 4294901760
        %v1544 = vsub.f32 %v1056, %v1543
        %v1545 = vand.u32 %v1544, 4294901760
        %v1546 = vsub.f32 %v1544, %v1545
        %v1547 = vand.u32 %v1546, 4294901760
        %1548 = vmatpush1.msra.mxu0 %v1547
        %v1549 = vand.u32 %v1059, 4294901760
        %v1550 = vsub.f32 %v1059, %v1549
        %v1551 = vand.u32 %v1550, 4294901760
        %v1552 = vsub.f32 %v1550, %v1551
        %v1553 = vand.u32 %v1552, 4294901760
        %1554 = vmatprep.subr.mxu0 %v1553
        %v1555 = vand.u32 %v1058, 4294901760
        %v1556 = vsub.f32 %v1058, %v1555
        %v1557 = vand.u32 %v1556, 4294901760
        %v1558 = vsub.f32 %v1556, %v1557
        %v1559 = vand.u32 %v1558, 4294901760
        %1560 = vmatpush1.msra.mxu0 %v1559
        %v1561 = vand.u32 %v1061, 4294901760
        %v1562 = vsub.f32 %v1061, %v1561
        %v1563 = vand.u32 %v1562, 4294901760
        %v1564 = vsub.f32 %v1562, %v1563
        %v1565 = vand.u32 %v1564, 4294901760
        %1566 = vmatprep.subr.mxu0 %v1565
        %v1567 = vand.u32 %v1060, 4294901760
        %v1568 = vsub.f32 %v1060, %v1567
        %v1569 = vand.u32 %v1568, 4294901760
        %v1570 = vsub.f32 %v1568, %v1569
        %v1571 = vand.u32 %v1570, 4294901760
        %1572 = vmatpush1.msra.mxu0 %v1571
        %v1573 = vand.u32 %v1063, 4294901760
        %v1574 = vsub.f32 %v1063, %v1573
        %v1575 = vand.u32 %v1574, 4294901760
        %v1576 = vsub.f32 %v1574, %v1575
        %v1577 = vand.u32 %v1576, 4294901760
        %1578 = vmatprep.subr.mxu0 %v1577
        %v1579 = vand.u32 %v1062, 4294901760
        %v1580 = vsub.f32 %v1062, %v1579
        %v1581 = vand.u32 %v1580, 4294901760
        %v1582 = vsub.f32 %v1580, %v1581
        %v1583 = vand.u32 %v1582, 4294901760
        %1584 = vmatpush1.msra.mxu0 %v1583
        %v1585 = vand.u32 %v1065, 4294901760
        %v1586 = vsub.f32 %v1065, %v1585
        %v1587 = vand.u32 %v1586, 4294901760
        %v1588 = vsub.f32 %v1586, %v1587
        %v1589 = vand.u32 %v1588, 4294901760
        %1590 = vmatprep.subr.mxu0 %v1589
        %v1591 = vand.u32 %v1064, 4294901760
        %v1592 = vsub.f32 %v1064, %v1591
        %v1593 = vand.u32 %v1592, 4294901760
        %v1594 = vsub.f32 %v1592, %v1593
        %v1595 = vand.u32 %v1594, 4294901760
        %1596 = vmatpush1.msra.mxu0 %v1595
        %v1597 = vand.u32 %v1067, 4294901760
        %v1598 = vsub.f32 %v1067, %v1597
        %v1599 = vand.u32 %v1598, 4294901760
        %v1600 = vsub.f32 %v1598, %v1599
        %v1601 = vand.u32 %v1600, 4294901760
        %1602 = vmatprep.subr.mxu0 %v1601
        %v1603 = vand.u32 %v1066, 4294901760
        %v1604 = vsub.f32 %v1066, %v1603
        %v1605 = vand.u32 %v1604, 4294901760
        %v1606 = vsub.f32 %v1604, %v1605
        %v1607 = vand.u32 %v1606, 4294901760
        %1608 = vmatpush1.msra.mxu0 %v1607
        %v1609 = vand.u32 %v1003, 4294901760
        %1610 = vmatprep.mubr.f32.mxu0 %v1609
        %v1611 = vand.u32 %v1002, 4294901760
        %1612 = vmatmul.mubr.f32.gmra.mrb[0].mxu0 %v1611
        %v1613 = vpop.f32.mrb[0].mxu0
        %v1614 = vadd.f32 %v1221, %v1613
        %v1615 = vpop.f32.mrb[0].mxu0
        %v1616 = vadd.f32 %v1223, %v1615
        %1617 = vdwg.mxu0
        %v1618 = vand.u32 %v1005, 4294901760
        %v1619 = vsub.f32 %v1005, %v1618
        %1620 = vmatprep.subr.mxu0 %v1619
        %v1621 = vand.u32 %v1004, 4294901760
        %v1622 = vsub.f32 %v1004, %v1621
        %1623 = vmatpush1.msra.mxu0 %v1622
        %v1624 = vand.u32 %v1007, 4294901760
        %v1625 = vsub.f32 %v1007, %v1624
        %1626 = vmatprep.subr.mxu0 %v1625
        %v1627 = vand.u32 %v1006, 4294901760
        %v1628 = vsub.f32 %v1006, %v1627
        %1629 = vmatpush1.msra.mxu0 %v1628
        %v1630 = vand.u32 %v1009, 4294901760
        %v1631 = vsub.f32 %v1009, %v1630
        %1632 = vmatprep.subr.mxu0 %v1631
        %v1633 = vand.u32 %v1008, 4294901760
        %v1634 = vsub.f32 %v1008, %v1633
        %1635 = vmatpush1.msra.mxu0 %v1634
        %v1636 = vand.u32 %v1011, 4294901760
        %v1637 = vsub.f32 %v1011, %v1636
        %1638 = vmatprep.subr.mxu0 %v1637
        %v1639 = vand.u32 %v1010, 4294901760
        %v1640 = vsub.f32 %v1010, %v1639
        %1641 = vmatpush1.msra.mxu0 %v1640
        %v1642 = vand.u32 %v1013, 4294901760
        %v1643 = vsub.f32 %v1013, %v1642
        %1644 = vmatprep.subr.mxu0 %v1643
        %v1645 = vand.u32 %v1012, 4294901760
        %v1646 = vsub.f32 %v1012, %v1645
        %1647 = vmatpush1.msra.mxu0 %v1646
        %v1648 = vand.u32 %v1015, 4294901760
        %v1649 = vsub.f32 %v1015, %v1648
        %1650 = vmatprep.subr.mxu0 %v1649
        %v1651 = vand.u32 %v1014, 4294901760
        %v1652 = vsub.f32 %v1014, %v1651
        %1653 = vmatpush1.msra.mxu0 %v1652
        %v1654 = vand.u32 %v1017, 4294901760
        %v1655 = vsub.f32 %v1017, %v1654
        %1656 = vmatprep.subr.mxu0 %v1655
        %v1657 = vand.u32 %v1016, 4294901760
        %v1658 = vsub.f32 %v1016, %v1657
        %1659 = vmatpush1.msra.mxu0 %v1658
        %v1660 = vand.u32 %v1019, 4294901760
        %v1661 = vsub.f32 %v1019, %v1660
        %1662 = vmatprep.subr.mxu0 %v1661
        %v1663 = vand.u32 %v1018, 4294901760
        %v1664 = vsub.f32 %v1018, %v1663
        %1665 = vmatpush1.msra.mxu0 %v1664
        %v1666 = vand.u32 %v1021, 4294901760
        %v1667 = vsub.f32 %v1021, %v1666
        %1668 = vmatprep.subr.mxu0 %v1667
        %v1669 = vand.u32 %v1020, 4294901760
        %v1670 = vsub.f32 %v1020, %v1669
        %1671 = vmatpush1.msra.mxu0 %v1670
        %v1672 = vand.u32 %v1023, 4294901760
        %v1673 = vsub.f32 %v1023, %v1672
        %1674 = vmatprep.subr.mxu0 %v1673
        %v1675 = vand.u32 %v1022, 4294901760
        %v1676 = vsub.f32 %v1022, %v1675
        %1677 = vmatpush1.msra.mxu0 %v1676
        %v1678 = vand.u32 %v1025, 4294901760
        %v1679 = vsub.f32 %v1025, %v1678
        %1680 = vmatprep.subr.mxu0 %v1679
        %v1681 = vand.u32 %v1024, 4294901760
        %v1682 = vsub.f32 %v1024, %v1681
        %1683 = vmatpush1.msra.mxu0 %v1682
        %v1684 = vand.u32 %v1027, 4294901760
        %v1685 = vsub.f32 %v1027, %v1684
        %1686 = vmatprep.subr.mxu0 %v1685
        %v1687 = vand.u32 %v1026, 4294901760
        %v1688 = vsub.f32 %v1026, %v1687
        %1689 = vmatpush1.msra.mxu0 %v1688
        %v1690 = vand.u32 %v1029, 4294901760
        %v1691 = vsub.f32 %v1029, %v1690
        %1692 = vmatprep.subr.mxu0 %v1691
        %v1693 = vand.u32 %v1028, 4294901760
        %v1694 = vsub.f32 %v1028, %v1693
        %1695 = vmatpush1.msra.mxu0 %v1694
        %v1696 = vand.u32 %v1031, 4294901760
        %v1697 = vsub.f32 %v1031, %v1696
        %1698 = vmatprep.subr.mxu0 %v1697
        %v1699 = vand.u32 %v1030, 4294901760
        %v1700 = vsub.f32 %v1030, %v1699
        %1701 = vmatpush1.msra.mxu0 %v1700
        %v1702 = vand.u32 %v1033, 4294901760
        %v1703 = vsub.f32 %v1033, %v1702
        %1704 = vmatprep.subr.mxu0 %v1703
        %v1705 = vand.u32 %v1032, 4294901760
        %v1706 = vsub.f32 %v1032, %v1705
        %1707 = vmatpush1.msra.mxu0 %v1706
        %v1708 = vand.u32 %v1035, 4294901760
        %v1709 = vsub.f32 %v1035, %v1708
        %1710 = vmatprep.subr.mxu0 %v1709
        %v1711 = vand.u32 %v1034, 4294901760
        %v1712 = vsub.f32 %v1034, %v1711
        %1713 = vmatpush1.msra.mxu0 %v1712
        %v1714 = vand.u32 %v1037, 4294901760
        %v1715 = vsub.f32 %v1037, %v1714
        %1716 = vmatprep.subr.mxu0 %v1715
        %v1717 = vand.u32 %v1036, 4294901760
        %v1718 = vsub.f32 %v1036, %v1717
        %1719 = vmatpush1.msra.mxu0 %v1718
        %v1720 = vand.u32 %v1039, 4294901760
        %v1721 = vsub.f32 %v1039, %v1720
        %1722 = vmatprep.subr.mxu0 %v1721
        %v1723 = vand.u32 %v1038, 4294901760
        %v1724 = vsub.f32 %v1038, %v1723
        %1725 = vmatpush1.msra.mxu0 %v1724
        %v1726 = vand.u32 %v1041, 4294901760
        %v1727 = vsub.f32 %v1041, %v1726
        %1728 = vmatprep.subr.mxu0 %v1727
        %v1729 = vand.u32 %v1040, 4294901760
        %v1730 = vsub.f32 %v1040, %v1729
        %1731 = vmatpush1.msra.mxu0 %v1730
        %v1732 = vand.u32 %v1043, 4294901760
        %v1733 = vsub.f32 %v1043, %v1732
        %1734 = vmatprep.subr.mxu0 %v1733
        %v1735 = vand.u32 %v1042, 4294901760
        %v1736 = vsub.f32 %v1042, %v1735
        %1737 = vmatpush1.msra.mxu0 %v1736
        %v1738 = vand.u32 %v1045, 4294901760
        %v1739 = vsub.f32 %v1045, %v1738
        %1740 = vmatprep.subr.mxu0 %v1739
        %v1741 = vand.u32 %v1044, 4294901760
        %v1742 = vsub.f32 %v1044, %v1741
        %1743 = vmatpush1.msra.mxu0 %v1742
        %v1744 = vand.u32 %v1047, 4294901760
        %v1745 = vsub.f32 %v1047, %v1744
        %1746 = vmatprep.subr.mxu0 %v1745
        %v1747 = vand.u32 %v1046, 4294901760
        %v1748 = vsub.f32 %v1046, %v1747
        %1749 = vmatpush1.msra.mxu0 %v1748
        %v1750 = vand.u32 %v1049, 4294901760
        %v1751 = vsub.f32 %v1049, %v1750
        %1752 = vmatprep.subr.mxu0 %v1751
        %v1753 = vand.u32 %v1048, 4294901760
        %v1754 = vsub.f32 %v1048, %v1753
        %1755 = vmatpush1.msra.mxu0 %v1754
        %v1756 = vand.u32 %v1051, 4294901760
        %v1757 = vsub.f32 %v1051, %v1756
        %1758 = vmatprep.subr.mxu0 %v1757
        %v1759 = vand.u32 %v1050, 4294901760
        %v1760 = vsub.f32 %v1050, %v1759
        %1761 = vmatpush1.msra.mxu0 %v1760
        %v1762 = vand.u32 %v1053, 4294901760
        %v1763 = vsub.f32 %v1053, %v1762
        %1764 = vmatprep.subr.mxu0 %v1763
        %v1765 = vand.u32 %v1052, 4294901760
        %v1766 = vsub.f32 %v1052, %v1765
        %1767 = vmatpush1.msra.mxu0 %v1766
        %v1768 = vand.u32 %v1055, 4294901760
        %v1769 = vsub.f32 %v1055, %v1768
        %1770 = vmatprep.subr.mxu0 %v1769
        %v1771 = vand.u32 %v1054, 4294901760
        %v1772 = vsub.f32 %v1054, %v1771
        %1773 = vmatpush1.msra.mxu0 %v1772
        %v1774 = vand.u32 %v1057, 4294901760
        %v1775 = vsub.f32 %v1057, %v1774
        %1776 = vmatprep.subr.mxu0 %v1775
        %v1777 = vand.u32 %v1056, 4294901760
        %v1778 = vsub.f32 %v1056, %v1777
        %1779 = vmatpush1.msra.mxu0 %v1778
        %v1780 = vand.u32 %v1059, 4294901760
        %v1781 = vsub.f32 %v1059, %v1780
        %1782 = vmatprep.subr.mxu0 %v1781
        %v1783 = vand.u32 %v1058, 4294901760
        %v1784 = vsub.f32 %v1058, %v1783
        %1785 = vmatpush1.msra.mxu0 %v1784
        %v1786 = vand.u32 %v1061, 4294901760
        %v1787 = vsub.f32 %v1061, %v1786
        %1788 = vmatprep.subr.mxu0 %v1787
        %v1789 = vand.u32 %v1060, 4294901760
        %v1790 = vsub.f32 %v1060, %v1789
        %1791 = vmatpush1.msra.mxu0 %v1790
        %v1792 = vand.u32 %v1063, 4294901760
        %v1793 = vsub.f32 %v1063, %v1792
        %1794 = vmatprep.subr.mxu0 %v1793
        %v1795 = vand.u32 %v1062, 4294901760
        %v1796 = vsub.f32 %v1062, %v1795
        %1797 = vmatpush1.msra.mxu0 %v1796
        %v1798 = vand.u32 %v1065, 4294901760
        %v1799 = vsub.f32 %v1065, %v1798
        %1800 = vmatprep.subr.mxu0 %v1799
        %v1801 = vand.u32 %v1064, 4294901760
        %v1802 = vsub.f32 %v1064, %v1801
        %1803 = vmatpush1.msra.mxu0 %v1802
        %v1804 = vand.u32 %v1067, 4294901760
        %v1805 = vsub.f32 %v1067, %v1804
        %1806 = vmatprep.subr.mxu0 %v1805
        %v1807 = vand.u32 %v1066, 4294901760
        %v1808 = vsub.f32 %v1066, %v1807
        %1809 = vmatpush1.msra.mxu0 %v1808
        %v1810 = vand.u32 %v1003, 4294901760
        %v1811 = vsub.f32 %v1003, %v1810
        %1812 = vmatprep.mubr.f32.mxu0 %v1811
        %v1813 = vand.u32 %v1002, 4294901760
        %v1814 = vsub.f32 %v1002, %v1813
        %1815 = vmatmul.mubr.f32.gmra.mrb[0].mxu0 %v1814
        %v1816 = vpop.f32.mrb[0].mxu0
        %v1817 = vadd.f32 %v1614, %v1816
        %v1818 = vpop.f32.mrb[0].mxu0
        %v1819 = vadd.f32 %v1616, %v1818
        %1820 = vdwg.mxu0
        %v1821 = vand.u32 %v1005, 4294901760
        %1822 = vmatprep.subr.mxu0 %v1821
        %v1823 = vand.u32 %v1004, 4294901760
        %1824 = vmatpush1.msra.mxu0 %v1823
        %v1825 = vand.u32 %v1007, 4294901760
        %1826 = vmatprep.subr.mxu0 %v1825
        %v1827 = vand.u32 %v1006, 4294901760
        %1828 = vmatpush1.msra.mxu0 %v1827
        %v1829 = vand.u32 %v1009, 4294901760
        %1830 = vmatprep.subr.mxu0 %v1829
        %v1831 = vand.u32 %v1008, 4294901760
        %1832 = vmatpush1.msra.mxu0 %v1831
        %v1833 = vand.u32 %v1011, 4294901760
        %1834 = vmatprep.subr.mxu0 %v1833
        %v1835 = vand.u32 %v1010, 4294901760
        %1836 = vmatpush1.msra.mxu0 %v1835
        %v1837 = vand.u32 %v1013, 4294901760
        %1838 = vmatprep.subr.mxu0 %v1837
        %v1839 = vand.u32 %v1012, 4294901760
        %1840 = vmatpush1.msra.mxu0 %v1839
        %v1841 = vand.u32 %v1015, 4294901760
        %1842 = vmatprep.subr.mxu0 %v1841
        %v1843 = vand.u32 %v1014, 4294901760
        %1844 = vmatpush1.msra.mxu0 %v1843
        %v1845 = vand.u32 %v1017, 4294901760
        %1846 = vmatprep.subr.mxu0 %v1845
        %v1847 = vand.u32 %v1016, 4294901760
        %1848 = vmatpush1.msra.mxu0 %v1847
        %v1849 = vand.u32 %v1019, 4294901760
        %1850 = vmatprep.subr.mxu0 %v1849
        %v1851 = vand.u32 %v1018, 4294901760
        %1852 = vmatpush1.msra.mxu0 %v1851
        %v1853 = vand.u32 %v1021, 4294901760
        %1854 = vmatprep.subr.mxu0 %v1853
        %v1855 = vand.u32 %v1020, 4294901760
        %1856 = vmatpush1.msra.mxu0 %v1855
        %v1857 = vand.u32 %v1023, 4294901760
        %1858 = vmatprep.subr.mxu0 %v1857
        %v1859 = vand.u32 %v1022, 4294901760
        %1860 = vmatpush1.msra.mxu0 %v1859
        %v1861 = vand.u32 %v1025, 4294901760
        %1862 = vmatprep.subr.mxu0 %v1861
        %v1863 = vand.u32 %v1024, 4294901760
        %1864 = vmatpush1.msra.mxu0 %v1863
        %v1865 = vand.u32 %v1027, 4294901760
        %1866 = vmatprep.subr.mxu0 %v1865
        %v1867 = vand.u32 %v1026, 4294901760
        %1868 = vmatpush1.msra.mxu0 %v1867
        %v1869 = vand.u32 %v1029, 4294901760
        %1870 = vmatprep.subr.mxu0 %v1869
        %v1871 = vand.u32 %v1028, 4294901760
        %1872 = vmatpush1.msra.mxu0 %v1871
        %v1873 = vand.u32 %v1031, 4294901760
        %1874 = vmatprep.subr.mxu0 %v1873
        %v1875 = vand.u32 %v1030, 4294901760
        %1876 = vmatpush1.msra.mxu0 %v1875
        %v1877 = vand.u32 %v1033, 4294901760
        %1878 = vmatprep.subr.mxu0 %v1877
        %v1879 = vand.u32 %v1032, 4294901760
        %1880 = vmatpush1.msra.mxu0 %v1879
        %v1881 = vand.u32 %v1035, 4294901760
        %1882 = vmatprep.subr.mxu0 %v1881
        %v1883 = vand.u32 %v1034, 4294901760
        %1884 = vmatpush1.msra.mxu0 %v1883
        %v1885 = vand.u32 %v1037, 4294901760
        %1886 = vmatprep.subr.mxu0 %v1885
        %v1887 = vand.u32 %v1036, 4294901760
        %1888 = vmatpush1.msra.mxu0 %v1887
        %v1889 = vand.u32 %v1039, 4294901760
        %1890 = vmatprep.subr.mxu0 %v1889
        %v1891 = vand.u32 %v1038, 4294901760
        %1892 = vmatpush1.msra.mxu0 %v1891
        %v1893 = vand.u32 %v1041, 4294901760
        %1894 = vmatprep.subr.mxu0 %v1893
        %v1895 = vand.u32 %v1040, 4294901760
        %1896 = vmatpush1.msra.mxu0 %v1895
        %v1897 = vand.u32 %v1043, 4294901760
        %1898 = vmatprep.subr.mxu0 %v1897
        %v1899 = vand.u32 %v1042, 4294901760
        %1900 = vmatpush1.msra.mxu0 %v1899
        %v1901 = vand.u32 %v1045, 4294901760
        %1902 = vmatprep.subr.mxu0 %v1901
        %v1903 = vand.u32 %v1044, 4294901760
        %1904 = vmatpush1.msra.mxu0 %v1903
        %v1905 = vand.u32 %v1047, 4294901760
        %1906 = vmatprep.subr.mxu0 %v1905
        %v1907 = vand.u32 %v1046, 4294901760
        %1908 = vmatpush1.msra.mxu0 %v1907
        %v1909 = vand.u32 %v1049, 4294901760
        %1910 = vmatprep.subr.mxu0 %v1909
        %v1911 = vand.u32 %v1048, 4294901760
        %1912 = vmatpush1.msra.mxu0 %v1911
        %v1913 = vand.u32 %v1051, 4294901760
        %1914 = vmatprep.subr.mxu0 %v1913
        %v1915 = vand.u32 %v1050, 4294901760
        %1916 = vmatpush1.msra.mxu0 %v1915
        %v1917 = vand.u32 %v1053, 4294901760
        %1918 = vmatprep.subr.mxu0 %v1917
        %v1919 = vand.u32 %v1052, 4294901760
        %1920 = vmatpush1.msra.mxu0 %v1919
        %v1921 = vand.u32 %v1055, 4294901760
        %1922 = vmatprep.subr.mxu0 %v1921
        %v1923 = vand.u32 %v1054, 4294901760
        %1924 = vmatpush1.msra.mxu0 %v1923
        %v1925 = vand.u32 %v1057, 4294901760
        %1926 = vmatprep.subr.mxu0 %v1925
        %v1927 = vand.u32 %v1056, 4294901760
        %1928 = vmatpush1.msra.mxu0 %v1927
        %v1929 = vand.u32 %v1059, 4294901760
        %1930 = vmatprep.subr.mxu0 %v1929
        %v1931 = vand.u32 %v1058, 4294901760
        %1932 = vmatpush1.msra.mxu0 %v1931
        %v1933 = vand.u32 %v1061, 4294901760
        %1934 = vmatprep.subr.mxu0 %v1933
        %v1935 = vand.u32 %v1060, 4294901760
        %1936 = vmatpush1.msra.mxu0 %v1935
        %v1937 = vand.u32 %v1063, 4294901760
        %1938 = vmatprep.subr.mxu0 %v1937
        %v1939 = vand.u32 %v1062, 4294901760
        %1940 = vmatpush1.msra.mxu0 %v1939
        %v1941 = vand.u32 %v1065, 4294901760
        %1942 = vmatprep.subr.mxu0 %v1941
        %v1943 = vand.u32 %v1064, 4294901760
        %1944 = vmatpush1.msra.mxu0 %v1943
        %v1945 = vand.u32 %v1067, 4294901760
        %1946 = vmatprep.subr.mxu0 %v1945
        %v1947 = vand.u32 %v1066, 4294901760
        %1948 = vmatpush1.msra.mxu0 %v1947
        %v1949 = vand.u32 %v1003, 4294901760
        %v1950 = vsub.f32 %v1003, %v1949
        %v1951 = vand.u32 %v1950, 4294901760
        %1952 = vmatprep.mubr.f32.mxu0 %v1951
        %v1953 = vand.u32 %v1002, 4294901760
        %v1954 = vsub.f32 %v1002, %v1953
        %v1955 = vand.u32 %v1954, 4294901760
        %1956 = vmatmul.mubr.f32.gmra.mrb[0].mxu0 %v1955
        %v1957 = vpop.f32.mrb[0].mxu0
        %v1958 = vadd.f32 %v1817, %v1957
        %v1959 = vpop.f32.mrb[0].mxu0
        %v1960 = vadd.f32 %v1819, %v1959
        %1961 = vdwg.mxu0
        %v1962 = vand.u32 %v1005, 4294901760
        %v1963 = vsub.f32 %v1005, %v1962
        %v1964 = vand.u32 %v1963, 4294901760
        %1965 = vmatprep.subr.mxu0 %v1964
        %v1966 = vand.u32 %v1004, 4294901760
        %v1967 = vsub.f32 %v1004, %v1966
        %v1968 = vand.u32 %v1967, 4294901760
        %1969 = vmatpush1.msra.mxu0 %v1968
        %v1970 = vand.u32 %v1007, 4294901760
        %v1971 = vsub.f32 %v1007, %v1970
        %v1972 = vand.u32 %v1971, 4294901760
        %1973 = vmatprep.subr.mxu0 %v1972
        %v1974 = vand.u32 %v1006, 4294901760
        %v1975 = vsub.f32 %v1006, %v1974
        %v1976 = vand.u32 %v1975, 4294901760
        %1977 = vmatpush1.msra.mxu0 %v1976
        %v1978 = vand.u32 %v1009, 4294901760
        %v1979 = vsub.f32 %v1009, %v1978
        %v1980 = vand.u32 %v1979, 4294901760
        %1981 = vmatprep.subr.mxu0 %v1980
        %v1982 = vand.u32 %v1008, 4294901760
        %v1983 = vsub.f32 %v1008, %v1982
        %v1984 = vand.u32 %v1983, 4294901760
        %1985 = vmatpush1.msra.mxu0 %v1984
        %v1986 = vand.u32 %v1011, 4294901760
        %v1987 = vsub.f32 %v1011, %v1986
        %v1988 = vand.u32 %v1987, 4294901760
        %1989 = vmatprep.subr.mxu0 %v1988
        %v1990 = vand.u32 %v1010, 4294901760
        %v1991 = vsub.f32 %v1010, %v1990
        %v1992 = vand.u32 %v1991, 4294901760
        %1993 = vmatpush1.msra.mxu0 %v1992
        %v1994 = vand.u32 %v1013, 4294901760
        %v1995 = vsub.f32 %v1013, %v1994
        %v1996 = vand.u32 %v1995, 4294901760
        %1997 = vmatprep.subr.mxu0 %v1996
        %v1998 = vand.u32 %v1012, 4294901760
        %v1999 = vsub.f32 %v1012, %v1998
        %v2000 = vand.u32 %v1999, 4294901760
        %2001 = vmatpush1.msra.mxu0 %v2000
        %v2002 = vand.u32 %v1015, 4294901760
        %v2003 = vsub.f32 %v1015, %v2002
        %v2004 = vand.u32 %v2003, 4294901760
        %2005 = vmatprep.subr.mxu0 %v2004
        %v2006 = vand.u32 %v1014, 4294901760
        %v2007 = vsub.f32 %v1014, %v2006
        %v2008 = vand.u32 %v2007, 4294901760
        %2009 = vmatpush1.msra.mxu0 %v2008
        %v2010 = vand.u32 %v1017, 4294901760
        %v2011 = vsub.f32 %v1017, %v2010
        %v2012 = vand.u32 %v2011, 4294901760
        %2013 = vmatprep.subr.mxu0 %v2012
        %v2014 = vand.u32 %v1016, 4294901760
        %v2015 = vsub.f32 %v1016, %v2014
        %v2016 = vand.u32 %v2015, 4294901760
        %2017 = vmatpush1.msra.mxu0 %v2016
        %v2018 = vand.u32 %v1019, 4294901760
        %v2019 = vsub.f32 %v1019, %v2018
        %v2020 = vand.u32 %v2019, 4294901760
        %2021 = vmatprep.subr.mxu0 %v2020
        %v2022 = vand.u32 %v1018, 4294901760
        %v2023 = vsub.f32 %v1018, %v2022
        %v2024 = vand.u32 %v2023, 4294901760
        %2025 = vmatpush1.msra.mxu0 %v2024
        %v2026 = vand.u32 %v1021, 4294901760
        %v2027 = vsub.f32 %v1021, %v2026
        %v2028 = vand.u32 %v2027, 4294901760
        %2029 = vmatprep.subr.mxu0 %v2028
        %v2030 = vand.u32 %v1020, 4294901760
        %v2031 = vsub.f32 %v1020, %v2030
        %v2032 = vand.u32 %v2031, 4294901760
        %2033 = vmatpush1.msra.mxu0 %v2032
        %v2034 = vand.u32 %v1023, 4294901760
        %v2035 = vsub.f32 %v1023, %v2034
        %v2036 = vand.u32 %v2035, 4294901760
        %2037 = vmatprep.subr.mxu0 %v2036
        %v2038 = vand.u32 %v1022, 4294901760
        %v2039 = vsub.f32 %v1022, %v2038
        %v2040 = vand.u32 %v2039, 4294901760
        %2041 = vmatpush1.msra.mxu0 %v2040
        %v2042 = vand.u32 %v1025, 4294901760
        %v2043 = vsub.f32 %v1025, %v2042
        %v2044 = vand.u32 %v2043, 4294901760
        %2045 = vmatprep.subr.mxu0 %v2044
        %v2046 = vand.u32 %v1024, 4294901760
        %v2047 = vsub.f32 %v1024, %v2046
        %v2048 = vand.u32 %v2047, 4294901760
        %2049 = vmatpush1.msra.mxu0 %v2048
        %v2050 = vand.u32 %v1027, 4294901760
        %v2051 = vsub.f32 %v1027, %v2050
        %v2052 = vand.u32 %v2051, 4294901760
        %2053 = vmatprep.subr.mxu0 %v2052
        %v2054 = vand.u32 %v1026, 4294901760
        %v2055 = vsub.f32 %v1026, %v2054
        %v2056 = vand.u32 %v2055, 4294901760
        %2057 = vmatpush1.msra.mxu0 %v2056
        %v2058 = vand.u32 %v1029, 4294901760
        %v2059 = vsub.f32 %v1029, %v2058
        %v2060 = vand.u32 %v2059, 4294901760
        %2061 = vmatprep.subr.mxu0 %v2060
        %v2062 = vand.u32 %v1028, 4294901760
        %v2063 = vsub.f32 %v1028, %v2062
        %v2064 = vand.u32 %v2063, 4294901760
        %2065 = vmatpush1.msra.mxu0 %v2064
        %v2066 = vand.u32 %v1031, 4294901760
        %v2067 = vsub.f32 %v1031, %v2066
        %v2068 = vand.u32 %v2067, 4294901760
        %2069 = vmatprep.subr.mxu0 %v2068
        %v2070 = vand.u32 %v1030, 4294901760
        %v2071 = vsub.f32 %v1030, %v2070
        %v2072 = vand.u32 %v2071, 4294901760
        %2073 = vmatpush1.msra.mxu0 %v2072
        %v2074 = vand.u32 %v1033, 4294901760
        %v2075 = vsub.f32 %v1033, %v2074
        %v2076 = vand.u32 %v2075, 4294901760
        %2077 = vmatprep.subr.mxu0 %v2076
        %v2078 = vand.u32 %v1032, 4294901760
        %v2079 = vsub.f32 %v1032, %v2078
        %v2080 = vand.u32 %v2079, 4294901760
        %2081 = vmatpush1.msra.mxu0 %v2080
        %v2082 = vand.u32 %v1035, 4294901760
        %v2083 = vsub.f32 %v1035, %v2082
        %v2084 = vand.u32 %v2083, 4294901760
        %2085 = vmatprep.subr.mxu0 %v2084
        %v2086 = vand.u32 %v1034, 4294901760
        %v2087 = vsub.f32 %v1034, %v2086
        %v2088 = vand.u32 %v2087, 4294901760
        %2089 = vmatpush1.msra.mxu0 %v2088
        %v2090 = vand.u32 %v1037, 4294901760
        %v2091 = vsub.f32 %v1037, %v2090
        %v2092 = vand.u32 %v2091, 4294901760
        %2093 = vmatprep.subr.mxu0 %v2092
        %v2094 = vand.u32 %v1036, 4294901760
        %v2095 = vsub.f32 %v1036, %v2094
        %v2096 = vand.u32 %v2095, 4294901760
        %2097 = vmatpush1.msra.mxu0 %v2096
        %v2098 = vand.u32 %v1039, 4294901760
        %v2099 = vsub.f32 %v1039, %v2098
        %v2100 = vand.u32 %v2099, 4294901760
        %2101 = vmatprep.subr.mxu0 %v2100
        %v2102 = vand.u32 %v1038, 4294901760
        %v2103 = vsub.f32 %v1038, %v2102
        %v2104 = vand.u32 %v2103, 4294901760
        %2105 = vmatpush1.msra.mxu0 %v2104
        %v2106 = vand.u32 %v1041, 4294901760
        %v2107 = vsub.f32 %v1041, %v2106
        %v2108 = vand.u32 %v2107, 4294901760
        %2109 = vmatprep.subr.mxu0 %v2108
        %v2110 = vand.u32 %v1040, 4294901760
        %v2111 = vsub.f32 %v1040, %v2110
        %v2112 = vand.u32 %v2111, 4294901760
        %2113 = vmatpush1.msra.mxu0 %v2112
        %v2114 = vand.u32 %v1043, 4294901760
        %v2115 = vsub.f32 %v1043, %v2114
        %v2116 = vand.u32 %v2115, 4294901760
        %2117 = vmatprep.subr.mxu0 %v2116
        %v2118 = vand.u32 %v1042, 4294901760
        %v2119 = vsub.f32 %v1042, %v2118
        %v2120 = vand.u32 %v2119, 4294901760
        %2121 = vmatpush1.msra.mxu0 %v2120
        %v2122 = vand.u32 %v1045, 4294901760
        %v2123 = vsub.f32 %v1045, %v2122
        %v2124 = vand.u32 %v2123, 4294901760
        %2125 = vmatprep.subr.mxu0 %v2124
        %v2126 = vand.u32 %v1044, 4294901760
        %v2127 = vsub.f32 %v1044, %v2126
        %v2128 = vand.u32 %v2127, 4294901760
        %2129 = vmatpush1.msra.mxu0 %v2128
        %v2130 = vand.u32 %v1047, 4294901760
        %v2131 = vsub.f32 %v1047, %v2130
        %v2132 = vand.u32 %v2131, 4294901760
        %2133 = vmatprep.subr.mxu0 %v2132
        %v2134 = vand.u32 %v1046, 4294901760
        %v2135 = vsub.f32 %v1046, %v2134
        %v2136 = vand.u32 %v2135, 4294901760
        %2137 = vmatpush1.msra.mxu0 %v2136
        %v2138 = vand.u32 %v1049, 4294901760
        %v2139 = vsub.f32 %v1049, %v2138
        %v2140 = vand.u32 %v2139, 4294901760
        %2141 = vmatprep.subr.mxu0 %v2140
        %v2142 = vand.u32 %v1048, 4294901760
        %v2143 = vsub.f32 %v1048, %v2142
        %v2144 = vand.u32 %v2143, 4294901760
        %2145 = vmatpush1.msra.mxu0 %v2144
        %v2146 = vand.u32 %v1051, 4294901760
        %v2147 = vsub.f32 %v1051, %v2146
        %v2148 = vand.u32 %v2147, 4294901760
        %2149 = vmatprep.subr.mxu0 %v2148
        %v2150 = vand.u32 %v1050, 4294901760
        %v2151 = vsub.f32 %v1050, %v2150
        %v2152 = vand.u32 %v2151, 4294901760
        %2153 = vmatpush1.msra.mxu0 %v2152
        %v2154 = vand.u32 %v1053, 4294901760
        %v2155 = vsub.f32 %v1053, %v2154
        %v2156 = vand.u32 %v2155, 4294901760
        %2157 = vmatprep.subr.mxu0 %v2156
        %v2158 = vand.u32 %v1052, 4294901760
        %v2159 = vsub.f32 %v1052, %v2158
        %v2160 = vand.u32 %v2159, 4294901760
        %2161 = vmatpush1.msra.mxu0 %v2160
        %v2162 = vand.u32 %v1055, 4294901760
        %v2163 = vsub.f32 %v1055, %v2162
        %v2164 = vand.u32 %v2163, 4294901760
        %2165 = vmatprep.subr.mxu0 %v2164
        %v2166 = vand.u32 %v1054, 4294901760
        %v2167 = vsub.f32 %v1054, %v2166
        %v2168 = vand.u32 %v2167, 4294901760
        %2169 = vmatpush1.msra.mxu0 %v2168
        %v2170 = vand.u32 %v1057, 4294901760
        %v2171 = vsub.f32 %v1057, %v2170
        %v2172 = vand.u32 %v2171, 4294901760
        %2173 = vmatprep.subr.mxu0 %v2172
        %v2174 = vand.u32 %v1056, 4294901760
        %v2175 = vsub.f32 %v1056, %v2174
        %v2176 = vand.u32 %v2175, 4294901760
        %2177 = vmatpush1.msra.mxu0 %v2176
        %v2178 = vand.u32 %v1059, 4294901760
        %v2179 = vsub.f32 %v1059, %v2178
        %v2180 = vand.u32 %v2179, 4294901760
        %2181 = vmatprep.subr.mxu0 %v2180
        %v2182 = vand.u32 %v1058, 4294901760
        %v2183 = vsub.f32 %v1058, %v2182
        %v2184 = vand.u32 %v2183, 4294901760
        %2185 = vmatpush1.msra.mxu0 %v2184
        %v2186 = vand.u32 %v1061, 4294901760
        %v2187 = vsub.f32 %v1061, %v2186
        %v2188 = vand.u32 %v2187, 4294901760
        %2189 = vmatprep.subr.mxu0 %v2188
        %v2190 = vand.u32 %v1060, 4294901760
        %v2191 = vsub.f32 %v1060, %v2190
        %v2192 = vand.u32 %v2191, 4294901760
        %2193 = vmatpush1.msra.mxu0 %v2192
        %v2194 = vand.u32 %v1063, 4294901760
        %v2195 = vsub.f32 %v1063, %v2194
        %v2196 = vand.u32 %v2195, 4294901760
        %2197 = vmatprep.subr.mxu0 %v2196
        %v2198 = vand.u32 %v1062, 4294901760
        %v2199 = vsub.f32 %v1062, %v2198
        %v2200 = vand.u32 %v2199, 4294901760
        %2201 = vmatpush1.msra.mxu0 %v2200
        %v2202 = vand.u32 %v1065, 4294901760
        %v2203 = vsub.f32 %v1065, %v2202
        %v2204 = vand.u32 %v2203, 4294901760
        %2205 = vmatprep.subr.mxu0 %v2204
        %v2206 = vand.u32 %v1064, 4294901760
        %v2207 = vsub.f32 %v1064, %v2206
        %v2208 = vand.u32 %v2207, 4294901760
        %2209 = vmatpush1.msra.mxu0 %v2208
        %v2210 = vand.u32 %v1067, 4294901760
        %v2211 = vsub.f32 %v1067, %v2210
        %v2212 = vand.u32 %v2211, 4294901760
        %2213 = vmatprep.subr.mxu0 %v2212
        %v2214 = vand.u32 %v1066, 4294901760
        %v2215 = vsub.f32 %v1066, %v2214
        %v2216 = vand.u32 %v2215, 4294901760
        %2217 = vmatpush1.msra.mxu0 %v2216
        %v2218 = vand.u32 %v1003, 4294901760
        %2219 = vmatprep.mubr.f32.mxu0 %v2218
        %v2220 = vand.u32 %v1002, 4294901760
        %2221 = vmatmul.mubr.f32.gmra.mrb[0].mxu0 %v2220
        %v2222 = vpop.f32.mrb[0].mxu0
        %v2223 = vadd.f32 %v1958, %v2222
        %v2224 = vpop.f32.mrb[0].mxu0
        %v2225 = vadd.f32 %v1960, %v2224
        %2226 = vdwg.mxu0
        %v2227 = vand.u32 %v1005, 4294901760
        %2228 = vmatprep.subr.mxu0 %v2227
        %v2229 = vand.u32 %v1004, 4294901760
        %2230 = vmatpush1.msra.mxu0 %v2229
        %v2231 = vand.u32 %v1007, 4294901760
        %2232 = vmatprep.subr.mxu0 %v2231
        %v2233 = vand.u32 %v1006, 4294901760
        %2234 = vmatpush1.msra.mxu0 %v2233
        %v2235 = vand.u32 %v1009, 4294901760
        %2236 = vmatprep.subr.mxu0 %v2235
        %v2237 = vand.u32 %v1008, 4294901760
        %2238 = vmatpush1.msra.mxu0 %v2237
        %v2239 = vand.u32 %v1011, 4294901760
        %2240 = vmatprep.subr.mxu0 %v2239
        %v2241 = vand.u32 %v1010, 4294901760
        %2242 = vmatpush1.msra.mxu0 %v2241
        %v2243 = vand.u32 %v1013, 4294901760
        %2244 = vmatprep.subr.mxu0 %v2243
        %v2245 = vand.u32 %v1012, 4294901760
        %2246 = vmatpush1.msra.mxu0 %v2245
        %v2247 = vand.u32 %v1015, 4294901760
        %2248 = vmatprep.subr.mxu0 %v2247
        %v2249 = vand.u32 %v1014, 4294901760
        %2250 = vmatpush1.msra.mxu0 %v2249
        %v2251 = vand.u32 %v1017, 4294901760
        %2252 = vmatprep.subr.mxu0 %v2251
        %v2253 = vand.u32 %v1016, 4294901760
        %2254 = vmatpush1.msra.mxu0 %v2253
        %v2255 = vand.u32 %v1019, 4294901760
        %2256 = vmatprep.subr.mxu0 %v2255
        %v2257 = vand.u32 %v1018, 4294901760
        %2258 = vmatpush1.msra.mxu0 %v2257
        %v2259 = vand.u32 %v1021, 4294901760
        %2260 = vmatprep.subr.mxu0 %v2259
        %v2261 = vand.u32 %v1020, 4294901760
        %2262 = vmatpush1.msra.mxu0 %v2261
        %v2263 = vand.u32 %v1023, 4294901760
        %2264 = vmatprep.subr.mxu0 %v2263
        %v2265 = vand.u32 %v1022, 4294901760
        %2266 = vmatpush1.msra.mxu0 %v2265
        %v2267 = vand.u32 %v1025, 4294901760
        %2268 = vmatprep.subr.mxu0 %v2267
        %v2269 = vand.u32 %v1024, 4294901760
        %2270 = vmatpush1.msra.mxu0 %v2269
        %v2271 = vand.u32 %v1027, 4294901760
        %2272 = vmatprep.subr.mxu0 %v2271
        %v2273 = vand.u32 %v1026, 4294901760
        %2274 = vmatpush1.msra.mxu0 %v2273
        %v2275 = vand.u32 %v1029, 4294901760
        %2276 = vmatprep.subr.mxu0 %v2275
        %v2277 = vand.u32 %v1028, 4294901760
        %2278 = vmatpush1.msra.mxu0 %v2277
        %v2279 = vand.u32 %v1031, 4294901760
        %2280 = vmatprep.subr.mxu0 %v2279
        %v2281 = vand.u32 %v1030, 4294901760
        %2282 = vmatpush1.msra.mxu0 %v2281
        %v2283 = vand.u32 %v1033, 4294901760
        %2284 = vmatprep.subr.mxu0 %v2283
        %v2285 = vand.u32 %v1032, 4294901760
        %2286 = vmatpush1.msra.mxu0 %v2285
        %v2287 = vand.u32 %v1035, 4294901760
        %2288 = vmatprep.subr.mxu0 %v2287
        %v2289 = vand.u32 %v1034, 4294901760
        %2290 = vmatpush1.msra.mxu0 %v2289
        %v2291 = vand.u32 %v1037, 4294901760
        %2292 = vmatprep.subr.mxu0 %v2291
        %v2293 = vand.u32 %v1036, 4294901760
        %2294 = vmatpush1.msra.mxu0 %v2293
        %v2295 = vand.u32 %v1039, 4294901760
        %2296 = vmatprep.subr.mxu0 %v2295
        %v2297 = vand.u32 %v1038, 4294901760
        %2298 = vmatpush1.msra.mxu0 %v2297
        %v2299 = vand.u32 %v1041, 4294901760
        %2300 = vmatprep.subr.mxu0 %v2299
        %v2301 = vand.u32 %v1040, 4294901760
        %2302 = vmatpush1.msra.mxu0 %v2301
        %v2303 = vand.u32 %v1043, 4294901760
        %2304 = vmatprep.subr.mxu0 %v2303
        %v2305 = vand.u32 %v1042, 4294901760
        %2306 = vmatpush1.msra.mxu0 %v2305
        %v2307 = vand.u32 %v1045, 4294901760
        %2308 = vmatprep.subr.mxu0 %v2307
        %v2309 = vand.u32 %v1044, 4294901760
        %2310 = vmatpush1.msra.mxu0 %v2309
        %v2311 = vand.u32 %v1047, 4294901760
        %2312 = vmatprep.subr.mxu0 %v2311
        %v2313 = vand.u32 %v1046, 4294901760
        %2314 = vmatpush1.msra.mxu0 %v2313
        %v2315 = vand.u32 %v1049, 4294901760
        %2316 = vmatprep.subr.mxu0 %v2315
        %v2317 = vand.u32 %v1048, 4294901760
        %2318 = vmatpush1.msra.mxu0 %v2317
        %v2319 = vand.u32 %v1051, 4294901760
        %2320 = vmatprep.subr.mxu0 %v2319
        %v2321 = vand.u32 %v1050, 4294901760
        %2322 = vmatpush1.msra.mxu0 %v2321
        %v2323 = vand.u32 %v1053, 4294901760
        %2324 = vmatprep.subr.mxu0 %v2323
        %v2325 = vand.u32 %v1052, 4294901760
        %2326 = vmatpush1.msra.mxu0 %v2325
        %v2327 = vand.u32 %v1055, 4294901760
        %2328 = vmatprep.subr.mxu0 %v2327
        %v2329 = vand.u32 %v1054, 4294901760
        %2330 = vmatpush1.msra.mxu0 %v2329
        %v2331 = vand.u32 %v1057, 4294901760
        %2332 = vmatprep.subr.mxu0 %v2331
        %v2333 = vand.u32 %v1056, 4294901760
        %2334 = vmatpush1.msra.mxu0 %v2333
        %v2335 = vand.u32 %v1059, 4294901760
        %2336 = vmatprep.subr.mxu0 %v2335
        %v2337 = vand.u32 %v1058, 4294901760
        %2338 = vmatpush1.msra.mxu0 %v2337
        %v2339 = vand.u32 %v1061, 4294901760
        %2340 = vmatprep.subr.mxu0 %v2339
        %v2341 = vand.u32 %v1060, 4294901760
        %2342 = vmatpush1.msra.mxu0 %v2341
        %v2343 = vand.u32 %v1063, 4294901760
        %2344 = vmatprep.subr.mxu0 %v2343
        %v2345 = vand.u32 %v1062, 4294901760
        %2346 = vmatpush1.msra.mxu0 %v2345
        %v2347 = vand.u32 %v1065, 4294901760
        %2348 = vmatprep.subr.mxu0 %v2347
        %v2349 = vand.u32 %v1064, 4294901760
        %2350 = vmatpush1.msra.mxu0 %v2349
        %v2351 = vand.u32 %v1067, 4294901760
        %2352 = vmatprep.subr.mxu0 %v2351
        %v2353 = vand.u32 %v1066, 4294901760
        %2354 = vmatpush1.msra.mxu0 %v2353
        %v2355 = vand.u32 %v1003, 4294901760
        %2356 = vmatprep.mubr.f32.mxu0 %v2355
        %v2357 = vand.u32 %v1002, 4294901760
        %2358 = vmatmul.mubr.f32.gmra.mrb[0].mxu0 %v2357
        %v2359 = vpop.f32.mrb[0].mxu0
        %v2360 = vadd.f32 %v2223, %v2359
        %v2361 = vpop.f32.mrb[0].mxu0
        %v2362 = vadd.f32 %v2225, %v2361
        %2363 = vdwg.mxu0
        %v2364 = vmax.f32 %v2360, 0.0
        %v2365 = vmax.f32 %v2362, 0.0
        %v2366 = vld [vmem:[%s5] sm:$0xff]
        %v2367 = vld [vmem:[%s5 + $0x8] sm:$0xff]
        %v2368 = vld [vmem:[%s5 + $0x10] sm:$0xff]
        %v2369 = vld [vmem:[%s5 + $0x18] sm:$0xff]
        %v2370 = vld [vmem:[%s5 + $0x20] sm:$0xff]
        %v2371 = vld [vmem:[%s5 + $0x28] sm:$0xff]
        %v2372 = vld [vmem:[%s5 + $0x30] sm:$0xff]
        %v2373 = vld [vmem:[%s5 + $0x38] sm:$0xff]
        %v2374 = vld [vmem:[%s5 + $0x40] sm:$0xff]
        %v2375 = vld [vmem:[%s5 + $0x48] sm:$0xff]
        %v2376 = vld [vmem:[%s5 + $0x50] sm:$0xff]
        %v2377 = vld [vmem:[%s5 + $0x58] sm:$0xff]
        %v2378 = vld [vmem:[%s5 + $0x60] sm:$0xff]
        %v2379 = vld [vmem:[%s5 + $0x68] sm:$0xff]
        %v2380 = vld [vmem:[%s5 + $0x70] sm:$0xff]
        %v2381 = vld [vmem:[%s5 + $0x78] sm:$0xff]
        %v2382 = vld [vmem:[%s5 + $0x80] sm:$0xff]
        %v2383 = vld [vmem:[%s5 + $0x88] sm:$0xff]
        %v2384 = vld [vmem:[%s5 + $0x90] sm:$0xff]
        %v2385 = vld [vmem:[%s5 + $0x98] sm:$0xff]
        %v2386 = vld [vmem:[%s5 + $0xa0] sm:$0xff]
        %v2387 = vld [vmem:[%s5 + $0xa8] sm:$0xff]
        %v2388 = vld [vmem:[%s5 + $0xb0] sm:$0xff]
        %v2389 = vld [vmem:[%s5 + $0xb8] sm:$0xff]
        %v2390 = vld [vmem:[%s5 + $0xc0] sm:$0xff]
        %v2391 = vld [vmem:[%s5 + $0xc8] sm:$0xff]
        %v2392 = vld [vmem:[%s5 + $0xd0] sm:$0xff]
        %v2393 = vld [vmem:[%s5 + $0xd8] sm:$0xff]
        %v2394 = vld [vmem:[%s5 + $0xe0] sm:$0xff]
        %v2395 = vld [vmem:[%s5 + $0xe8] sm:$0xff]
        %v2396 = vld [vmem:[%s5 + $0xf0] sm:$0xff]
        %v2397 = vld [vmem:[%s5 + $0xf8] sm:$0xff]
        %v2398 = vld [vmem:[%s6] sm:$0x1]
        %v2400 = vlaneseq
        %v2401 = vshrl.u32 %v2400, 7
        %v2402 = vsub.s32 0, %v2401
        %v2403 = vrot.slane %v2398, %v2402
        %2405 = vmatprep.subr.mxu0 0.0
        %v2406 = vand.u32 %v2366, 4294901760
        %2407 = vmatpush1.msra.mxu0 %v2406
        %2408 = vmatprep.subr.mxu0 0.0
        %v2409 = vand.u32 %v2367, 4294901760
        %2410 = vmatpush1.msra.mxu0 %v2409
        %2411 = vmatprep.subr.mxu0 0.0
        %v2412 = vand.u32 %v2368, 4294901760
        %2413 = vmatpush1.msra.mxu0 %v2412
        %2414 = vmatprep.subr.mxu0 0.0
        %v2415 = vand.u32 %v2369, 4294901760
        %2416 = vmatpush1.msra.mxu0 %v2415
        %2417 = vmatprep.subr.mxu0 0.0
        %v2418 = vand.u32 %v2370, 4294901760
        %2419 = vmatpush1.msra.mxu0 %v2418
        %2420 = vmatprep.subr.mxu0 0.0
        %v2421 = vand.u32 %v2371, 4294901760
        %2422 = vmatpush1.msra.mxu0 %v2421
        %2423 = vmatprep.subr.mxu0 0.0
        %v2424 = vand.u32 %v2372, 4294901760
        %2425 = vmatpush1.msra.mxu0 %v2424
        %2426 = vmatprep.subr.mxu0 0.0
        %v2427 = vand.u32 %v2373, 4294901760
        %2428 = vmatpush1.msra.mxu0 %v2427
        %2429 = vmatprep.subr.mxu0 0.0
        %v2430 = vand.u32 %v2374, 4294901760
        %2431 = vmatpush1.msra.mxu0 %v2430
        %2432 = vmatprep.subr.mxu0 0.0
        %v2433 = vand.u32 %v2375, 4294901760
        %2434 = vmatpush1.msra.mxu0 %v2433
        %2435 = vmatprep.subr.mxu0 0.0
        %v2436 = vand.u32 %v2376, 4294901760
        %2437 = vmatpush1.msra.mxu0 %v2436
        %2438 = vmatprep.subr.mxu0 0.0
        %v2439 = vand.u32 %v2377, 4294901760
        %2440 = vmatpush1.msra.mxu0 %v2439
        %2441 = vmatprep.subr.mxu0 0.0
        %v2442 = vand.u32 %v2378, 4294901760
        %2443 = vmatpush1.msra.mxu0 %v2442
        %2444 = vmatprep.subr.mxu0 0.0
        %v2445 = vand.u32 %v2379, 4294901760
        %2446 = vmatpush1.msra.mxu0 %v2445
        %2447 = vmatprep.subr.mxu0 0.0
        %v2448 = vand.u32 %v2380, 4294901760
        %2449 = vmatpush1.msra.mxu0 %v2448
        %2450 = vmatprep.subr.mxu0 0.0
        %v2451 = vand.u32 %v2381, 4294901760
        %2452 = vmatpush1.msra.mxu0 %v2451
        %2453 = vmatprep.subr.mxu0 0.0
        %v2454 = vand.u32 %v2382, 4294901760
        %2455 = vmatpush1.msra.mxu0 %v2454
        %2456 = vmatprep.subr.mxu0 0.0
        %v2457 = vand.u32 %v2383, 4294901760
        %2458 = vmatpush1.msra.mxu0 %v2457
        %2459 = vmatprep.subr.mxu0 0.0
        %v2460 = vand.u32 %v2384, 4294901760
        %2461 = vmatpush1.msra.mxu0 %v2460
        %2462 = vmatprep.subr.mxu0 0.0
        %v2463 = vand.u32 %v2385, 4294901760
        %2464 = vmatpush1.msra.mxu0 %v2463
        %2465 = vmatprep.subr.mxu0 0.0
        %v2466 = vand.u32 %v2386, 4294901760
        %2467 = vmatpush1.msra.mxu0 %v2466
        %2468 = vmatprep.subr.mxu0 0.0
        %v2469 = vand.u32 %v2387, 4294901760
        %2470 = vmatpush1.msra.mxu0 %v2469
        %2471 = vmatprep.subr.mxu0 0.0
        %v2472 = vand.u32 %v2388, 4294901760
        %2473 = vmatpush1.msra.mxu0 %v2472
        %2474 = vmatprep.subr.mxu0 0.0
        %v2475 = vand.u32 %v2389, 4294901760
        %2476 = vmatpush1.msra.mxu0 %v2475
        %2477 = vmatprep.subr.mxu0 0.0
        %v2478 = vand.u32 %v2390, 4294901760
        %2479 = vmatpush1.msra.mxu0 %v2478
        %2480 = vmatprep.subr.mxu0 0.0
        %v2481 = vand.u32 %v2391, 4294901760
        %2482 = vmatpush1.msra.mxu0 %v2481
        %2483 = vmatprep.subr.mxu0 0.0
        %v2484 = vand.u32 %v2392, 4294901760
        %2485 = vmatpush1.msra.mxu0 %v2484
        %2486 = vmatprep.subr.mxu0 0.0
        %v2487 = vand.u32 %v2393, 4294901760
        %2488 = vmatpush1.msra.mxu0 %v2487
        %2489 = vmatprep.subr.mxu0 0.0
        %v2490 = vand.u32 %v2394, 4294901760
        %2491 = vmatpush1.msra.mxu0 %v2490
        %2492 = vmatprep.subr.mxu0 0.0
        %v2493 = vand.u32 %v2395, 4294901760
        %2494 = vmatpush1.msra.mxu0 %v2493
        %2495 = vmatprep.subr.mxu0 0.0
        %v2496 = vand.u32 %v2396, 4294901760
        %2497 = vmatpush1.msra.mxu0 %v2496
        %2498 = vmatprep.subr.mxu0 0.0
        %v2499 = vand.u32 %v2397, 4294901760
        %2500 = vmatpush1.msra.mxu0 %v2499
        %v2501 = vand.u32 %v2365, 4294901760
        %v2502 = vsub.f32 %v2365, %v2501
        %v2503 = vand.u32 %v2502, 4294901760
        %v2504 = vsub.f32 %v2502, %v2503
        %v2505 = vand.u32 %v2504, 4294901760
        %2506 = vmatprep.mubr.f32.mxu0 %v2505
        %v2507 = vand.u32 %v2364, 4294901760
        %v2508 = vsub.f32 %v2364, %v2507
        %v2509 = vand.u32 %v2508, 4294901760
        %v2510 = vsub.f32 %v2508, %v2509
        %v2511 = vand.u32 %v2510, 4294901760
        %2512 = vmatmul.mubr.f32.gmra.mrb[0].mxu0 %v2511
        %v2513 = vpop.f32.mrb[0].mxu0
        %v2514 = vadd.f32 %v2403, %v2513
        %v2515 = vpop.f32.mrb[0].mxu0
        %2516 = vdwg.mxu0
        %2517 = vmatprep.subr.mxu0 0.0
        %v2518 = vand.u32 %v2366, 4294901760
        %v2519 = vsub.f32 %v2366, %v2518
        %v2520 = vand.u32 %v2519, 4294901760
        %v2521 = vsub.f32 %v2519, %v2520
        %v2522 = vand.u32 %v2521, 4294901760
        %2523 = vmatpush1.msra.mxu0 %v2522
        %2524 = vmatprep.subr.mxu0 0.0
        %v2525 = vand.u32 %v2367, 4294901760
        %v2526 = vsub.f32 %v2367, %v2525
        %v2527 = vand.u32 %v2526, 4294901760
        %v2528 = vsub.f32 %v2526, %v2527
        %v2529 = vand.u32 %v2528, 4294901760
        %2530 = vmatpush1.msra.mxu0 %v2529
        %2531 = vmatprep.subr.mxu0 0.0
        %v2532 = vand.u32 %v2368, 4294901760
        %v2533 = vsub.f32 %v2368, %v2532
        %v2534 = vand.u32 %v2533, 4294901760
        %v2535 = vsub.f32 %v2533, %v2534
        %v2536 = vand.u32 %v2535, 4294901760
        %2537 = vmatpush1.msra.mxu0 %v2536
        %2538 = vmatprep.subr.mxu0 0.0
        %v2539 = vand.u32 %v2369, 4294901760
        %v2540 = vsub.f32 %v2369, %v2539
        %v2541 = vand.u32 %v2540, 4294901760
        %v2542 = vsub.f32 %v2540, %v2541
        %v2543 = vand.u32 %v2542, 4294901760
        %2544 = vmatpush1.msra.mxu0 %v2543
        %2545 = vmatprep.subr.mxu0 0.0
        %v2546 = vand.u32 %v2370, 4294901760
        %v2547 = vsub.f32 %v2370, %v2546
        %v2548 = vand.u32 %v2547, 4294901760
        %v2549 = vsub.f32 %v2547, %v2548
        %v2550 = vand.u32 %v2549, 4294901760
        %2551 = vmatpush1.msra.mxu0 %v2550
        %2552 = vmatprep.subr.mxu0 0.0
        %v2553 = vand.u32 %v2371, 4294901760
        %v2554 = vsub.f32 %v2371, %v2553
        %v2555 = vand.u32 %v2554, 4294901760
        %v2556 = vsub.f32 %v2554, %v2555
        %v2557 = vand.u32 %v2556, 4294901760
        %2558 = vmatpush1.msra.mxu0 %v2557
        %2559 = vmatprep.subr.mxu0 0.0
        %v2560 = vand.u32 %v2372, 4294901760
        %v2561 = vsub.f32 %v2372, %v2560
        %v2562 = vand.u32 %v2561, 4294901760
        %v2563 = vsub.f32 %v2561, %v2562
        %v2564 = vand.u32 %v2563, 4294901760
        %2565 = vmatpush1.msra.mxu0 %v2564
        %2566 = vmatprep.subr.mxu0 0.0
        %v2567 = vand.u32 %v2373, 4294901760
        %v2568 = vsub.f32 %v2373, %v2567
        %v2569 = vand.u32 %v2568, 4294901760
        %v2570 = vsub.f32 %v2568, %v2569
        %v2571 = vand.u32 %v2570, 4294901760
        %2572 = vmatpush1.msra.mxu0 %v2571
        %2573 = vmatprep.subr.mxu0 0.0
        %v2574 = vand.u32 %v2374, 4294901760
        %v2575 = vsub.f32 %v2374, %v2574
        %v2576 = vand.u32 %v2575, 4294901760
        %v2577 = vsub.f32 %v2575, %v2576
        %v2578 = vand.u32 %v2577, 4294901760
        %2579 = vmatpush1.msra.mxu0 %v2578
        %2580 = vmatprep.subr.mxu0 0.0
        %v2581 = vand.u32 %v2375, 4294901760
        %v2582 = vsub.f32 %v2375, %v2581
        %v2583 = vand.u32 %v2582, 4294901760
        %v2584 = vsub.f32 %v2582, %v2583
        %v2585 = vand.u32 %v2584, 4294901760
        %2586 = vmatpush1.msra.mxu0 %v2585
        %2587 = vmatprep.subr.mxu0 0.0
        %v2588 = vand.u32 %v2376, 4294901760
        %v2589 = vsub.f32 %v2376, %v2588
        %v2590 = vand.u32 %v2589, 4294901760
        %v2591 = vsub.f32 %v2589, %v2590
        %v2592 = vand.u32 %v2591, 4294901760
        %2593 = vmatpush1.msra.mxu0 %v2592
        %2594 = vmatprep.subr.mxu0 0.0
        %v2595 = vand.u32 %v2377, 4294901760
        %v2596 = vsub.f32 %v2377, %v2595
        %v2597 = vand.u32 %v2596, 4294901760
        %v2598 = vsub.f32 %v2596, %v2597
        %v2599 = vand.u32 %v2598, 4294901760
        %2600 = vmatpush1.msra.mxu0 %v2599
        %2601 = vmatprep.subr.mxu0 0.0
        %v2602 = vand.u32 %v2378, 4294901760
        %v2603 = vsub.f32 %v2378, %v2602
        %v2604 = vand.u32 %v2603, 4294901760
        %v2605 = vsub.f32 %v2603, %v2604
        %v2606 = vand.u32 %v2605, 4294901760
        %2607 = vmatpush1.msra.mxu0 %v2606
        %2608 = vmatprep.subr.mxu0 0.0
        %v2609 = vand.u32 %v2379, 4294901760
        %v2610 = vsub.f32 %v2379, %v2609
        %v2611 = vand.u32 %v2610, 4294901760
        %v2612 = vsub.f32 %v2610, %v2611
        %v2613 = vand.u32 %v2612, 4294901760
        %2614 = vmatpush1.msra.mxu0 %v2613
        %2615 = vmatprep.subr.mxu0 0.0
        %v2616 = vand.u32 %v2380, 4294901760
        %v2617 = vsub.f32 %v2380, %v2616
        %v2618 = vand.u32 %v2617, 4294901760
        %v2619 = vsub.f32 %v2617, %v2618
        %v2620 = vand.u32 %v2619, 4294901760
        %2621 = vmatpush1.msra.mxu0 %v2620
        %2622 = vmatprep.subr.mxu0 0.0
        %v2623 = vand.u32 %v2381, 4294901760
        %v2624 = vsub.f32 %v2381, %v2623
        %v2625 = vand.u32 %v2624, 4294901760
        %v2626 = vsub.f32 %v2624, %v2625
        %v2627 = vand.u32 %v2626, 4294901760
        %2628 = vmatpush1.msra.mxu0 %v2627
        %2629 = vmatprep.subr.mxu0 0.0
        %v2630 = vand.u32 %v2382, 4294901760
        %v2631 = vsub.f32 %v2382, %v2630
        %v2632 = vand.u32 %v2631, 4294901760
        %v2633 = vsub.f32 %v2631, %v2632
        %v2634 = vand.u32 %v2633, 4294901760
        %2635 = vmatpush1.msra.mxu0 %v2634
        %2636 = vmatprep.subr.mxu0 0.0
        %v2637 = vand.u32 %v2383, 4294901760
        %v2638 = vsub.f32 %v2383, %v2637
        %v2639 = vand.u32 %v2638, 4294901760
        %v2640 = vsub.f32 %v2638, %v2639
        %v2641 = vand.u32 %v2640, 4294901760
        %2642 = vmatpush1.msra.mxu0 %v2641
        %2643 = vmatprep.subr.mxu0 0.0
        %v2644 = vand.u32 %v2384, 4294901760
        %v2645 = vsub.f32 %v2384, %v2644
        %v2646 = vand.u32 %v2645, 4294901760
        %v2647 = vsub.f32 %v2645, %v2646
        %v2648 = vand.u32 %v2647, 4294901760
        %2649 = vmatpush1.msra.mxu0 %v2648
        %2650 = vmatprep.subr.mxu0 0.0
        %v2651 = vand.u32 %v2385, 4294901760
        %v2652 = vsub.f32 %v2385, %v2651
        %v2653 = vand.u32 %v2652, 4294901760
        %v2654 = vsub.f32 %v2652, %v2653
        %v2655 = vand.u32 %v2654, 4294901760
        %2656 = vmatpush1.msra.mxu0 %v2655
        %2657 = vmatprep.subr.mxu0 0.0
        %v2658 = vand.u32 %v2386, 4294901760
        %v2659 = vsub.f32 %v2386, %v2658
        %v2660 = vand.u32 %v2659, 4294901760
        %v2661 = vsub.f32 %v2659, %v2660
        %v2662 = vand.u32 %v2661, 4294901760
        %2663 = vmatpush1.msra.mxu0 %v2662
        %2664 = vmatprep.subr.mxu0 0.0
        %v2665 = vand.u32 %v2387, 4294901760
        %v2666 = vsub.f32 %v2387, %v2665
        %v2667 = vand.u32 %v2666, 4294901760
        %v2668 = vsub.f32 %v2666, %v2667
        %v2669 = vand.u32 %v2668, 4294901760
        %2670 = vmatpush1.msra.mxu0 %v2669
        %2671 = vmatprep.subr.mxu0 0.0
        %v2672 = vand.u32 %v2388, 4294901760
        %v2673 = vsub.f32 %v2388, %v2672
        %v2674 = vand.u32 %v2673, 4294901760
        %v2675 = vsub.f32 %v2673, %v2674
        %v2676 = vand.u32 %v2675, 4294901760
        %2677 = vmatpush1.msra.mxu0 %v2676
        %2678 = vmatprep.subr.mxu0 0.0
        %v2679 = vand.u32 %v2389, 4294901760
        %v2680 = vsub.f32 %v2389, %v2679
        %v2681 = vand.u32 %v2680, 4294901760
        %v2682 = vsub.f32 %v2680, %v2681
        %v2683 = vand.u32 %v2682, 4294901760
        %2684 = vmatpush1.msra.mxu0 %v2683
        %2685 = vmatprep.subr.mxu0 0.0
        %v2686 = vand.u32 %v2390, 4294901760
        %v2687 = vsub.f32 %v2390, %v2686
        %v2688 = vand.u32 %v2687, 4294901760
        %v2689 = vsub.f32 %v2687, %v2688
        %v2690 = vand.u32 %v2689, 4294901760
        %2691 = vmatpush1.msra.mxu0 %v2690
        %2692 = vmatprep.subr.mxu0 0.0
        %v2693 = vand.u32 %v2391, 4294901760
        %v2694 = vsub.f32 %v2391, %v2693
        %v2695 = vand.u32 %v2694, 4294901760
        %v2696 = vsub.f32 %v2694, %v2695
        %v2697 = vand.u32 %v2696, 4294901760
        %2698 = vmatpush1.msra.mxu0 %v2697
        %2699 = vmatprep.subr.mxu0 0.0
        %v2700 = vand.u32 %v2392, 4294901760
        %v2701 = vsub.f32 %v2392, %v2700
        %v2702 = vand.u32 %v2701, 4294901760
        %v2703 = vsub.f32 %v2701, %v2702
        %v2704 = vand.u32 %v2703, 4294901760
        %2705 = vmatpush1.msra.mxu0 %v2704
        %2706 = vmatprep.subr.mxu0 0.0
        %v2707 = vand.u32 %v2393, 4294901760
        %v2708 = vsub.f32 %v2393, %v2707
        %v2709 = vand.u32 %v2708, 4294901760
        %v2710 = vsub.f32 %v2708, %v2709
        %v2711 = vand.u32 %v2710, 4294901760
        %2712 = vmatpush1.msra.mxu0 %v2711
        %2713 = vmatprep.subr.mxu0 0.0
        %v2714 = vand.u32 %v2394, 4294901760
        %v2715 = vsub.f32 %v2394, %v2714
        %v2716 = vand.u32 %v2715, 4294901760
        %v2717 = vsub.f32 %v2715, %v2716
        %v2718 = vand.u32 %v2717, 4294901760
        %2719 = vmatpush1.msra.mxu0 %v2718
        %2720 = vmatprep.subr.mxu0 0.0
        %v2721 = vand.u32 %v2395, 4294901760
        %v2722 = vsub.f32 %v2395, %v2721
        %v2723 = vand.u32 %v2722, 4294901760
        %v2724 = vsub.f32 %v2722, %v2723
        %v2725 = vand.u32 %v2724, 4294901760
        %2726 = vmatpush1.msra.mxu0 %v2725
        %2727 = vmatprep.subr.mxu0 0.0
        %v2728 = vand.u32 %v2396, 4294901760
        %v2729 = vsub.f32 %v2396, %v2728
        %v2730 = vand.u32 %v2729, 4294901760
        %v2731 = vsub.f32 %v2729, %v2730
        %v2732 = vand.u32 %v2731, 4294901760
        %2733 = vmatpush1.msra.mxu0 %v2732
        %2734 = vmatprep.subr.mxu0 0.0
        %v2735 = vand.u32 %v2397, 4294901760
        %v2736 = vsub.f32 %v2397, %v2735
        %v2737 = vand.u32 %v2736, 4294901760
        %v2738 = vsub.f32 %v2736, %v2737
        %v2739 = vand.u32 %v2738, 4294901760
        %2740 = vmatpush1.msra.mxu0 %v2739
        %v2741 = vand.u32 %v2365, 4294901760
        %2742 = vmatprep.mubr.f32.mxu0 %v2741
        %v2743 = vand.u32 %v2364, 4294901760
        %2744 = vmatmul.mubr.f32.gmra.mrb[0].mxu0 %v2743
        %v2745 = vpop.f32.mrb[0].mxu0
        %v2746 = vadd.f32 %v2514, %v2745
        %v2747 = vpop.f32.mrb[0].mxu0
        %2748 = vdwg.mxu0
        %2749 = vmatprep.subr.mxu0 0.0
        %v2750 = vand.u32 %v2366, 4294901760
        %v2751 = vsub.f32 %v2366, %v2750
        %2752 = vmatpush1.msra.mxu0 %v2751
        %2753 = vmatprep.subr.mxu0 0.0
        %v2754 = vand.u32 %v2367, 4294901760
        %v2755 = vsub.f32 %v2367, %v2754
        %2756 = vmatpush1.msra.mxu0 %v2755
        %2757 = vmatprep.subr.mxu0 0.0
        %v2758 = vand.u32 %v2368, 4294901760
        %v2759 = vsub.f32 %v2368, %v2758
        %2760 = vmatpush1.msra.mxu0 %v2759
        %2761 = vmatprep.subr.mxu0 0.0
        %v2762 = vand.u32 %v2369, 4294901760
        %v2763 = vsub.f32 %v2369, %v2762
        %2764 = vmatpush1.msra.mxu0 %v2763
        %2765 = vmatprep.subr.mxu0 0.0
        %v2766 = vand.u32 %v2370, 4294901760
        %v2767 = vsub.f32 %v2370, %v2766
        %2768 = vmatpush1.msra.mxu0 %v2767
        %2769 = vmatprep.subr.mxu0 0.0
        %v2770 = vand.u32 %v2371, 4294901760
        %v2771 = vsub.f32 %v2371, %v2770
        %2772 = vmatpush1.msra.mxu0 %v2771
        %2773 = vmatprep.subr.mxu0 0.0
        %v2774 = vand.u32 %v2372, 4294901760
        %v2775 = vsub.f32 %v2372, %v2774
        %2776 = vmatpush1.msra.mxu0 %v2775
        %2777 = vmatprep.subr.mxu0 0.0
        %v2778 = vand.u32 %v2373, 4294901760
        %v2779 = vsub.f32 %v2373, %v2778
        %2780 = vmatpush1.msra.mxu0 %v2779
        %2781 = vmatprep.subr.mxu0 0.0
        %v2782 = vand.u32 %v2374, 4294901760
        %v2783 = vsub.f32 %v2374, %v2782
        %2784 = vmatpush1.msra.mxu0 %v2783
        %2785 = vmatprep.subr.mxu0 0.0
        %v2786 = vand.u32 %v2375, 4294901760
        %v2787 = vsub.f32 %v2375, %v2786
        %2788 = vmatpush1.msra.mxu0 %v2787
        %2789 = vmatprep.subr.mxu0 0.0
        %v2790 = vand.u32 %v2376, 4294901760
        %v2791 = vsub.f32 %v2376, %v2790
        %2792 = vmatpush1.msra.mxu0 %v2791
        %2793 = vmatprep.subr.mxu0 0.0
        %v2794 = vand.u32 %v2377, 4294901760
        %v2795 = vsub.f32 %v2377, %v2794
        %2796 = vmatpush1.msra.mxu0 %v2795
        %2797 = vmatprep.subr.mxu0 0.0
        %v2798 = vand.u32 %v2378, 4294901760
        %v2799 = vsub.f32 %v2378, %v2798
        %2800 = vmatpush1.msra.mxu0 %v2799
        %2801 = vmatprep.subr.mxu0 0.0
        %v2802 = vand.u32 %v2379, 4294901760
        %v2803 = vsub.f32 %v2379, %v2802
        %2804 = vmatpush1.msra.mxu0 %v2803
        %2805 = vmatprep.subr.mxu0 0.0
        %v2806 = vand.u32 %v2380, 4294901760
        %v2807 = vsub.f32 %v2380, %v2806
        %2808 = vmatpush1.msra.mxu0 %v2807
        %2809 = vmatprep.subr.mxu0 0.0
        %v2810 = vand.u32 %v2381, 4294901760
        %v2811 = vsub.f32 %v2381, %v2810
        %2812 = vmatpush1.msra.mxu0 %v2811
        %2813 = vmatprep.subr.mxu0 0.0
        %v2814 = vand.u32 %v2382, 4294901760
        %v2815 = vsub.f32 %v2382, %v2814
        %2816 = vmatpush1.msra.mxu0 %v2815
        %2817 = vmatprep.subr.mxu0 0.0
        %v2818 = vand.u32 %v2383, 4294901760
        %v2819 = vsub.f32 %v2383, %v2818
        %2820 = vmatpush1.msra.mxu0 %v2819
        %2821 = vmatprep.subr.mxu0 0.0
        %v2822 = vand.u32 %v2384, 4294901760
        %v2823 = vsub.f32 %v2384, %v2822
        %2824 = vmatpush1.msra.mxu0 %v2823
        %2825 = vmatprep.subr.mxu0 0.0
        %v2826 = vand.u32 %v2385, 4294901760
        %v2827 = vsub.f32 %v2385, %v2826
        %2828 = vmatpush1.msra.mxu0 %v2827
        %2829 = vmatprep.subr.mxu0 0.0
        %v2830 = vand.u32 %v2386, 4294901760
        %v2831 = vsub.f32 %v2386, %v2830
        %2832 = vmatpush1.msra.mxu0 %v2831
        %2833 = vmatprep.subr.mxu0 0.0
        %v2834 = vand.u32 %v2387, 4294901760
        %v2835 = vsub.f32 %v2387, %v2834
        %2836 = vmatpush1.msra.mxu0 %v2835
        %2837 = vmatprep.subr.mxu0 0.0
        %v2838 = vand.u32 %v2388, 4294901760
        %v2839 = vsub.f32 %v2388, %v2838
        %2840 = vmatpush1.msra.mxu0 %v2839
        %2841 = vmatprep.subr.mxu0 0.0
        %v2842 = vand.u32 %v2389, 4294901760
        %v2843 = vsub.f32 %v2389, %v2842
        %2844 = vmatpush1.msra.mxu0 %v2843
        %2845 = vmatprep.subr.mxu0 0.0
        %v2846 = vand.u32 %v2390, 4294901760
        %v2847 = vsub.f32 %v2390, %v2846
        %2848 = vmatpush1.msra.mxu0 %v2847
        %2849 = vmatprep.subr.mxu0 0.0
        %v2850 = vand.u32 %v2391, 4294901760
        %v2851 = vsub.f32 %v2391, %v2850
        %2852 = vmatpush1.msra.mxu0 %v2851
        %2853 = vmatprep.subr.mxu0 0.0
        %v2854 = vand.u32 %v2392, 4294901760
        %v2855 = vsub.f32 %v2392, %v2854
        %2856 = vmatpush1.msra.mxu0 %v2855
        %2857 = vmatprep.subr.mxu0 0.0
        %v2858 = vand.u32 %v2393, 4294901760
        %v2859 = vsub.f32 %v2393, %v2858
        %2860 = vmatpush1.msra.mxu0 %v2859
        %2861 = vmatprep.subr.mxu0 0.0
        %v2862 = vand.u32 %v2394, 4294901760
        %v2863 = vsub.f32 %v2394, %v2862
        %2864 = vmatpush1.msra.mxu0 %v2863
        %2865 = vmatprep.subr.mxu0 0.0
        %v2866 = vand.u32 %v2395, 4294901760
        %v2867 = vsub.f32 %v2395, %v2866
        %2868 = vmatpush1.msra.mxu0 %v2867
        %2869 = vmatprep.subr.mxu0 0.0
        %v2870 = vand.u32 %v2396, 4294901760
        %v2871 = vsub.f32 %v2396, %v2870
        %2872 = vmatpush1.msra.mxu0 %v2871
        %2873 = vmatprep.subr.mxu0 0.0
        %v2874 = vand.u32 %v2397, 4294901760
        %v2875 = vsub.f32 %v2397, %v2874
        %2876 = vmatpush1.msra.mxu0 %v2875
        %v2877 = vand.u32 %v2365, 4294901760
        %v2878 = vsub.f32 %v2365, %v2877
        %2879 = vmatprep.mubr.f32.mxu0 %v2878
        %v2880 = vand.u32 %v2364, 4294901760
        %v2881 = vsub.f32 %v2364, %v2880
        %2882 = vmatmul.mubr.f32.gmra.mrb[0].mxu0 %v2881
        %v2883 = vpop.f32.mrb[0].mxu0
        %v2884 = vadd.f32 %v2746, %v2883
        %v2885 = vpop.f32.mrb[0].mxu0
        %2886 = vdwg.mxu0
        %2887 = vmatprep.subr.mxu0 0.0
        %v2888 = vand.u32 %v2366, 4294901760
        %2889 = vmatpush1.msra.mxu0 %v2888
        %2890 = vmatprep.subr.mxu0 0.0
        %v2891 = vand.u32 %v2367, 4294901760
        %2892 = vmatpush1.msra.mxu0 %v2891
        %2893 = vmatprep.subr.mxu0 0.0
        %v2894 = vand.u32 %v2368, 4294901760
        %2895 = vmatpush1.msra.mxu0 %v2894
        %2896 = vmatprep.subr.mxu0 0.0
        %v2897 = vand.u32 %v2369, 4294901760
        %2898 = vmatpush1.msra.mxu0 %v2897
        %2899 = vmatprep.subr.mxu0 0.0
        %v2900 = vand.u32 %v2370, 4294901760
        %2901 = vmatpush1.msra.mxu0 %v2900
        %2902 = vmatprep.subr.mxu0 0.0
        %v2903 = vand.u32 %v2371, 4294901760
        %2904 = vmatpush1.msra.mxu0 %v2903
        %2905 = vmatprep.subr.mxu0 0.0
        %v2906 = vand.u32 %v2372, 4294901760
        %2907 = vmatpush1.msra.mxu0 %v2906
        %2908 = vmatprep.subr.mxu0 0.0
        %v2909 = vand.u32 %v2373, 4294901760
        %2910 = vmatpush1.msra.mxu0 %v2909
        %2911 = vmatprep.subr.mxu0 0.0
        %v2912 = vand.u32 %v2374, 4294901760
        %2913 = vmatpush1.msra.mxu0 %v2912
        %2914 = vmatprep.subr.mxu0 0.0
        %v2915 = vand.u32 %v2375, 4294901760
        %2916 = vmatpush1.msra.mxu0 %v2915
        %2917 = vmatprep.subr.mxu0 0.0
        %v2918 = vand.u32 %v2376, 4294901760
        %2919 = vmatpush1.msra.mxu0 %v2918
        %2920 = vmatprep.subr.mxu0 0.0
        %v2921 = vand.u32 %v2377, 4294901760
        %2922 = vmatpush1.msra.mxu0 %v2921
        %2923 = vmatprep.subr.mxu0 0.0
        %v2924 = vand.u32 %v2378, 4294901760
        %2925 = vmatpush1.msra.mxu0 %v2924
        %2926 = vmatprep.subr.mxu0 0.0
        %v2927 = vand.u32 %v2379, 4294901760
        %2928 = vmatpush1.msra.mxu0 %v2927
        %2929 = vmatprep.subr.mxu0 0.0
        %v2930 = vand.u32 %v2380, 4294901760
        %2931 = vmatpush1.msra.mxu0 %v2930
        %2932 = vmatprep.subr.mxu0 0.0
        %v2933 = vand.u32 %v2381, 4294901760
        %2934 = vmatpush1.msra.mxu0 %v2933
        %2935 = vmatprep.subr.mxu0 0.0
        %v2936 = vand.u32 %v2382, 4294901760
        %2937 = vmatpush1.msra.mxu0 %v2936
        %2938 = vmatprep.subr.mxu0 0.0
        %v2939 = vand.u32 %v2383, 4294901760
        %2940 = vmatpush1.msra.mxu0 %v2939
        %2941 = vmatprep.subr.mxu0 0.0
        %v2942 = vand.u32 %v2384, 4294901760
        %2943 = vmatpush1.msra.mxu0 %v2942
        %2944 = vmatprep.subr.mxu0 0.0
        %v2945 = vand.u32 %v2385, 4294901760
        %2946 = vmatpush1.msra.mxu0 %v2945
        %2947 = vmatprep.subr.mxu0 0.0
        %v2948 = vand.u32 %v2386, 4294901760
        %2949 = vmatpush1.msra.mxu0 %v2948
        %2950 = vmatprep.subr.mxu0 0.0
        %v2951 = vand.u32 %v2387, 4294901760
        %2952 = vmatpush1.msra.mxu0 %v2951
        %2953 = vmatprep.subr.mxu0 0.0
        %v2954 = vand.u32 %v2388, 4294901760
        %2955 = vmatpush1.msra.mxu0 %v2954
        %2956 = vmatprep.subr.mxu0 0.0
        %v2957 = vand.u32 %v2389, 4294901760
        %2958 = vmatpush1.msra.mxu0 %v2957
        %2959 = vmatprep.subr.mxu0 0.0
        %v2960 = vand.u32 %v2390, 4294901760
        %2961 = vmatpush1.msra.mxu0 %v2960
        %2962 = vmatprep.subr.mxu0 0.0
        %v2963 = vand.u32 %v2391, 4294901760
        %2964 = vmatpush1.msra.mxu0 %v2963
        %2965 = vmatprep.subr.mxu0 0.0
        %v2966 = vand.u32 %v2392, 4294901760
        %2967 = vmatpush1.msra.mxu0 %v2966
        %2968 = vmatprep.subr.mxu0 0.0
        %v2969 = vand.u32 %v2393, 4294901760
        %2970 = vmatpush1.msra.mxu0 %v2969
        %2971 = vmatprep.subr.mxu0 0.0
        %v2972 = vand.u32 %v2394, 4294901760
        %2973 = vmatpush1.msra.mxu0 %v2972
        %2974 = vmatprep.subr.mxu0 0.0
        %v2975 = vand.u32 %v2395, 4294901760
        %2976 = vmatpush1.msra.mxu0 %v2975
        %2977 = vmatprep.subr.mxu0 0.0
        %v2978 = vand.u32 %v2396, 4294901760
        %2979 = vmatpush1.msra.mxu0 %v2978
        %2980 = vmatprep.subr.mxu0 0.0
        %v2981 = vand.u32 %v2397, 4294901760
        %2982 = vmatpush1.msra.mxu0 %v2981
        %v2983 = vand.u32 %v2365, 4294901760
        %v2984 = vsub.f32 %v2365, %v2983
        %v2985 = vand.u32 %v2984, 4294901760
        %2986 = vmatprep.mubr.f32.mxu0 %v2985
        %v2987 = vand.u32 %v2364, 4294901760
        %v2988 = vsub.f32 %v2364, %v2987
        %v2989 = vand.u32 %v2988, 4294901760
        %2990 = vmatmul.mubr.f32.gmra.mrb[0].mxu0 %v2989
        %v2991 = vpop.f32.mrb[0].mxu0
        %v2992 = vadd.f32 %v2884, %v2991
        %v2993 = vpop.f32.mrb[0].mxu0
        %2994 = vdwg.mxu0
        %2995 = vmatprep.subr.mxu0 0.0
        %v2996 = vand.u32 %v2366, 4294901760
        %v2997 = vsub.f32 %v2366, %v2996
        %v2998 = vand.u32 %v2997, 4294901760
        %2999 = vmatpush1.msra.mxu0 %v2998
        %3000 = vmatprep.subr.mxu0 0.0
        %v3001 = vand.u32 %v2367, 4294901760
        %v3002 = vsub.f32 %v2367, %v3001
        %v3003 = vand.u32 %v3002, 4294901760
        %3004 = vmatpush1.msra.mxu0 %v3003
        %3005 = vmatprep.subr.mxu0 0.0
        %v3006 = vand.u32 %v2368, 4294901760
        %v3007 = vsub.f32 %v2368, %v3006
        %v3008 = vand.u32 %v3007, 4294901760
        %3009 = vmatpush1.msra.mxu0 %v3008
        %3010 = vmatprep.subr.mxu0 0.0
        %v3011 = vand.u32 %v2369, 4294901760
        %v3012 = vsub.f32 %v2369, %v3011
        %v3013 = vand.u32 %v3012, 4294901760
        %3014 = vmatpush1.msra.mxu0 %v3013
        %3015 = vmatprep.subr.mxu0 0.0
        %v3016 = vand.u32 %v2370, 4294901760
        %v3017 = vsub.f32 %v2370, %v3016
        %v3018 = vand.u32 %v3017, 4294901760
        %3019 = vmatpush1.msra.mxu0 %v3018
        %3020 = vmatprep.subr.mxu0 0.0
        %v3021 = vand.u32 %v2371, 4294901760
        %v3022 = vsub.f32 %v2371, %v3021
        %v3023 = vand.u32 %v3022, 4294901760
        %3024 = vmatpush1.msra.mxu0 %v3023
        %3025 = vmatprep.subr.mxu0 0.0
        %v3026 = vand.u32 %v2372, 4294901760
        %v3027 = vsub.f32 %v2372, %v3026
        %v3028 = vand.u32 %v3027, 4294901760
        %3029 = vmatpush1.msra.mxu0 %v3028
        %3030 = vmatprep.subr.mxu0 0.0
        %v3031 = vand.u32 %v2373, 4294901760
        %v3032 = vsub.f32 %v2373, %v3031
        %v3033 = vand.u32 %v3032, 4294901760
        %3034 = vmatpush1.msra.mxu0 %v3033
        %3035 = vmatprep.subr.mxu0 0.0
        %v3036 = vand.u32 %v2374, 4294901760
        %v3037 = vsub.f32 %v2374, %v3036
        %v3038 = vand.u32 %v3037, 4294901760
        %3039 = vmatpush1.msra.mxu0 %v3038
        %3040 = vmatprep.subr.mxu0 0.0
        %v3041 = vand.u32 %v2375, 4294901760
        %v3042 = vsub.f32 %v2375, %v3041
        %v3043 = vand.u32 %v3042, 4294901760
        %3044 = vmatpush1.msra.mxu0 %v3043
        %3045 = vmatprep.subr.mxu0 0.0
        %v3046 = vand.u32 %v2376, 4294901760
        %v3047 = vsub.f32 %v2376, %v3046
        %v3048 = vand.u32 %v3047, 4294901760
        %3049 = vmatpush1.msra.mxu0 %v3048
        %3050 = vmatprep.subr.mxu0 0.0
        %v3051 = vand.u32 %v2377, 4294901760
        %v3052 = vsub.f32 %v2377, %v3051
        %v3053 = vand.u32 %v3052, 4294901760
        %3054 = vmatpush1.msra.mxu0 %v3053
        %3055 = vmatprep.subr.mxu0 0.0
        %v3056 = vand.u32 %v2378, 4294901760
        %v3057 = vsub.f32 %v2378, %v3056
        %v3058 = vand.u32 %v3057, 4294901760
        %3059 = vmatpush1.msra.mxu0 %v3058
        %3060 = vmatprep.subr.mxu0 0.0
        %v3061 = vand.u32 %v2379, 4294901760
        %v3062 = vsub.f32 %v2379, %v3061
        %v3063 = vand.u32 %v3062, 4294901760
        %3064 = vmatpush1.msra.mxu0 %v3063
        %3065 = vmatprep.subr.mxu0 0.0
        %v3066 = vand.u32 %v2380, 4294901760
        %v3067 = vsub.f32 %v2380, %v3066
        %v3068 = vand.u32 %v3067, 4294901760
        %3069 = vmatpush1.msra.mxu0 %v3068
        %3070 = vmatprep.subr.mxu0 0.0
        %v3071 = vand.u32 %v2381, 4294901760
        %v3072 = vsub.f32 %v2381, %v3071
        %v3073 = vand.u32 %v3072, 4294901760
        %3074 = vmatpush1.msra.mxu0 %v3073
        %3075 = vmatprep.subr.mxu0 0.0
        %v3076 = vand.u32 %v2382, 4294901760
        %v3077 = vsub.f32 %v2382, %v3076
        %v3078 = vand.u32 %v3077, 4294901760
        %3079 = vmatpush1.msra.mxu0 %v3078
        %3080 = vmatprep.subr.mxu0 0.0
        %v3081 = vand.u32 %v2383, 4294901760
        %v3082 = vsub.f32 %v2383, %v3081
        %v3083 = vand.u32 %v3082, 4294901760
        %3084 = vmatpush1.msra.mxu0 %v3083
        %3085 = vmatprep.subr.mxu0 0.0
        %v3086 = vand.u32 %v2384, 4294901760
        %v3087 = vsub.f32 %v2384, %v3086
        %v3088 = vand.u32 %v3087, 4294901760
        %3089 = vmatpush1.msra.mxu0 %v3088
        %3090 = vmatprep.subr.mxu0 0.0
        %v3091 = vand.u32 %v2385, 4294901760
        %v3092 = vsub.f32 %v2385, %v3091
        %v3093 = vand.u32 %v3092, 4294901760
        %3094 = vmatpush1.msra.mxu0 %v3093
        %3095 = vmatprep.subr.mxu0 0.0
        %v3096 = vand.u32 %v2386, 4294901760
        %v3097 = vsub.f32 %v2386, %v3096
        %v3098 = vand.u32 %v3097, 4294901760
        %3099 = vmatpush1.msra.mxu0 %v3098
        %3100 = vmatprep.subr.mxu0 0.0
        %v3101 = vand.u32 %v2387, 4294901760
        %v3102 = vsub.f32 %v2387, %v3101
        %v3103 = vand.u32 %v3102, 4294901760
        %3104 = vmatpush1.msra.mxu0 %v3103
        %3105 = vmatprep.subr.mxu0 0.0
        %v3106 = vand.u32 %v2388, 4294901760
        %v3107 = vsub.f32 %v2388, %v3106
        %v3108 = vand.u32 %v3107, 4294901760
        %3109 = vmatpush1.msra.mxu0 %v3108
        %3110 = vmatprep.subr.mxu0 0.0
        %v3111 = vand.u32 %v2389, 4294901760
        %v3112 = vsub.f32 %v2389, %v3111
        %v3113 = vand.u32 %v3112, 4294901760
        %3114 = vmatpush1.msra.mxu0 %v3113
        %3115 = vmatprep.subr.mxu0 0.0
        %v3116 = vand.u32 %v2390, 4294901760
        %v3117 = vsub.f32 %v2390, %v3116
        %v3118 = vand.u32 %v3117, 4294901760
        %3119 = vmatpush1.msra.mxu0 %v3118
        %3120 = vmatprep.subr.mxu0 0.0
        %v3121 = vand.u32 %v2391, 4294901760
        %v3122 = vsub.f32 %v2391, %v3121
        %v3123 = vand.u32 %v3122, 4294901760
        %3124 = vmatpush1.msra.mxu0 %v3123
        %3125 = vmatprep.subr.mxu0 0.0
        %v3126 = vand.u32 %v2392, 4294901760
        %v3127 = vsub.f32 %v2392, %v3126
        %v3128 = vand.u32 %v3127, 4294901760
        %3129 = vmatpush1.msra.mxu0 %v3128
        %3130 = vmatprep.subr.mxu0 0.0
        %v3131 = vand.u32 %v2393, 4294901760
        %v3132 = vsub.f32 %v2393, %v3131
        %v3133 = vand.u32 %v3132, 4294901760
        %3134 = vmatpush1.msra.mxu0 %v3133
        %3135 = vmatprep.subr.mxu0 0.0
        %v3136 = vand.u32 %v2394, 4294901760
        %v3137 = vsub.f32 %v2394, %v3136
        %v3138 = vand.u32 %v3137, 4294901760
        %3139 = vmatpush1.msra.mxu0 %v3138
        %3140 = vmatprep.subr.mxu0 0.0
        %v3141 = vand.u32 %v2395, 4294901760
        %v3142 = vsub.f32 %v2395, %v3141
        %v3143 = vand.u32 %v3142, 4294901760
        %3144 = vmatpush1.msra.mxu0 %v3143
        %3145 = vmatprep.subr.mxu0 0.0
        %v3146 = vand.u32 %v2396, 4294901760
        %v3147 = vsub.f32 %v2396, %v3146
        %v3148 = vand.u32 %v3147, 4294901760
        %3149 = vmatpush1.msra.mxu0 %v3148
        %3150 = vmatprep.subr.mxu0 0.0
        %v3151 = vand.u32 %v2397, 4294901760
        %v3152 = vsub.f32 %v2397, %v3151
        %v3153 = vand.u32 %v3152, 4294901760
        %3154 = vmatpush1.msra.mxu0 %v3153
        %v3155 = vand.u32 %v2365, 4294901760
        %3156 = vmatprep.mubr.f32.mxu0 %v3155
        %v3157 = vand.u32 %v2364, 4294901760
        %3158 = vmatmul.mubr.f32.gmra.mrb[0].mxu0 %v3157
        %v3159 = vpop.f32.mrb[0].mxu0
        %v3160 = vadd.f32 %v2992, %v3159
        %v3161 = vpop.f32.mrb[0].mxu0
        %3162 = vdwg.mxu0
        %3163 = vmatprep.subr.mxu0 0.0
        %v3164 = vand.u32 %v2366, 4294901760
        %3165 = vmatpush1.msra.mxu0 %v3164
        %3166 = vmatprep.subr.mxu0 0.0
        %v3167 = vand.u32 %v2367, 4294901760
        %3168 = vmatpush1.msra.mxu0 %v3167
        %3169 = vmatprep.subr.mxu0 0.0
        %v3170 = vand.u32 %v2368, 4294901760
        %3171 = vmatpush1.msra.mxu0 %v3170
        %3172 = vmatprep.subr.mxu0 0.0
        %v3173 = vand.u32 %v2369, 4294901760
        %3174 = vmatpush1.msra.mxu0 %v3173
        %3175 = vmatprep.subr.mxu0 0.0
        %v3176 = vand.u32 %v2370, 4294901760
        %3177 = vmatpush1.msra.mxu0 %v3176
        %3178 = vmatprep.subr.mxu0 0.0
        %v3179 = vand.u32 %v2371, 4294901760
        %3180 = vmatpush1.msra.mxu0 %v3179
        %3181 = vmatprep.subr.mxu0 0.0
        %v3182 = vand.u32 %v2372, 4294901760
        %3183 = vmatpush1.msra.mxu0 %v3182
        %3184 = vmatprep.subr.mxu0 0.0
        %v3185 = vand.u32 %v2373, 4294901760
        %3186 = vmatpush1.msra.mxu0 %v3185
        %3187 = vmatprep.subr.mxu0 0.0
        %v3188 = vand.u32 %v2374, 4294901760
        %3189 = vmatpush1.msra.mxu0 %v3188
        %3190 = vmatprep.subr.mxu0 0.0
        %v3191 = vand.u32 %v2375, 4294901760
        %3192 = vmatpush1.msra.mxu0 %v3191
        %3193 = vmatprep.subr.mxu0 0.0
        %v3194 = vand.u32 %v2376, 4294901760
        %3195 = vmatpush1.msra.mxu0 %v3194
        %3196 = vmatprep.subr.mxu0 0.0
        %v3197 = vand.u32 %v2377, 4294901760
        %3198 = vmatpush1.msra.mxu0 %v3197
        %3199 = vmatprep.subr.mxu0 0.0
        %v3200 = vand.u32 %v2378, 4294901760
        %3201 = vmatpush1.msra.mxu0 %v3200
        %3202 = vmatprep.subr.mxu0 0.0
        %v3203 = vand.u32 %v2379, 4294901760
        %3204 = vmatpush1.msra.mxu0 %v3203
        %3205 = vmatprep.subr.mxu0 0.0
        %v3206 = vand.u32 %v2380, 4294901760
        %3207 = vmatpush1.msra.mxu0 %v3206
        %3208 = vmatprep.subr.mxu0 0.0
        %v3209 = vand.u32 %v2381, 4294901760
        %3210 = vmatpush1.msra.mxu0 %v3209
        %3211 = vmatprep.subr.mxu0 0.0
        %v3212 = vand.u32 %v2382, 4294901760
        %3213 = vmatpush1.msra.mxu0 %v3212
        %3214 = vmatprep.subr.mxu0 0.0
        %v3215 = vand.u32 %v2383, 4294901760
        %3216 = vmatpush1.msra.mxu0 %v3215
        %3217 = vmatprep.subr.mxu0 0.0
        %v3218 = vand.u32 %v2384, 4294901760
        %3219 = vmatpush1.msra.mxu0 %v3218
        %3220 = vmatprep.subr.mxu0 0.0
        %v3221 = vand.u32 %v2385, 4294901760
        %3222 = vmatpush1.msra.mxu0 %v3221
        %3223 = vmatprep.subr.mxu0 0.0
        %v3224 = vand.u32 %v2386, 4294901760
        %3225 = vmatpush1.msra.mxu0 %v3224
        %3226 = vmatprep.subr.mxu0 0.0
        %v3227 = vand.u32 %v2387, 4294901760
        %3228 = vmatpush1.msra.mxu0 %v3227
        %3229 = vmatprep.subr.mxu0 0.0
        %v3230 = vand.u32 %v2388, 4294901760
        %3231 = vmatpush1.msra.mxu0 %v3230
        %3232 = vmatprep.subr.mxu0 0.0
        %v3233 = vand.u32 %v2389, 4294901760
        %3234 = vmatpush1.msra.mxu0 %v3233
        %3235 = vmatprep.subr.mxu0 0.0
        %v3236 = vand.u32 %v2390, 4294901760
        %3237 = vmatpush1.msra.mxu0 %v3236
        %3238 = vmatprep.subr.mxu0 0.0
        %v3239 = vand.u32 %v2391, 4294901760
        %3240 = vmatpush1.msra.mxu0 %v3239
        %3241 = vmatprep.subr.mxu0 0.0
        %v3242 = vand.u32 %v2392, 4294901760
        %3243 = vmatpush1.msra.mxu0 %v3242
        %3244 = vmatprep.subr.mxu0 0.0
        %v3245 = vand.u32 %v2393, 4294901760
        %3246 = vmatpush1.msra.mxu0 %v3245
        %3247 = vmatprep.subr.mxu0 0.0
        %v3248 = vand.u32 %v2394, 4294901760
        %3249 = vmatpush1.msra.mxu0 %v3248
        %3250 = vmatprep.subr.mxu0 0.0
        %v3251 = vand.u32 %v2395, 4294901760
        %3252 = vmatpush1.msra.mxu0 %v3251
        %3253 = vmatprep.subr.mxu0 0.0
        %v3254 = vand.u32 %v2396, 4294901760
        %3255 = vmatpush1.msra.mxu0 %v3254
        %3256 = vmatprep.subr.mxu0 0.0
        %v3257 = vand.u32 %v2397, 4294901760
        %3258 = vmatpush1.msra.mxu0 %v3257
        %v3259 = vand.u32 %v2365, 4294901760
        %3260 = vmatprep.mubr.f32.mxu0 %v3259
        %v3261 = vand.u32 %v2364, 4294901760
        %3262 = vmatmul.mubr.f32.gmra.mrb[0].mxu0 %v3261
        %v3263 = vpop.f32.mrb[0].mxu0
        %v3264 = vadd.f32 %v3160, %v3263
        %v3265 = vpop.f32.mrb[0].mxu0
        %3266 = vdwg.mxu0
        %v3267 = vmax.f32 %v3264, 0.0
        %v3268 = vld [vmem:[%s7] sm:$0x1]
        %v3270 = vlaneseq
        %v3271 = vshrl.u32 %v3270, 7
        %v3272 = vsub.s32 0, %v3271
        %v3273 = vrot.slane %v3268, %v3272
        %3274 = vrot.lane.b32.xlu0 %v3273, 18
        %v3275 = vpop.permute.xlu0 %3274
        %v3277 = vmul.f32 %v3267, %v3275
        %3279 = vrot.lane.b32.xlu0 %v3277, 110
        %v3280 = vpop.permute.xlu0 %3279
        %vm3282 = vcmask 121856
        %v3283 = vsel %vm3282, %v3280, 0.0
        %3284 = vadd.xlane.f32.xlu0 %v3283
        %v3285 = vpop.xlane.xlu0 %3284
        %3286 = vrot.lane.b32.xlu0 %v3277, 95
        %v3287 = vpop.permute.xlu0 %3286
        %v3289 = vsel %vm3282, %v3287, 0.0
        %3290 = vadd.xlane.f32.xlu0 %v3289
        %v3291 = vpop.xlane.xlu0 %3290
        %3292 = vrot.lane.b32.xlu0 %v3277, 80
        %v3293 = vpop.permute.xlu0 %3292
        %v3295 = vsel %vm3282, %v3293, 0.0
        %3296 = vadd.xlane.f32.xlu0 %v3295
        %v3297 = vpop.xlane.xlu0 %3296
        %3298 = vrot.lane.b32.xlu0 %v3277, 65
        %v3299 = vpop.permute.xlu0 %3298
        %v3301 = vsel %vm3282, %v3299, 0.0
        %3302 = vadd.xlane.f32.xlu0 %v3301
        %v3303 = vpop.xlane.xlu0 %3302
        %v3304 = vld [vmem:[%s8] sm:$0x1]
        %v3306 = vlaneseq
        %v3307 = vshrl.u32 %v3306, 7
        %v3308 = vsub.s32 0, %v3307
        %v3309 = vrot.slane %v3304, %v3308
        %3310 = vrot.lane.b32.xlu0 %v3309, 49
        %v3311 = vpop.permute.xlu0 %3310
        %v3313 = vmul.f32 %v343, %v3311
        %v3314 = vadd.f32 %v3285, %v3313
        %3315 = vrot.lane.b32.xlu0 %v3309, 45
        %v3316 = vpop.permute.xlu0 %3315
        %v3318 = vadd.f32 %v3314, %v3316
        %3319 = vrot.lane.b32.xlu0 %v3309, 47
        %v3320 = vpop.permute.xlu0 %3319
        %v3322 = vmul.f32 %v343, %v3320
        %v3323 = vadd.f32 %v3291, %v3322
        %3324 = vrot.lane.b32.xlu0 %v3309, 43
        %v3325 = vpop.permute.xlu0 %3324
        %v3327 = vadd.f32 %v3323, %v3325
        %v3328 = vadd.f32 %v3297, %v3322
        %v3329 = vadd.f32 %v3328, %v3325
        %v3330 = vxor.u32 %v3329, 2147483648
        %v3331 = vmul.f32 %v3330, 1.442695
        %v3332 = vpow.pop %v3331
        %v3333 = vadd.f32 %v3332, 1.0
        %v3334 = vrcp.pop %v3333
        %v3335 = vmul.f32 1.0, %v3334
        %v3336 = vmul.f32 %v343, %v3316
        %v3337 = vadd.f32 %v3303, %v3336
        %3338 = vrot.lane.b32.xlu0 %v3309, 41
        %v3339 = vpop.permute.xlu0 %3338
        %v3341 = vadd.f32 %v3337, %v3339
        %v3342 = vxor.u32 %v3341, 2147483648
        %v3343 = vmul.f32 %v3342, 1.442695
        %v3344 = vpow.pop %v3343
        %v3345 = vadd.f32 %v3344, 1.0
        %v3346 = vrcp.pop %v3345
        %v3347 = vmul.f32 1.0, %v3346
        %v3348 = vmul.f32 %v343, %v3347
        %v3349 = vsub.f32 1.0, %v3347
        %v3350 = vmul.f32 %v3327, %v3349
        %v3351 = vadd.f32 %v3348, %v3350
        %v3352 = vmul.f32 %v343, %v3335
        %v3353 = vsub.f32 1.0, %v3335
        %v3354 = vmul.f32 %v3318, %v3353
        %v3355 = vadd.f32 %v3352, %v3354
        %3357 = vrot.lane.b32.xlu0 %v3351, 98
        %v3358 = vpop.permute.xlu0 %3357
        %3361 = vrot.lane.b32.xlu0 %v3355, 98
        %v3362 = vpop.permute.xlu0 %3361
        %vm3364 = vcmask 146432
        %v3365 = vsel %vm3364, %v3264, %v3358
        %vm3366 = vcmask 154624
        %v3367 = vsel %vm3366, %v3365, %v3362
        %vm3368 = vcmask 162816
        %v3369 = vsel %vm3368, %v3367, 0.0
        %vm3370 = vcmask 261120
        %3371 = vst.msk [vmem:[%s338] sm:$0xff] %vm3370, %v3369
        %s3372 = sand.u32 %s226, 1
        %s3373 = scalar_lea.sflag [#allocation4], %s3372
        %s3374 = sand.u32 %s226, 1
        %s3375 = smul.addr %s3374, 8
        %s3376 = scalar_lea.vmem [#allocation5], %s3375
        // Predicated region
        $region61: #{tpu_custom_call.1} parent=55 // pred_check
          %p3377 = pneg %p236
        $region62: #{tpu_custom_call.1} parent=55 // pred_check_branch
          %3379 = sbr.rel (%p3377) target = $region64
        $region63: #{tpu_custom_call.1} parent=55 // pred_region
          %s3381 = ssub.s32 128, 128
          %3382 = vsyncadd %s3373, %s3381
          %s3383 = smul.addr %s24, 128
          %s3384 = scalar_lea.hbm %s9, %s3383
          %s3386 = sshll.u32 %s3376, 4
          %s3387 = int_to_ptr.vmem [resolvable:$true] %s3386
          %3389 = dma.vmem_to_hbm [thread:$0]  %s3387, 128, %s3384, %s3373
        $region64: #{tpu_custom_call.1} parent=55 // pred_fallthru
          _
      $region56: #{tpu_custom_call.1} parent=5 // pred_fallthru
        _
      %p3390 = scmp.le.s32.totalorder 2, %s19
      // Predicated region
      $region65: #{tpu_custom_call.1} parent=5 // pred_check
        %p3391 = pneg %p3390
      $region66: #{tpu_custom_call.1} parent=5 // pred_check_branch
        %3393 = sbr.rel (%p3391) target = $region68
      $region67: #{tpu_custom_call.1} parent=5 // pred_region
        %s3394 = ssub.s32 %s19, 2
        // Predicated region
        $region69: #{tpu_custom_call.1} parent=67 // pred_check
          %p3395 = pneg %p242
        $region70: #{tpu_custom_call.1} parent=67 // pred_check_branch
          %3397 = sbr.rel (%p3395) target = $region72
        $region71: #{tpu_custom_call.1} parent=67 // pred_region
          %s3398 = sand.u32 %s227, 1
          %s3399 = scalar_lea.sflag [#allocation4], %s3398
          %s3400 = sand.u32 %s227, 1
          %s3401 = smul.addr %s3400, 8
          %s3402 = scalar_lea.vmem [#allocation5], %s3401
          %3403 = dma.done %s3399, 128
        $region72: #{tpu_custom_call.1} parent=67 // pred_fallthru
          _
      $region68: #{tpu_custom_call.1} parent=5 // pred_fallthru
        _
    $region6: #{tpu_custom_call.1} parent=1 // loop_footer
      %s23 = sadd.s32 1, %s19
    $region7: #{tpu_custom_call.1} parent=1 // loop_footer_branch
      %18 = sbr.rel target = $region3
    $region8: #{tpu_custom_call.1} parent=1 // loop_exit
      _
    %3404 = vsyncpa [#allocation3], 1
    %s3405 = scalar_lea.sflag [#allocation3], 1
    %3406 = vsyncpa %s3405, 1
    %3407 = vsyncpa [#allocation4], 1
    %s3408 = scalar_lea.sflag [#allocation4], 1
    %3409 = vsyncpa %s3408, 1

</llo_original>
